<compile_context>
chip_gen: v7x
topology: tpu7x:2x2x1
jax: 0.10.0
libtpu: 0.0.40
codegen_flags: <defaults>
</compile_context>

<pallas_src>
import jax
import jax.numpy as jnp
from jax.experimental import pallas as pl
from jax.experimental.pallas import tpu as pltpu

# ---------------- synthetic config (small shapes consistent with the module) ----------------
PAD = 0
BATCH = 2
SRC_LEN = 16
TGT_LEN = 8
EMSIZE = 32
SRC_VOCAB = 50
TGT_VOCAB = 40
NODE_TYPE_VOCAB = 4
WORD_TYPE_VOCAB = 6
MAX_SRC_LEN = 32
MAX_TGT_LEN = 16


# ================================ encoder-mode Embedder kernel ================================

def _encoder_embed_kernel(src_ids_ref,                  # SMEM (N,) int32  (scalar prefetch)
                          src_word_hbm,                 # HBM  (V_src, E) f32  (pl.ANY)
                          wtype_ids_ref, pos_ids_ref,   # VMEM (1, N) int32, lane-major
                          wtype_emb_ref, pos_emb_ref,   # VMEM tiny tables (V, E) f32
                          out_ref,                      # VMEM (N, E) f32
                          gbuf, sems):                  # scratch: VMEM (N, E) f32, DMA sems (N,)
    N, _ = out_ref.shape

    # 1) launch the DMA row-gather for the large-vocab word-embedding table.
    for i in range(N):
        pltpu.make_async_copy(src_word_hbm.at[src_ids_ref[i]],
                              gbuf.at[i], sems.at[i]).start()

    # 2) tiny-vocab lookups as one-hot MXU matmuls while the gather is in flight.
    def onehot_lookup(ids_row, table):                  # ids_row: (1, N); table: (V, E)
        V = table.shape[0]
        iota = jax.lax.broadcasted_iota(jnp.int32, (V, N), 0)
        onehot_t = (iota == ids_row).astype(jnp.float32)             # (V, N)
        return jax.lax.dot_general(onehot_t, table,
                                   (((0,), (0,)), ((), ())),
                                   preferred_element_type=jnp.float32)   # (N, E), exact

    extra = (onehot_lookup(wtype_ids_ref[...], wtype_emb_ref[...])
             + onehot_lookup(pos_ids_ref[...], pos_emb_ref[...]))

    # 3) wait for the gathered rows, then one fused add.
    for i in range(N):
        pltpu.make_async_copy(src_word_hbm.at[0], gbuf.at[i], sems.at[i]).wait()

    out_ref[...] = gbuf[...] + extra
    # TODO(synk): nn.Dropout(args.dropout_emb) treated as eval-mode identity.
    # (word_rep.squeeze(0) in the reference is a no-op for batch > 1.)


# ================================ decoder-mode Embedder kernel ================================

def _decoder_embed_kernel(tgt_ids_ref,                  # SMEM (N,) int32  (scalar prefetch)
                          tgt_word_hbm,                 # HBM  (V_tgt, E) f32  (pl.ANY)
                          tgt_pos_ref,                  # VMEM (T, E) f32 — rows 0..T-1 (= arange(T))
                          out_ref,                      # VMEM (N, E) f32, N = B*T
                          gbuf, sems):                  # scratch
    N, _ = out_ref.shape
    T = tgt_pos_ref.shape[0]
    B = N // T

    for i in range(N):
        pltpu.make_async_copy(tgt_word_hbm.at[tgt_ids_ref[i]],
                              gbuf.at[i], sems.at[i]).start()

    # pos_enc = arange(T) expanded over the batch (step is None training path);
    # contiguous rows 0..T-1 of the table arrive as a plain BlockSpec slice — no gather needed.
    pos_tiled = jnp.tile(tgt_pos_ref[...], (B, 1))      # (N, E)

    for i in range(N):
        pltpu.make_async_copy(tgt_word_hbm.at[0], gbuf.at[i], sems.at[i]).wait()

    out_ref[...] = gbuf[...] + pos_tiled
    # TODO(synk): step != None (single-position incremental decoding) path not implemented.
    # TODO(synk): nn.Dropout(args.dropout_emb) treated as eval-mode identity.


# ================================ wrappers ================================

def embedder_encode(params, sequence, wtype, pos_enc):
    """Embedder.forward(mode='encoder'): src word emb + word-type emb + src positional emb."""
    B, S = sequence.shape
    N = B * S
    E = params["src_word_emb"].shape[1]

    src_ids = sequence.reshape(N).astype(jnp.int32)          # SMEM scalars drive the gather
    wt_row = wtype.reshape(1, N).astype(jnp.int32)           # lane-major ids for one-hot
    pe_row = pos_enc.reshape(1, N).astype(jnp.int32)

    out = pl.pallas_call(
        _encoder_embed_kernel,
        out_shape=jax.ShapeDtypeStruct((N, E), jnp.float32),
        grid_spec=pltpu.PrefetchScalarGridSpec(
            num_scalar_prefetch=1,
            grid=(1,),                                        # batch folded into sublanes
            in_specs=[
                pl.BlockSpec(memory_space=pl.ANY),            # src_word_emb stays in HBM
                pl.BlockSpec((1, N), lambda i, *_: (0, 0)),
                pl.BlockSpec((1, N), lambda i, *_: (0, 0)),
                pl.BlockSpec(params["word_type_emb"].shape, lambda i, *_: (0, 0)),
                pl.BlockSpec(params["src_pos_emb"].shape, lambda i, *_: (0, 0)),
            ],
            out_specs=pl.BlockSpec((N, E), lambda i, *_: (0, 0)),
            scratch_shapes=[pltpu.VMEM((N, E), jnp.float32),
                            pltpu.SemaphoreType.DMA((N,))],
        ),
        compiler_params=pltpu.CompilerParams(dimension_semantics=("arbitrary",)),
    )(src_ids, params["src_word_emb"], wt_row, pe_row,
      params["word_type_emb"], params["src_pos_emb"])
    return out.reshape(B, S, E)


def embedder_decode(params, sequence):
    """Embedder.forward(mode='decoder', step=None): tgt word emb + tgt pos emb(arange)."""
    B, T = sequence.shape
    N = B * T
    E = params["tgt_word_emb"].shape[1]

    tgt_ids = sequence.reshape(N).astype(jnp.int32)

    out = pl.pallas_call(
        _decoder_embed_kernel,
        out_shape=jax.ShapeDtypeStruct((N, E), jnp.float32),
        grid_spec=pltpu.PrefetchScalarGridSpec(
            num_scalar_prefetch=1,
            grid=(1,),
            in_specs=[
                pl.BlockSpec(memory_space=pl.ANY),            # tgt_word_emb stays in HBM
                pl.BlockSpec((T, E), lambda i, *_: (0, 0)),    # rows [0, T) of tgt_pos table
            ],
            out_specs=pl.BlockSpec((N, E), lambda i, *_: (0, 0)),
            scratch_shapes=[pltpu.VMEM((N, E), jnp.float32),
                            pltpu.SemaphoreType.DMA((N,))],
        ),
        compiler_params=pltpu.CompilerParams(dimension_semantics=("arbitrary",)),
    )(tgt_ids, params["tgt_word_emb"], params["tgt_pos_emb"])
    return out.reshape(B, T, E)


# ================================ params & pure-JAX reference ================================

def init_params(key):
    ks = jax.random.split(key, 5)

    def emb(k, vocab, dim, pad_idx=None):
        e = jax.random.normal(k, (vocab, dim), jnp.float32) * 0.02
        if pad_idx is not None:
            e = e.at[pad_idx].set(0.0)      # nn.Embedding padding_idx semantics
        return e

    return {
        "src_word_emb": emb(ks[0], SRC_VOCAB + NODE_TYPE_VOCAB, EMSIZE, PAD),
        "word_type_emb": emb(ks[1], WORD_TYPE_VOCAB, EMSIZE),
        "src_pos_emb": emb(ks[2], MAX_SRC_LEN + 1, EMSIZE),
        "tgt_word_emb": emb(ks[3], TGT_VOCAB, EMSIZE, PAD),
        "tgt_pos_emb": emb(ks[4], MAX_TGT_LEN + 2, EMSIZE),
    }


def ref_encode(p, seq, wtype, pos_enc):
    return p["src_word_emb"][seq] + p["word_type_emb"][wtype] + p["src_pos_emb"][pos_enc]


def ref_decode(p, seq):
    t = seq.shape[1]
    return p["tgt_word_emb"][seq] + p["tgt_pos_emb"][jnp.arange(t)][None, :, :]


# ================================ main ================================

if __name__ == "__main__":
    root = jax.random.PRNGKey(0)
    pkey, dkey = jax.random.split(root)
    params = init_params(pkey)
    ks = jax.random.split(dkey, 3)

    code_len = jnp.array([SRC_LEN, SRC_LEN - 4], dtype=jnp.int32)
    summ_len = jnp.array([TGT_LEN, TGT_LEN - 2], dtype=jnp.int32)

    src_tokens = jax.random.randint(ks[0], (BATCH, SRC_LEN), 1, SRC_VOCAB + NODE_TYPE_VOCAB)
    src_tokens = jnp.where(jnp.arange(SRC_LEN)[None, :] < code_len[:, None],
                           src_tokens, PAD).astype(jnp.int32)
    wtype = jax.random.randint(ks[1], (BATCH, SRC_LEN), 0, WORD_TYPE_VOCAB).astype(jnp.int32)
    pos_enc = jnp.broadcast_to(jnp.arange(SRC_LEN)[None, :], (BATCH, SRC_LEN)).astype(jnp.int32)

    tgt_tokens = jax.random.randint(ks[2], (BATCH, TGT_LEN), 1, TGT_VOCAB)
    tgt_tokens = jnp.where(jnp.arange(TGT_LEN)[None, :] < summ_len[:, None],
                           tgt_tokens, PAD).astype(jnp.int32)

    enc_fn = jax.jit(embedder_encode)
    dec_fn = jax.jit(embedder_decode)

    enc_rep = enc_fn(params, src_tokens, wtype, pos_enc)
    dec_rep = dec_fn(params, tgt_tokens)
    jax.block_until_ready((enc_rep, dec_rep))

    assert enc_rep.shape == (BATCH, SRC_LEN, EMSIZE)
    assert dec_rep.shape == (BATCH, TGT_LEN, EMSIZE)
    assert bool(jnp.all(jnp.isfinite(enc_rep))) and bool(jnp.all(jnp.isfinite(dec_rep)))
    assert jnp.allclose(enc_rep, ref_encode(params, src_tokens, wtype, pos_enc),
                        rtol=1e-5, atol=1e-5)
    assert jnp.allclose(dec_rep, ref_decode(params, tgt_tokens), rtol=1e-5, atol=1e-5)
    print("KERNEL_OK")
</pallas_src>

<mosaic_0001>
module attributes {stable_mosaic.version = 11 : i64} {
  func.func @_encoder_embed_kernel(%arg0: i32, %arg1: memref<32xi32, #tpu.memory_space<smem>>, %arg2: memref<54x32xf32, #tpu.memory_space<any>>, %arg3: memref<1x32xi32, #tpu.memory_space<vmem>>, %arg4: memref<1x32xi32, #tpu.memory_space<vmem>>, %arg5: memref<6x32xf32, #tpu.memory_space<vmem>>, %arg6: memref<33x32xf32, #tpu.memory_space<vmem>>, %arg7: memref<32x32xf32, #tpu.memory_space<vmem>>, %arg8: memref<32x32xf32, #tpu.memory_space<vmem>>, %arg9: memref<32x!tpu.dma_semaphore, #tpu.memory_space<semaphore_mem>>) attributes {dimension_semantics = [#tpu.dimension_semantics<arbitrary>], iteration_bounds = array<i64: 1>, scalar_prefetch = 1 : i64, scratch_operands = 2 : i64, tpu.core_type = #tpu.core_type<tc>, window_params = [{}, {pipeline_mode = #tpu.pipeline_mode<synchronous>, transform_indices = @transform_1, window_bounds = array<i64: 1, 32>}, {pipeline_mode = #tpu.pipeline_mode<synchronous>, transform_indices = @transform_2, window_bounds = array<i64: 1, 32>}, {pipeline_mode = #tpu.pipeline_mode<synchronous>, transform_indices = @transform_3, window_bounds = array<i64: 6, 32>}, {pipeline_mode = #tpu.pipeline_mode<synchronous>, transform_indices = @transform_4, window_bounds = array<i64: 33, 32>}, {pipeline_mode = #tpu.pipeline_mode<synchronous>, transform_indices = @transform_5, window_bounds = array<i64: 32, 32>}]} {
    %c0 = arith.constant 0 : index
    %0 = memref.load %arg1[%c0] : memref<32xi32, #tpu.memory_space<smem>>
    %c0_i32 = arith.constant 0 : i32
    %c0_i32_0 = arith.constant 0 : i32
    %c0_i32_1 = arith.constant 0 : i32
    %1 = tpu.memref_slice %arg2[%0, %c0_i32_1] : memref<54x32xf32, #tpu.memory_space<any>> -> memref<1x32xf32, #tpu.memory_space<any>>
    %2 = tpu.memref_squeeze %1 : memref<1x32xf32, #tpu.memory_space<any>> -> memref<32xf32, #tpu.memory_space<any>>
    %c0_i32_2 = arith.constant 0 : i32
    %3 = tpu.memref_slice %arg8[%c0_i32, %c0_i32_2] : memref<32x32xf32, #tpu.memory_space<vmem>> -> memref<1x32xf32, #tpu.memory_space<vmem>>
    %4 = tpu.memref_squeeze %3 : memref<1x32xf32, #tpu.memory_space<vmem>> -> memref<32xf32, #tpu.memory_space<vmem>>
    %5 = tpu.memref_slice %arg9[%c0_i32_0] : memref<32x!tpu.dma_semaphore, #tpu.memory_space<semaphore_mem>> -> memref<1x!tpu.dma_semaphore, #tpu.memory_space<semaphore_mem>>
    %6 = tpu.memref_squeeze %5 : memref<1x!tpu.dma_semaphore, #tpu.memory_space<semaphore_mem>> -> memref<!tpu.dma_semaphore, #tpu.memory_space<semaphore_mem>>
    tpu.enqueue_dma source(%2 : memref<32xf32, #tpu.memory_space<any>>) target(%4 : memref<32xf32, #tpu.memory_space<vmem>>) target_semaphore(%6 : memref<!tpu.dma_semaphore, #tpu.memory_space<semaphore_mem>>)
    %c1 = arith.constant 1 : index
    %7 = memref.load %arg1[%c1] : memref<32xi32, #tpu.memory_space<smem>>
    %c1_i32 = arith.constant 1 : i32
    %c1_i32_3 = arith.constant 1 : i32
    %c0_i32_4 = arith.constant 0 : i32
    %8 = tpu.memref_slice %arg2[%7, %c0_i32_4] : memref<54x32xf32, #tpu.memory_space<any>> -> memref<1x32xf32, #tpu.memory_space<any>>
    %9 = tpu.memref_squeeze %8 : memref<1x32xf32, #tpu.memory_space<any>> -> memref<32xf32, #tpu.memory_space<any>>
    %c0_i32_5 = arith.constant 0 : i32
    %10 = tpu.memref_slice %arg8[%c1_i32, %c0_i32_5] : memref<32x32xf32, #tpu.memory_space<vmem>> -> memref<1x32xf32, #tpu.memory_space<vmem>>
    %11 = tpu.memref_squeeze %10 : memref<1x32xf32, #tpu.memory_space<vmem>> -> memref<32xf32, #tpu.memory_space<vmem>>
    %12 = tpu.memref_slice %arg9[%c1_i32_3] : memref<32x!tpu.dma_semaphore, #tpu.memory_space<semaphore_mem>> -> memref<1x!tpu.dma_semaphore, #tpu.memory_space<semaphore_mem>>
    %13 = tpu.memref_squeeze %12 : memref<1x!tpu.dma_semaphore, #tpu.memory_space<semaphore_mem>> -> memref<!tpu.dma_semaphore, #tpu.memory_space<semaphore_mem>>
    tpu.enqueue_dma source(%9 : memref<32xf32, #tpu.memory_space<any>>) target(%11 : memref<32xf32, #tpu.memory_space<vmem>>) target_semaphore(%13 : memref<!tpu.dma_semaphore, #tpu.memory_space<semaphore_mem>>)
    %c2 = arith.constant 2 : index
    %14 = memref.load %arg1[%c2] : memref<32xi32, #tpu.memory_space<smem>>
    %c2_i32 = arith.constant 2 : i32
    %c2_i32_6 = arith.constant 2 : i32
    %c0_i32_7 = arith.constant 0 : i32
    %15 = tpu.memref_slice %arg2[%14, %c0_i32_7] : memref<54x32xf32, #tpu.memory_space<any>> -> memref<1x32xf32, #tpu.memory_space<any>>
    %16 = tpu.memref_squeeze %15 : memref<1x32xf32, #tpu.memory_space<any>> -> memref<32xf32, #tpu.memory_space<any>>
    %c0_i32_8 = arith.constant 0 : i32
    %17 = tpu.memref_slice %arg8[%c2_i32, %c0_i32_8] : memref<32x32xf32, #tpu.memory_space<vmem>> -> memref<1x32xf32, #tpu.memory_space<vmem>>
    %18 = tpu.memref_squeeze %17 : memref<1x32xf32, #tpu.memory_space<vmem>> -> memref<32xf32, #tpu.memory_space<vmem>>
    %19 = tpu.memref_slice %arg9[%c2_i32_6] : memref<32x!tpu.dma_semaphore, #tpu.memory_space<semaphore_mem>> -> memref<1x!tpu.dma_semaphore, #tpu.memory_space<semaphore_mem>>
    %20 = tpu.memref_squeeze %19 : memref<1x!tpu.dma_semaphore, #tpu.memory_space<semaphore_mem>> -> memref<!tpu.dma_semaphore, #tpu.memory_space<semaphore_mem>>
    tpu.enqueue_dma source(%16 : memref<32xf32, #tpu.memory_space<any>>) target(%18 : memref<32xf32, #tpu.memory_space<vmem>>) target_semaphore(%20 : memref<!tpu.dma_semaphore, #tpu.memory_space<semaphore_mem>>)
    %c3 = arith.constant 3 : index
    %21 = memref.load %arg1[%c3] : memref<32xi32, #tpu.memory_space<smem>>
    %c3_i32 = arith.constant 3 : i32
    %c3_i32_9 = arith.constant 3 : i32
    %c0_i32_10 = arith.constant 0 : i32
    %22 = tpu.memref_slice %arg2[%21, %c0_i32_10] : memref<54x32xf32, #tpu.memory_space<any>> -> memref<1x32xf32, #tpu.memory_space<any>>
    %23 = tpu.memref_squeeze %22 : memref<1x32xf32, #tpu.memory_space<any>> -> memref<32xf32, #tpu.memory_space<any>>
    %c0_i32_11 = arith.constant 0 : i32
    %24 = tpu.memref_slice %arg8[%c3_i32, %c0_i32_11] : memref<32x32xf32, #tpu.memory_space<vmem>> -> memref<1x32xf32, #tpu.memory_space<vmem>>
    %25 = tpu.memref_squeeze %24 : memref<1x32xf32, #tpu.memory_space<vmem>> -> memref<32xf32, #tpu.memory_space<vmem>>
    %26 = tpu.memref_slice %arg9[%c3_i32_9] : memref<32x!tpu.dma_semaphore, #tpu.memory_space<semaphore_mem>> -> memref<1x!tpu.dma_semaphore, #tpu.memory_space<semaphore_mem>>
    %27 = tpu.memref_squeeze %26 : memref<1x!tpu.dma_semaphore, #tpu.memory_space<semaphore_mem>> -> memref<!tpu.dma_semaphore, #tpu.memory_space<semaphore_mem>>
    tpu.enqueue_dma source(%23 : memref<32xf32, #tpu.memory_space<any>>) target(%25 : memref<32xf32, #tpu.memory_space<vmem>>) target_semaphore(%27 : memref<!tpu.dma_semaphore, #tpu.memory_space<semaphore_mem>>)
    %c4 = arith.constant 4 : index
    %28 = memref.load %arg1[%c4] : memref<32xi32, #tpu.memory_space<smem>>
    %c4_i32 = arith.constant 4 : i32
    %c4_i32_12 = arith.constant 4 : i32
    %c0_i32_13 = arith.constant 0 : i32
    %29 = tpu.memref_slice %arg2[%28, %c0_i32_13] : memref<54x32xf32, #tpu.memory_space<any>> -> memref<1x32xf32, #tpu.memory_space<any>>
    %30 = tpu.memref_squeeze %29 : memref<1x32xf32, #tpu.memory_space<any>> -> memref<32xf32, #tpu.memory_space<any>>
    %c0_i32_14 = arith.constant 0 : i32
    %31 = tpu.memref_slice %arg8[%c4_i32, %c0_i32_14] : memref<32x32xf32, #tpu.memory_space<vmem>> -> memref<1x32xf32, #tpu.memory_space<vmem>>
    %32 = tpu.memref_squeeze %31 : memref<1x32xf32, #tpu.memory_space<vmem>> -> memref<32xf32, #tpu.memory_space<vmem>>
    %33 = tpu.memref_slice %arg9[%c4_i32_12] : memref<32x!tpu.dma_semaphore, #tpu.memory_space<semaphore_mem>> -> memref<1x!tpu.dma_semaphore, #tpu.memory_space<semaphore_mem>>
    %34 = tpu.memref_squeeze %33 : memref<1x!tpu.dma_semaphore, #tpu.memory_space<semaphore_mem>> -> memref<!tpu.dma_semaphore, #tpu.memory_space<semaphore_mem>>
    tpu.enqueue_dma source(%30 : memref<32xf32, #tpu.memory_space<any>>) target(%32 : memref<32xf32, #tpu.memory_space<vmem>>) target_semaphore(%34 : memref<!tpu.dma_semaphore, #tpu.memory_space<semaphore_mem>>)
    %c5 = arith.constant 5 : index
    %35 = memref.load %arg1[%c5] : memref<32xi32, #tpu.memory_space<smem>>
    %c5_i32 = arith.constant 5 : i32
    %c5_i32_15 = arith.constant 5 : i32
    %c0_i32_16 = arith.constant 0 : i32
    %36 = tpu.memref_slice %arg2[%35, %c0_i32_16] : memref<54x32xf32, #tpu.memory_space<any>> -> memref<1x32xf32, #tpu.memory_space<any>>
    %37 = tpu.memref_squeeze %36 : memref<1x32xf32, #tpu.memory_space<any>> -> memref<32xf32, #tpu.memory_space<any>>
    %c0_i32_17 = arith.constant 0 : i32
    %38 = tpu.memref_slice %arg8[%c5_i32, %c0_i32_17] : memref<32x32xf32, #tpu.memory_space<vmem>> -> memref<1x32xf32, #tpu.memory_space<vmem>>
    %39 = tpu.memref_squeeze %38 : memref<1x32xf32, #tpu.memory_space<vmem>> -> memref<32xf32, #tpu.memory_space<vmem>>
    %40 = tpu.memref_slice %arg9[%c5_i32_15] : memref<32x!tpu.dma_semaphore, #tpu.memory_space<semaphore_mem>> -> memref<1x!tpu.dma_semaphore, #tpu.memory_space<semaphore_mem>>
    %41 = tpu.memref_squeeze %40 : memref<1x!tpu.dma_semaphore, #tpu.memory_space<semaphore_mem>> -> memref<!tpu.dma_semaphore, #tpu.memory_space<semaphore_mem>>
    tpu.enqueue_dma source(%37 : memref<32xf32, #tpu.memory_space<any>>) target(%39 : memref<32xf32, #tpu.memory_space<vmem>>) target_semaphore(%41 : memref<!tpu.dma_semaphore, #tpu.memory_space<semaphore_mem>>)
    %c6 = arith.constant 6 : index
    %42 = memref.load %arg1[%c6] : memref<32xi32, #tpu.memory_space<smem>>
    %c6_i32 = arith.constant 6 : i32
    %c6_i32_18 = arith.constant 6 : i32
    %c0_i32_19 = arith.constant 0 : i32
    %43 = tpu.memref_slice %arg2[%42, %c0_i32_19] : memref<54x32xf32, #tpu.memory_space<any>> -> memref<1x32xf32, #tpu.memory_space<any>>
    %44 = tpu.memref_squeeze %43 : memref<1x32xf32, #tpu.memory_space<any>> -> memref<32xf32, #tpu.memory_space<any>>
    %c0_i32_20 = arith.constant 0 : i32
    %45 = tpu.memref_slice %arg8[%c6_i32, %c0_i32_20] : memref<32x32xf32, #tpu.memory_space<vmem>> -> memref<1x32xf32, #tpu.memory_space<vmem>>
    %46 = tpu.memref_squeeze %45 : memref<1x32xf32, #tpu.memory_space<vmem>> -> memref<32xf32, #tpu.memory_space<vmem>>
    %47 = tpu.memref_slice %arg9[%c6_i32_18] : memref<32x!tpu.dma_semaphore, #tpu.memory_space<semaphore_mem>> -> memref<1x!tpu.dma_semaphore, #tpu.memory_space<semaphore_mem>>
    %48 = tpu.memref_squeeze %47 : memref<1x!tpu.dma_semaphore, #tpu.memory_space<semaphore_mem>> -> memref<!tpu.dma_semaphore, #tpu.memory_space<semaphore_mem>>
    tpu.enqueue_dma source(%44 : memref<32xf32, #tpu.memory_space<any>>) target(%46 : memref<32xf32, #tpu.memory_space<vmem>>) target_semaphore(%48 : memref<!tpu.dma_semaphore, #tpu.memory_space<semaphore_mem>>)
    %c7 = arith.constant 7 : index
    %49 = memref.load %arg1[%c7] : memref<32xi32, #tpu.memory_space<smem>>
    %c7_i32 = arith.constant 7 : i32
    %c7_i32_21 = arith.constant 7 : i32
    %c0_i32_22 = arith.constant 0 : i32
    %50 = tpu.memref_slice %arg2[%49, %c0_i32_22] : memref<54x32xf32, #tpu.memory_space<any>> -> memref<1x32xf32, #tpu.memory_space<any>>
    %51 = tpu.memref_squeeze %50 : memref<1x32xf32, #tpu.memory_space<any>> -> memref<32xf32, #tpu.memory_space<any>>
    %c0_i32_23 = arith.constant 0 : i32
    %52 = tpu.memref_slice %arg8[%c7_i32, %c0_i32_23] : memref<32x32xf32, #tpu.memory_space<vmem>> -> memref<1x32xf32, #tpu.memory_space<vmem>>
    %53 = tpu.memref_squeeze %52 : memref<1x32xf32, #tpu.memory_space<vmem>> -> memref<32xf32, #tpu.memory_space<vmem>>
    %54 = tpu.memref_slice %arg9[%c7_i32_21] : memref<32x!tpu.dma_semaphore, #tpu.memory_space<semaphore_mem>> -> memref<1x!tpu.dma_semaphore, #tpu.memory_space<semaphore_mem>>
    %55 = tpu.memref_squeeze %54 : memref<1x!tpu.dma_semaphore, #tpu.memory_space<semaphore_mem>> -> memref<!tpu.dma_semaphore, #tpu.memory_space<semaphore_mem>>
    tpu.enqueue_dma source(%51 : memref<32xf32, #tpu.memory_space<any>>) target(%53 : memref<32xf32, #tpu.memory_space<vmem>>) target_semaphore(%55 : memref<!tpu.dma_semaphore, #tpu.memory_space<semaphore_mem>>)
    %c8 = arith.constant 8 : index
    %56 = memref.load %arg1[%c8] : memref<32xi32, #tpu.memory_space<smem>>
    %c8_i32 = arith.constant 8 : i32
    %c8_i32_24 = arith.constant 8 : i32
    %c0_i32_25 = arith.constant 0 : i32
    %57 = tpu.memref_slice %arg2[%56, %c0_i32_25] : memref<54x32xf32, #tpu.memory_space<any>> -> memref<1x32xf32, #tpu.memory_space<any>>
    %58 = tpu.memref_squeeze %57 : memref<1x32xf32, #tpu.memory_space<any>> -> memref<32xf32, #tpu.memory_space<any>>
    %c0_i32_26 = arith.constant 0 : i32
    %59 = tpu.memref_slice %arg8[%c8_i32, %c0_i32_26] : memref<32x32xf32, #tpu.memory_space<vmem>> -> memref<1x32xf32, #tpu.memory_space<vmem>>
    %60 = tpu.memref_squeeze %59 : memref<1x32xf32, #tpu.memory_space<vmem>> -> memref<32xf32, #tpu.memory_space<vmem>>
    %61 = tpu.memref_slice %arg9[%c8_i32_24] : memref<32x!tpu.dma_semaphore, #tpu.memory_space<semaphore_mem>> -> memref<1x!tpu.dma_semaphore, #tpu.memory_space<semaphore_mem>>
    %62 = tpu.memref_squeeze %61 : memref<1x!tpu.dma_semaphore, #tpu.memory_space<semaphore_mem>> -> memref<!tpu.dma_semaphore, #tpu.memory_space<semaphore_mem>>
    tpu.enqueue_dma source(%58 : memref<32xf32, #tpu.memory_space<any>>) target(%60 : memref<32xf32, #tpu.memory_space<vmem>>) target_semaphore(%62 : memref<!tpu.dma_semaphore, #tpu.memory_space<semaphore_mem>>)
    %c9 = arith.constant 9 : index
    %63 = memref.load %arg1[%c9] : memref<32xi32, #tpu.memory_space<smem>>
    %c9_i32 = arith.constant 9 : i32
    %c9_i32_27 = arith.constant 9 : i32
    %c0_i32_28 = arith.constant 0 : i32
    %64 = tpu.memref_slice %arg2[%63, %c0_i32_28] : memref<54x32xf32, #tpu.memory_space<any>> -> memref<1x32xf32, #tpu.memory_space<any>>
    %65 = tpu.memref_squeeze %64 : memref<1x32xf32, #tpu.memory_space<any>> -> memref<32xf32, #tpu.memory_space<any>>
    %c0_i32_29 = arith.constant 0 : i32
    %66 = tpu.memref_slice %arg8[%c9_i32, %c0_i32_29] : memref<32x32xf32, #tpu.memory_space<vmem>> -> memref<1x32xf32, #tpu.memory_space<vmem>>
    %67 = tpu.memref_squeeze %66 : memref<1x32xf32, #tpu.memory_space<vmem>> -> memref<32xf32, #tpu.memory_space<vmem>>
    %68 = tpu.memref_slice %arg9[%c9_i32_27] : memref<32x!tpu.dma_semaphore, #tpu.memory_space<semaphore_mem>> -> memref<1x!tpu.dma_semaphore, #tpu.memory_space<semaphore_mem>>
    %69 = tpu.memref_squeeze %68 : memref<1x!tpu.dma_semaphore, #tpu.memory_space<semaphore_mem>> -> memref<!tpu.dma_semaphore, #tpu.memory_space<semaphore_mem>>
    tpu.enqueue_dma source(%65 : memref<32xf32, #tpu.memory_space<any>>) target(%67 : memref<32xf32, #tpu.memory_space<vmem>>) target_semaphore(%69 : memref<!tpu.dma_semaphore, #tpu.memory_space<semaphore_mem>>)
    %c10 = arith.constant 10 : index
    %70 = memref.load %arg1[%c10] : memref<32xi32, #tpu.memory_space<smem>>
    %c10_i32 = arith.constant 10 : i32
    %c10_i32_30 = arith.constant 10 : i32
    %c0_i32_31 = arith.constant 0 : i32
    %71 = tpu.memref_slice %arg2[%70, %c0_i32_31] : memref<54x32xf32, #tpu.memory_space<any>> -> memref<1x32xf32, #tpu.memory_space<any>>
    %72 = tpu.memref_squeeze %71 : memref<1x32xf32, #tpu.memory_space<any>> -> memref<32xf32, #tpu.memory_space<any>>
    %c0_i32_32 = arith.constant 0 : i32
    %73 = tpu.memref_slice %arg8[%c10_i32, %c0_i32_32] : memref<32x32xf32, #tpu.memory_space<vmem>> -> memref<1x32xf32, #tpu.memory_space<vmem>>
    %74 = tpu.memref_squeeze %73 : memref<1x32xf32, #tpu.memory_space<vmem>> -> memref<32xf32, #tpu.memory_space<vmem>>
    %75 = tpu.memref_slice %arg9[%c10_i32_30] : memref<32x!tpu.dma_semaphore, #tpu.memory_space<semaphore_mem>> -> memref<1x!tpu.dma_semaphore, #tpu.memory_space<semaphore_mem>>
    %76 = tpu.memref_squeeze %75 : memref<1x!tpu.dma_semaphore, #tpu.memory_space<semaphore_mem>> -> memref<!tpu.dma_semaphore, #tpu.memory_space<semaphore_mem>>
    tpu.enqueue_dma source(%72 : memref<32xf32, #tpu.memory_space<any>>) target(%74 : memref<32xf32, #tpu.memory_space<vmem>>) target_semaphore(%76 : memref<!tpu.dma_semaphore, #tpu.memory_space<semaphore_mem>>)
    %c11 = arith.constant 11 : index
    %77 = memref.load %arg1[%c11] : memref<32xi32, #tpu.memory_space<smem>>
    %c11_i32 = arith.constant 11 : i32
    %c11_i32_33 = arith.constant 11 : i32
    %c0_i32_34 = arith.constant 0 : i32
    %78 = tpu.memref_slice %arg2[%77, %c0_i32_34] : memref<54x32xf32, #tpu.memory_space<any>> -> memref<1x32xf32, #tpu.memory_space<any>>
    %79 = tpu.memref_squeeze %78 : memref<1x32xf32, #tpu.memory_space<any>> -> memref<32xf32, #tpu.memory_space<any>>
    %c0_i32_35 = arith.constant 0 : i32
    %80 = tpu.memref_slice %arg8[%c11_i32, %c0_i32_35] : memref<32x32xf32, #tpu.memory_space<vmem>> -> memref<1x32xf32, #tpu.memory_space<vmem>>
    %81 = tpu.memref_squeeze %80 : memref<1x32xf32, #tpu.memory_space<vmem>> -> memref<32xf32, #tpu.memory_space<vmem>>
    %82 = tpu.memref_slice %arg9[%c11_i32_33] : memref<32x!tpu.dma_semaphore, #tpu.memory_space<semaphore_mem>> -> memref<1x!tpu.dma_semaphore, #tpu.memory_space<semaphore_mem>>
    %83 = tpu.memref_squeeze %82 : memref<1x!tpu.dma_semaphore, #tpu.memory_space<semaphore_mem>> -> memref<!tpu.dma_semaphore, #tpu.memory_space<semaphore_mem>>
    tpu.enqueue_dma source(%79 : memref<32xf32, #tpu.memory_space<any>>) target(%81 : memref<32xf32, #tpu.memory_space<vmem>>) target_semaphore(%83 : memref<!tpu.dma_semaphore, #tpu.memory_space<semaphore_mem>>)
    %c12 = arith.constant 12 : index
    %84 = memref.load %arg1[%c12] : memref<32xi32, #tpu.memory_space<smem>>
    %c12_i32 = arith.constant 12 : i32
    %c12_i32_36 = arith.constant 12 : i32
    %c0_i32_37 = arith.constant 0 : i32
    %85 = tpu.memref_slice %arg2[%84, %c0_i32_37] : memref<54x32xf32, #tpu.memory_space<any>> -> memref<1x32xf32, #tpu.memory_space<any>>
    %86 = tpu.memref_squeeze %85 : memref<1x32xf32, #tpu.memory_space<any>> -> memref<32xf32, #tpu.memory_space<any>>
    %c0_i32_38 = arith.constant 0 : i32
    %87 = tpu.memref_slice %arg8[%c12_i32, %c0_i32_38] : memref<32x32xf32, #tpu.memory_space<vmem>> -> memref<1x32xf32, #tpu.memory_space<vmem>>
    %88 = tpu.memref_squeeze %87 : memref<1x32xf32, #tpu.memory_space<vmem>> -> memref<32xf32, #tpu.memory_space<vmem>>
    %89 = tpu.memref_slice %arg9[%c12_i32_36] : memref<32x!tpu.dma_semaphore, #tpu.memory_space<semaphore_mem>> -> memref<1x!tpu.dma_semaphore, #tpu.memory_space<semaphore_mem>>
    %90 = tpu.memref_squeeze %89 : memref<1x!tpu.dma_semaphore, #tpu.memory_space<semaphore_mem>> -> memref<!tpu.dma_semaphore, #tpu.memory_space<semaphore_mem>>
    tpu.enqueue_dma source(%86 : memref<32xf32, #tpu.memory_space<any>>) target(%88 : memref<32xf32, #tpu.memory_space<vmem>>) target_semaphore(%90 : memref<!tpu.dma_semaphore, #tpu.memory_space<semaphore_mem>>)
    %c13 = arith.constant 13 : index
    %91 = memref.load %arg1[%c13] : memref<32xi32, #tpu.memory_space<smem>>
    %c13_i32 = arith.constant 13 : i32
    %c13_i32_39 = arith.constant 13 : i32
    %c0_i32_40 = arith.constant 0 : i32
    %92 = tpu.memref_slice %arg2[%91, %c0_i32_40] : memref<54x32xf32, #tpu.memory_space<any>> -> memref<1x32xf32, #tpu.memory_space<any>>
    %93 = tpu.memref_squeeze %92 : memref<1x32xf32, #tpu.memory_space<any>> -> memref<32xf32, #tpu.memory_space<any>>
    %c0_i32_41 = arith.constant 0 : i32
    %94 = tpu.memref_slice %arg8[%c13_i32, %c0_i32_41] : memref<32x32xf32, #tpu.memory_space<vmem>> -> memref<1x32xf32, #tpu.memory_space<vmem>>
    %95 = tpu.memref_squeeze %94 : memref<1x32xf32, #tpu.memory_space<vmem>> -> memref<32xf32, #tpu.memory_space<vmem>>
    %96 = tpu.memref_slice %arg9[%c13_i32_39] : memref<32x!tpu.dma_semaphore, #tpu.memory_space<semaphore_mem>> -> memref<1x!tpu.dma_semaphore, #tpu.memory_space<semaphore_mem>>
    %97 = tpu.memref_squeeze %96 : memref<1x!tpu.dma_semaphore, #tpu.memory_space<semaphore_mem>> -> memref<!tpu.dma_semaphore, #tpu.memory_space<semaphore_mem>>
    tpu.enqueue_dma source(%93 : memref<32xf32, #tpu.memory_space<any>>) target(%95 : memref<32xf32, #tpu.memory_space<vmem>>) target_semaphore(%97 : memref<!tpu.dma_semaphore, #tpu.memory_space<semaphore_mem>>)
    %c14 = arith.constant 14 : index
    %98 = memref.load %arg1[%c14] : memref<32xi32, #tpu.memory_space<smem>>
    %c14_i32 = arith.constant 14 : i32
    %c14_i32_42 = arith.constant 14 : i32
    %c0_i32_43 = arith.constant 0 : i32
    %99 = tpu.memref_slice %arg2[%98, %c0_i32_43] : memref<54x32xf32, #tpu.memory_space<any>> -> memref<1x32xf32, #tpu.memory_space<any>>
    %100 = tpu.memref_squeeze %99 : memref<1x32xf32, #tpu.memory_space<any>> -> memref<32xf32, #tpu.memory_space<any>>
    %c0_i32_44 = arith.constant 0 : i32
    %101 = tpu.memref_slice %arg8[%c14_i32, %c0_i32_44] : memref<32x32xf32, #tpu.memory_space<vmem>> -> memref<1x32xf32, #tpu.memory_space<vmem>>
    %102 = tpu.memref_squeeze %101 : memref<1x32xf32, #tpu.memory_space<vmem>> -> memref<32xf32, #tpu.memory_space<vmem>>
    %103 = tpu.memref_slice %arg9[%c14_i32_42] : memref<32x!tpu.dma_semaphore, #tpu.memory_space<semaphore_mem>> -> memref<1x!tpu.dma_semaphore, #tpu.memory_space<semaphore_mem>>
    %104 = tpu.memref_squeeze %103 : memref<1x!tpu.dma_semaphore, #tpu.memory_space<semaphore_mem>> -> memref<!tpu.dma_semaphore, #tpu.memory_space<semaphore_mem>>
    tpu.enqueue_dma source(%100 : memref<32xf32, #tpu.memory_space<any>>) target(%102 : memref<32xf32, #tpu.memory_space<vmem>>) target_semaphore(%104 : memref<!tpu.dma_semaphore, #tpu.memory_space<semaphore_mem>>)
    %c15 = arith.constant 15 : index
    %105 = memref.load %arg1[%c15] : memref<32xi32, #tpu.memory_space<smem>>
    %c15_i32 = arith.constant 15 : i32
    %c15_i32_45 = arith.constant 15 : i32
    %c0_i32_46 = arith.constant 0 : i32
    %106 = tpu.memref_slice %arg2[%105, %c0_i32_46] : memref<54x32xf32, #tpu.memory_space<any>> -> memref<1x32xf32, #tpu.memory_space<any>>
    %107 = tpu.memref_squeeze %106 : memref<1x32xf32, #tpu.memory_space<any>> -> memref<32xf32, #tpu.memory_space<any>>
    %c0_i32_47 = arith.constant 0 : i32
    %108 = tpu.memref_slice %arg8[%c15_i32, %c0_i32_47] : memref<32x32xf32, #tpu.memory_space<vmem>> -> memref<1x32xf32, #tpu.memory_space<vmem>>
    %109 = tpu.memref_squeeze %108 : memref<1x32xf32, #tpu.memory_space<vmem>> -> memref<32xf32, #tpu.memory_space<vmem>>
    %110 = tpu.memref_slice %arg9[%c15_i32_45] : memref<32x!tpu.dma_semaphore, #tpu.memory_space<semaphore_mem>> -> memref<1x!tpu.dma_semaphore, #tpu.memory_space<semaphore_mem>>
    %111 = tpu.memref_squeeze %110 : memref<1x!tpu.dma_semaphore, #tpu.memory_space<semaphore_mem>> -> memref<!tpu.dma_semaphore, #tpu.memory_space<semaphore_mem>>
    tpu.enqueue_dma source(%107 : memref<32xf32, #tpu.memory_space<any>>) target(%109 : memref<32xf32, #tpu.memory_space<vmem>>) target_semaphore(%111 : memref<!tpu.dma_semaphore, #tpu.memory_space<semaphore_mem>>)
    %c16 = arith.constant 16 : index
    %112 = memref.load %arg1[%c16] : memref<32xi32, #tpu.memory_space<smem>>
    %c16_i32 = arith.constant 16 : i32
    %c16_i32_48 = arith.constant 16 : i32
    %c0_i32_49 = arith.constant 0 : i32
    %113 = tpu.memref_slice %arg2[%112, %c0_i32_49] : memref<54x32xf32, #tpu.memory_space<any>> -> memref<1x32xf32, #tpu.memory_space<any>>
    %114 = tpu.memref_squeeze %113 : memref<1x32xf32, #tpu.memory_space<any>> -> memref<32xf32, #tpu.memory_space<any>>
    %c0_i32_50 = arith.constant 0 : i32
    %115 = tpu.memref_slice %arg8[%c16_i32, %c0_i32_50] : memref<32x32xf32, #tpu.memory_space<vmem>> -> memref<1x32xf32, #tpu.memory_space<vmem>>
    %116 = tpu.memref_squeeze %115 : memref<1x32xf32, #tpu.memory_space<vmem>> -> memref<32xf32, #tpu.memory_space<vmem>>
    %117 = tpu.memref_slice %arg9[%c16_i32_48] : memref<32x!tpu.dma_semaphore, #tpu.memory_space<semaphore_mem>> -> memref<1x!tpu.dma_semaphore, #tpu.memory_space<semaphore_mem>>
    %118 = tpu.memref_squeeze %117 : memref<1x!tpu.dma_semaphore, #tpu.memory_space<semaphore_mem>> -> memref<!tpu.dma_semaphore, #tpu.memory_space<semaphore_mem>>
    tpu.enqueue_dma source(%114 : memref<32xf32, #tpu.memory_space<any>>) target(%116 : memref<32xf32, #tpu.memory_space<vmem>>) target_semaphore(%118 : memref<!tpu.dma_semaphore, #tpu.memory_space<semaphore_mem>>)
    %c17 = arith.constant 17 : index
    %119 = memref.load %arg1[%c17] : memref<32xi32, #tpu.memory_space<smem>>
    %c17_i32 = arith.constant 17 : i32
    %c17_i32_51 = arith.constant 17 : i32
    %c0_i32_52 = arith.constant 0 : i32
    %120 = tpu.memref_slice %arg2[%119, %c0_i32_52] : memref<54x32xf32, #tpu.memory_space<any>> -> memref<1x32xf32, #tpu.memory_space<any>>
    %121 = tpu.memref_squeeze %120 : memref<1x32xf32, #tpu.memory_space<any>> -> memref<32xf32, #tpu.memory_space<any>>
    %c0_i32_53 = arith.constant 0 : i32
    %122 = tpu.memref_slice %arg8[%c17_i32, %c0_i32_53] : memref<32x32xf32, #tpu.memory_space<vmem>> -> memref<1x32xf32, #tpu.memory_space<vmem>>
    %123 = tpu.memref_squeeze %122 : memref<1x32xf32, #tpu.memory_space<vmem>> -> memref<32xf32, #tpu.memory_space<vmem>>
    %124 = tpu.memref_slice %arg9[%c17_i32_51] : memref<32x!tpu.dma_semaphore, #tpu.memory_space<semaphore_mem>> -> memref<1x!tpu.dma_semaphore, #tpu.memory_space<semaphore_mem>>
    %125 = tpu.memref_squeeze %124 : memref<1x!tpu.dma_semaphore, #tpu.memory_space<semaphore_mem>> -> memref<!tpu.dma_semaphore, #tpu.memory_space<semaphore_mem>>
    tpu.enqueue_dma source(%121 : memref<32xf32, #tpu.memory_space<any>>) target(%123 : memref<32xf32, #tpu.memory_space<vmem>>) target_semaphore(%125 : memref<!tpu.dma_semaphore, #tpu.memory_space<semaphore_mem>>)
    %c18 = arith.constant 18 : index
    %126 = memref.load %arg1[%c18] : memref<32xi32, #tpu.memory_space<smem>>
    %c18_i32 = arith.constant 18 : i32
    %c18_i32_54 = arith.constant 18 : i32
    %c0_i32_55 = arith.constant 0 : i32
    %127 = tpu.memref_slice %arg2[%126, %c0_i32_55] : memref<54x32xf32, #tpu.memory_space<any>> -> memref<1x32xf32, #tpu.memory_space<any>>
    %128 = tpu.memref_squeeze %127 : memref<1x32xf32, #tpu.memory_space<any>> -> memref<32xf32, #tpu.memory_space<any>>
    %c0_i32_56 = arith.constant 0 : i32
    %129 = tpu.memref_slice %arg8[%c18_i32, %c0_i32_56] : memref<32x32xf32, #tpu.memory_space<vmem>> -> memref<1x32xf32, #tpu.memory_space<vmem>>
    %130 = tpu.memref_squeeze %129 : memref<1x32xf32, #tpu.memory_space<vmem>> -> memref<32xf32, #tpu.memory_space<vmem>>
    %131 = tpu.memref_slice %arg9[%c18_i32_54] : memref<32x!tpu.dma_semaphore, #tpu.memory_space<semaphore_mem>> -> memref<1x!tpu.dma_semaphore, #tpu.memory_space<semaphore_mem>>
    %132 = tpu.memref_squeeze %131 : memref<1x!tpu.dma_semaphore, #tpu.memory_space<semaphore_mem>> -> memref<!tpu.dma_semaphore, #tpu.memory_space<semaphore_mem>>
    tpu.enqueue_dma source(%128 : memref<32xf32, #tpu.memory_space<any>>) target(%130 : memref<32xf32, #tpu.memory_space<vmem>>) target_semaphore(%132 : memref<!tpu.dma_semaphore, #tpu.memory_space<semaphore_mem>>)
    %c19 = arith.constant 19 : index
    %133 = memref.load %arg1[%c19] : memref<32xi32, #tpu.memory_space<smem>>
    %c19_i32 = arith.constant 19 : i32
    %c19_i32_57 = arith.constant 19 : i32
    %c0_i32_58 = arith.constant 0 : i32
    %134 = tpu.memref_slice %arg2[%133, %c0_i32_58] : memref<54x32xf32, #tpu.memory_space<any>> -> memref<1x32xf32, #tpu.memory_space<any>>
    %135 = tpu.memref_squeeze %134 : memref<1x32xf32, #tpu.memory_space<any>> -> memref<32xf32, #tpu.memory_space<any>>
    %c0_i32_59 = arith.constant 0 : i32
    %136 = tpu.memref_slice %arg8[%c19_i32, %c0_i32_59] : memref<32x32xf32, #tpu.memory_space<vmem>> -> memref<1x32xf32, #tpu.memory_space<vmem>>
    %137 = tpu.memref_squeeze %136 : memref<1x32xf32, #tpu.memory_space<vmem>> -> memref<32xf32, #tpu.memory_space<vmem>>
    %138 = tpu.memref_slice %arg9[%c19_i32_57] : memref<32x!tpu.dma_semaphore, #tpu.memory_space<semaphore_mem>> -> memref<1x!tpu.dma_semaphore, #tpu.memory_space<semaphore_mem>>
    %139 = tpu.memref_squeeze %138 : memref<1x!tpu.dma_semaphore, #tpu.memory_space<semaphore_mem>> -> memref<!tpu.dma_semaphore, #tpu.memory_space<semaphore_mem>>
    tpu.enqueue_dma source(%135 : memref<32xf32, #tpu.memory_space<any>>) target(%137 : memref<32xf32, #tpu.memory_space<vmem>>) target_semaphore(%139 : memref<!tpu.dma_semaphore, #tpu.memory_space<semaphore_mem>>)
    %c20 = arith.constant 20 : index
    %140 = memref.load %arg1[%c20] : memref<32xi32, #tpu.memory_space<smem>>
    %c20_i32 = arith.constant 20 : i32
    %c20_i32_60 = arith.constant 20 : i32
    %c0_i32_61 = arith.constant 0 : i32
    %141 = tpu.memref_slice %arg2[%140, %c0_i32_61] : memref<54x32xf32, #tpu.memory_space<any>> -> memref<1x32xf32, #tpu.memory_space<any>>
    %142 = tpu.memref_squeeze %141 : memref<1x32xf32, #tpu.memory_space<any>> -> memref<32xf32, #tpu.memory_space<any>>
    %c0_i32_62 = arith.constant 0 : i32
    %143 = tpu.memref_slice %arg8[%c20_i32, %c0_i32_62] : memref<32x32xf32, #tpu.memory_space<vmem>> -> memref<1x32xf32, #tpu.memory_space<vmem>>
    %144 = tpu.memref_squeeze %143 : memref<1x32xf32, #tpu.memory_space<vmem>> -> memref<32xf32, #tpu.memory_space<vmem>>
    %145 = tpu.memref_slice %arg9[%c20_i32_60] : memref<32x!tpu.dma_semaphore, #tpu.memory_space<semaphore_mem>> -> memref<1x!tpu.dma_semaphore, #tpu.memory_space<semaphore_mem>>
    %146 = tpu.memref_squeeze %145 : memref<1x!tpu.dma_semaphore, #tpu.memory_space<semaphore_mem>> -> memref<!tpu.dma_semaphore, #tpu.memory_space<semaphore_mem>>
    tpu.enqueue_dma source(%142 : memref<32xf32, #tpu.memory_space<any>>) target(%144 : memref<32xf32, #tpu.memory_space<vmem>>) target_semaphore(%146 : memref<!tpu.dma_semaphore, #tpu.memory_space<semaphore_mem>>)
    %c21 = arith.constant 21 : index
    %147 = memref.load %arg1[%c21] : memref<32xi32, #tpu.memory_space<smem>>
    %c21_i32 = arith.constant 21 : i32
    %c21_i32_63 = arith.constant 21 : i32
    %c0_i32_64 = arith.constant 0 : i32
    %148 = tpu.memref_slice %arg2[%147, %c0_i32_64] : memref<54x32xf32, #tpu.memory_space<any>> -> memref<1x32xf32, #tpu.memory_space<any>>
    %149 = tpu.memref_squeeze %148 : memref<1x32xf32, #tpu.memory_space<any>> -> memref<32xf32, #tpu.memory_space<any>>
    %c0_i32_65 = arith.constant 0 : i32
    %150 = tpu.memref_slice %arg8[%c21_i32, %c0_i32_65] : memref<32x32xf32, #tpu.memory_space<vmem>> -> memref<1x32xf32, #tpu.memory_space<vmem>>
    %151 = tpu.memref_squeeze %150 : memref<1x32xf32, #tpu.memory_space<vmem>> -> memref<32xf32, #tpu.memory_space<vmem>>
    %152 = tpu.memref_slice %arg9[%c21_i32_63] : memref<32x!tpu.dma_semaphore, #tpu.memory_space<semaphore_mem>> -> memref<1x!tpu.dma_semaphore, #tpu.memory_space<semaphore_mem>>
    %153 = tpu.memref_squeeze %152 : memref<1x!tpu.dma_semaphore, #tpu.memory_space<semaphore_mem>> -> memref<!tpu.dma_semaphore, #tpu.memory_space<semaphore_mem>>
    tpu.enqueue_dma source(%149 : memref<32xf32, #tpu.memory_space<any>>) target(%151 : memref<32xf32, #tpu.memory_space<vmem>>) target_semaphore(%153 : memref<!tpu.dma_semaphore, #tpu.memory_space<semaphore_mem>>)
    %c22 = arith.constant 22 : index
    %154 = memref.load %arg1[%c22] : memref<32xi32, #tpu.memory_space<smem>>
    %c22_i32 = arith.constant 22 : i32
    %c22_i32_66 = arith.constant 22 : i32
    %c0_i32_67 = arith.constant 0 : i32
    %155 = tpu.memref_slice %arg2[%154, %c0_i32_67] : memref<54x32xf32, #tpu.memory_space<any>> -> memref<1x32xf32, #tpu.memory_space<any>>
    %156 = tpu.memref_squeeze %155 : memref<1x32xf32, #tpu.memory_space<any>> -> memref<32xf32, #tpu.memory_space<any>>
    %c0_i32_68 = arith.constant 0 : i32
    %157 = tpu.memref_slice %arg8[%c22_i32, %c0_i32_68] : memref<32x32xf32, #tpu.memory_space<vmem>> -> memref<1x32xf32, #tpu.memory_space<vmem>>
    %158 = tpu.memref_squeeze %157 : memref<1x32xf32, #tpu.memory_space<vmem>> -> memref<32xf32, #tpu.memory_space<vmem>>
    %159 = tpu.memref_slice %arg9[%c22_i32_66] : memref<32x!tpu.dma_semaphore, #tpu.memory_space<semaphore_mem>> -> memref<1x!tpu.dma_semaphore, #tpu.memory_space<semaphore_mem>>
    %160 = tpu.memref_squeeze %159 : memref<1x!tpu.dma_semaphore, #tpu.memory_space<semaphore_mem>> -> memref<!tpu.dma_semaphore, #tpu.memory_space<semaphore_mem>>
    tpu.enqueue_dma source(%156 : memref<32xf32, #tpu.memory_space<any>>) target(%158 : memref<32xf32, #tpu.memory_space<vmem>>) target_semaphore(%160 : memref<!tpu.dma_semaphore, #tpu.memory_space<semaphore_mem>>)
    %c23 = arith.constant 23 : index
    %161 = memref.load %arg1[%c23] : memref<32xi32, #tpu.memory_space<smem>>
    %c23_i32 = arith.constant 23 : i32
    %c23_i32_69 = arith.constant 23 : i32
    %c0_i32_70 = arith.constant 0 : i32
    %162 = tpu.memref_slice %arg2[%161, %c0_i32_70] : memref<54x32xf32, #tpu.memory_space<any>> -> memref<1x32xf32, #tpu.memory_space<any>>
    %163 = tpu.memref_squeeze %162 : memref<1x32xf32, #tpu.memory_space<any>> -> memref<32xf32, #tpu.memory_space<any>>
    %c0_i32_71 = arith.constant 0 : i32
    %164 = tpu.memref_slice %arg8[%c23_i32, %c0_i32_71] : memref<32x32xf32, #tpu.memory_space<vmem>> -> memref<1x32xf32, #tpu.memory_space<vmem>>
    %165 = tpu.memref_squeeze %164 : memref<1x32xf32, #tpu.memory_space<vmem>> -> memref<32xf32, #tpu.memory_space<vmem>>
    %166 = tpu.memref_slice %arg9[%c23_i32_69] : memref<32x!tpu.dma_semaphore, #tpu.memory_space<semaphore_mem>> -> memref<1x!tpu.dma_semaphore, #tpu.memory_space<semaphore_mem>>
    %167 = tpu.memref_squeeze %166 : memref<1x!tpu.dma_semaphore, #tpu.memory_space<semaphore_mem>> -> memref<!tpu.dma_semaphore, #tpu.memory_space<semaphore_mem>>
    tpu.enqueue_dma source(%163 : memref<32xf32, #tpu.memory_space<any>>) target(%165 : memref<32xf32, #tpu.memory_space<vmem>>) target_semaphore(%167 : memref<!tpu.dma_semaphore, #tpu.memory_space<semaphore_mem>>)
    %c24 = arith.constant 24 : index
    %168 = memref.load %arg1[%c24] : memref<32xi32, #tpu.memory_space<smem>>
    %c24_i32 = arith.constant 24 : i32
    %c24_i32_72 = arith.constant 24 : i32
    %c0_i32_73 = arith.constant 0 : i32
    %169 = tpu.memref_slice %arg2[%168, %c0_i32_73] : memref<54x32xf32, #tpu.memory_space<any>> -> memref<1x32xf32, #tpu.memory_space<any>>
    %170 = tpu.memref_squeeze %169 : memref<1x32xf32, #tpu.memory_space<any>> -> memref<32xf32, #tpu.memory_space<any>>
    %c0_i32_74 = arith.constant 0 : i32
    %171 = tpu.memref_slice %arg8[%c24_i32, %c0_i32_74] : memref<32x32xf32, #tpu.memory_space<vmem>> -> memref<1x32xf32, #tpu.memory_space<vmem>>
    %172 = tpu.memref_squeeze %171 : memref<1x32xf32, #tpu.memory_space<vmem>> -> memref<32xf32, #tpu.memory_space<vmem>>
    %173 = tpu.memref_slice %arg9[%c24_i32_72] : memref<32x!tpu.dma_semaphore, #tpu.memory_space<semaphore_mem>> -> memref<1x!tpu.dma_semaphore, #tpu.memory_space<semaphore_mem>>
    %174 = tpu.memref_squeeze %173 : memref<1x!tpu.dma_semaphore, #tpu.memory_space<semaphore_mem>> -> memref<!tpu.dma_semaphore, #tpu.memory_space<semaphore_mem>>
    tpu.enqueue_dma source(%170 : memref<32xf32, #tpu.memory_space<any>>) target(%172 : memref<32xf32, #tpu.memory_space<vmem>>) target_semaphore(%174 : memref<!tpu.dma_semaphore, #tpu.memory_space<semaphore_mem>>)
    %c25 = arith.constant 25 : index
    %175 = memref.load %arg1[%c25] : memref<32xi32, #tpu.memory_space<smem>>
    %c25_i32 = arith.constant 25 : i32
    %c25_i32_75 = arith.constant 25 : i32
    %c0_i32_76 = arith.constant 0 : i32
    %176 = tpu.memref_slice %arg2[%175, %c0_i32_76] : memref<54x32xf32, #tpu.memory_space<any>> -> memref<1x32xf32, #tpu.memory_space<any>>
    %177 = tpu.memref_squeeze %176 : memref<1x32xf32, #tpu.memory_space<any>> -> memref<32xf32, #tpu.memory_space<any>>
    %c0_i32_77 = arith.constant 0 : i32
    %178 = tpu.memref_slice %arg8[%c25_i32, %c0_i32_77] : memref<32x32xf32, #tpu.memory_space<vmem>> -> memref<1x32xf32, #tpu.memory_space<vmem>>
    %179 = tpu.memref_squeeze %178 : memref<1x32xf32, #tpu.memory_space<vmem>> -> memref<32xf32, #tpu.memory_space<vmem>>
    %180 = tpu.memref_slice %arg9[%c25_i32_75] : memref<32x!tpu.dma_semaphore, #tpu.memory_space<semaphore_mem>> -> memref<1x!tpu.dma_semaphore, #tpu.memory_space<semaphore_mem>>
    %181 = tpu.memref_squeeze %180 : memref<1x!tpu.dma_semaphore, #tpu.memory_space<semaphore_mem>> -> memref<!tpu.dma_semaphore, #tpu.memory_space<semaphore_mem>>
    tpu.enqueue_dma source(%177 : memref<32xf32, #tpu.memory_space<any>>) target(%179 : memref<32xf32, #tpu.memory_space<vmem>>) target_semaphore(%181 : memref<!tpu.dma_semaphore, #tpu.memory_space<semaphore_mem>>)
    %c26 = arith.constant 26 : index
    %182 = memref.load %arg1[%c26] : memref<32xi32, #tpu.memory_space<smem>>
    %c26_i32 = arith.constant 26 : i32
    %c26_i32_78 = arith.constant 26 : i32
    %c0_i32_79 = arith.constant 0 : i32
    %183 = tpu.memref_slice %arg2[%182, %c0_i32_79] : memref<54x32xf32, #tpu.memory_space<any>> -> memref<1x32xf32, #tpu.memory_space<any>>
    %184 = tpu.memref_squeeze %183 : memref<1x32xf32, #tpu.memory_space<any>> -> memref<32xf32, #tpu.memory_space<any>>
    %c0_i32_80 = arith.constant 0 : i32
    %185 = tpu.memref_slice %arg8[%c26_i32, %c0_i32_80] : memref<32x32xf32, #tpu.memory_space<vmem>> -> memref<1x32xf32, #tpu.memory_space<vmem>>
    %186 = tpu.memref_squeeze %185 : memref<1x32xf32, #tpu.memory_space<vmem>> -> memref<32xf32, #tpu.memory_space<vmem>>
    %187 = tpu.memref_slice %arg9[%c26_i32_78] : memref<32x!tpu.dma_semaphore, #tpu.memory_space<semaphore_mem>> -> memref<1x!tpu.dma_semaphore, #tpu.memory_space<semaphore_mem>>
    %188 = tpu.memref_squeeze %187 : memref<1x!tpu.dma_semaphore, #tpu.memory_space<semaphore_mem>> -> memref<!tpu.dma_semaphore, #tpu.memory_space<semaphore_mem>>
    tpu.enqueue_dma source(%184 : memref<32xf32, #tpu.memory_space<any>>) target(%186 : memref<32xf32, #tpu.memory_space<vmem>>) target_semaphore(%188 : memref<!tpu.dma_semaphore, #tpu.memory_space<semaphore_mem>>)
    %c27 = arith.constant 27 : index
    %189 = memref.load %arg1[%c27] : memref<32xi32, #tpu.memory_space<smem>>
    %c27_i32 = arith.constant 27 : i32
    %c27_i32_81 = arith.constant 27 : i32
    %c0_i32_82 = arith.constant 0 : i32
    %190 = tpu.memref_slice %arg2[%189, %c0_i32_82] : memref<54x32xf32, #tpu.memory_space<any>> -> memref<1x32xf32, #tpu.memory_space<any>>
    %191 = tpu.memref_squeeze %190 : memref<1x32xf32, #tpu.memory_space<any>> -> memref<32xf32, #tpu.memory_space<any>>
    %c0_i32_83 = arith.constant 0 : i32
    %192 = tpu.memref_slice %arg8[%c27_i32, %c0_i32_83] : memref<32x32xf32, #tpu.memory_space<vmem>> -> memref<1x32xf32, #tpu.memory_space<vmem>>
    %193 = tpu.memref_squeeze %192 : memref<1x32xf32, #tpu.memory_space<vmem>> -> memref<32xf32, #tpu.memory_space<vmem>>
    %194 = tpu.memref_slice %arg9[%c27_i32_81] : memref<32x!tpu.dma_semaphore, #tpu.memory_space<semaphore_mem>> -> memref<1x!tpu.dma_semaphore, #tpu.memory_space<semaphore_mem>>
    %195 = tpu.memref_squeeze %194 : memref<1x!tpu.dma_semaphore, #tpu.memory_space<semaphore_mem>> -> memref<!tpu.dma_semaphore, #tpu.memory_space<semaphore_mem>>
    tpu.enqueue_dma source(%191 : memref<32xf32, #tpu.memory_space<any>>) target(%193 : memref<32xf32, #tpu.memory_space<vmem>>) target_semaphore(%195 : memref<!tpu.dma_semaphore, #tpu.memory_space<semaphore_mem>>)
    %c28 = arith.constant 28 : index
    %196 = memref.load %arg1[%c28] : memref<32xi32, #tpu.memory_space<smem>>
    %c28_i32 = arith.constant 28 : i32
    %c28_i32_84 = arith.constant 28 : i32
    %c0_i32_85 = arith.constant 0 : i32
    %197 = tpu.memref_slice %arg2[%196, %c0_i32_85] : memref<54x32xf32, #tpu.memory_space<any>> -> memref<1x32xf32, #tpu.memory_space<any>>
    %198 = tpu.memref_squeeze %197 : memref<1x32xf32, #tpu.memory_space<any>> -> memref<32xf32, #tpu.memory_space<any>>
    %c0_i32_86 = arith.constant 0 : i32
    %199 = tpu.memref_slice %arg8[%c28_i32, %c0_i32_86] : memref<32x32xf32, #tpu.memory_space<vmem>> -> memref<1x32xf32, #tpu.memory_space<vmem>>
    %200 = tpu.memref_squeeze %199 : memref<1x32xf32, #tpu.memory_space<vmem>> -> memref<32xf32, #tpu.memory_space<vmem>>
    %201 = tpu.memref_slice %arg9[%c28_i32_84] : memref<32x!tpu.dma_semaphore, #tpu.memory_space<semaphore_mem>> -> memref<1x!tpu.dma_semaphore, #tpu.memory_space<semaphore_mem>>
    %202 = tpu.memref_squeeze %201 : memref<1x!tpu.dma_semaphore, #tpu.memory_space<semaphore_mem>> -> memref<!tpu.dma_semaphore, #tpu.memory_space<semaphore_mem>>
    tpu.enqueue_dma source(%198 : memref<32xf32, #tpu.memory_space<any>>) target(%200 : memref<32xf32, #tpu.memory_space<vmem>>) target_semaphore(%202 : memref<!tpu.dma_semaphore, #tpu.memory_space<semaphore_mem>>)
    %c29 = arith.constant 29 : index
    %203 = memref.load %arg1[%c29] : memref<32xi32, #tpu.memory_space<smem>>
    %c29_i32 = arith.constant 29 : i32
    %c29_i32_87 = arith.constant 29 : i32
    %c0_i32_88 = arith.constant 0 : i32
    %204 = tpu.memref_slice %arg2[%203, %c0_i32_88] : memref<54x32xf32, #tpu.memory_space<any>> -> memref<1x32xf32, #tpu.memory_space<any>>
    %205 = tpu.memref_squeeze %204 : memref<1x32xf32, #tpu.memory_space<any>> -> memref<32xf32, #tpu.memory_space<any>>
    %c0_i32_89 = arith.constant 0 : i32
    %206 = tpu.memref_slice %arg8[%c29_i32, %c0_i32_89] : memref<32x32xf32, #tpu.memory_space<vmem>> -> memref<1x32xf32, #tpu.memory_space<vmem>>
    %207 = tpu.memref_squeeze %206 : memref<1x32xf32, #tpu.memory_space<vmem>> -> memref<32xf32, #tpu.memory_space<vmem>>
    %208 = tpu.memref_slice %arg9[%c29_i32_87] : memref<32x!tpu.dma_semaphore, #tpu.memory_space<semaphore_mem>> -> memref<1x!tpu.dma_semaphore, #tpu.memory_space<semaphore_mem>>
    %209 = tpu.memref_squeeze %208 : memref<1x!tpu.dma_semaphore, #tpu.memory_space<semaphore_mem>> -> memref<!tpu.dma_semaphore, #tpu.memory_space<semaphore_mem>>
    tpu.enqueue_dma source(%205 : memref<32xf32, #tpu.memory_space<any>>) target(%207 : memref<32xf32, #tpu.memory_space<vmem>>) target_semaphore(%209 : memref<!tpu.dma_semaphore, #tpu.memory_space<semaphore_mem>>)
    %c30 = arith.constant 30 : index
    %210 = memref.load %arg1[%c30] : memref<32xi32, #tpu.memory_space<smem>>
    %c30_i32 = arith.constant 30 : i32
    %c30_i32_90 = arith.constant 30 : i32
    %c0_i32_91 = arith.constant 0 : i32
    %211 = tpu.memref_slice %arg2[%210, %c0_i32_91] : memref<54x32xf32, #tpu.memory_space<any>> -> memref<1x32xf32, #tpu.memory_space<any>>
    %212 = tpu.memref_squeeze %211 : memref<1x32xf32, #tpu.memory_space<any>> -> memref<32xf32, #tpu.memory_space<any>>
    %c0_i32_92 = arith.constant 0 : i32
    %213 = tpu.memref_slice %arg8[%c30_i32, %c0_i32_92] : memref<32x32xf32, #tpu.memory_space<vmem>> -> memref<1x32xf32, #tpu.memory_space<vmem>>
    %214 = tpu.memref_squeeze %213 : memref<1x32xf32, #tpu.memory_space<vmem>> -> memref<32xf32, #tpu.memory_space<vmem>>
    %215 = tpu.memref_slice %arg9[%c30_i32_90] : memref<32x!tpu.dma_semaphore, #tpu.memory_space<semaphore_mem>> -> memref<1x!tpu.dma_semaphore, #tpu.memory_space<semaphore_mem>>
    %216 = tpu.memref_squeeze %215 : memref<1x!tpu.dma_semaphore, #tpu.memory_space<semaphore_mem>> -> memref<!tpu.dma_semaphore, #tpu.memory_space<semaphore_mem>>
    tpu.enqueue_dma source(%212 : memref<32xf32, #tpu.memory_space<any>>) target(%214 : memref<32xf32, #tpu.memory_space<vmem>>) target_semaphore(%216 : memref<!tpu.dma_semaphore, #tpu.memory_space<semaphore_mem>>)
    %c31 = arith.constant 31 : index
    %217 = memref.load %arg1[%c31] : memref<32xi32, #tpu.memory_space<smem>>
    %c31_i32 = arith.constant 31 : i32
    %c31_i32_93 = arith.constant 31 : i32
    %c0_i32_94 = arith.constant 0 : i32
    %218 = tpu.memref_slice %arg2[%217, %c0_i32_94] : memref<54x32xf32, #tpu.memory_space<any>> -> memref<1x32xf32, #tpu.memory_space<any>>
    %219 = tpu.memref_squeeze %218 : memref<1x32xf32, #tpu.memory_space<any>> -> memref<32xf32, #tpu.memory_space<any>>
    %c0_i32_95 = arith.constant 0 : i32
    %220 = tpu.memref_slice %arg8[%c31_i32, %c0_i32_95] : memref<32x32xf32, #tpu.memory_space<vmem>> -> memref<1x32xf32, #tpu.memory_space<vmem>>
    %221 = tpu.memref_squeeze %220 : memref<1x32xf32, #tpu.memory_space<vmem>> -> memref<32xf32, #tpu.memory_space<vmem>>
    %222 = tpu.memref_slice %arg9[%c31_i32_93] : memref<32x!tpu.dma_semaphore, #tpu.memory_space<semaphore_mem>> -> memref<1x!tpu.dma_semaphore, #tpu.memory_space<semaphore_mem>>
    %223 = tpu.memref_squeeze %222 : memref<1x!tpu.dma_semaphore, #tpu.memory_space<semaphore_mem>> -> memref<!tpu.dma_semaphore, #tpu.memory_space<semaphore_mem>>
    tpu.enqueue_dma source(%219 : memref<32xf32, #tpu.memory_space<any>>) target(%221 : memref<32xf32, #tpu.memory_space<vmem>>) target_semaphore(%223 : memref<!tpu.dma_semaphore, #tpu.memory_space<semaphore_mem>>)
    %c0_96 = arith.constant 0 : index
    %c0_97 = arith.constant 0 : index
    %224 = vector.load %arg3[%c0_96, %c0_97] : memref<1x32xi32, #tpu.memory_space<vmem>>, vector<1x32xi32>
    %c0_98 = arith.constant 0 : index
    %c0_99 = arith.constant 0 : index
    %225 = vector.load %arg5[%c0_98, %c0_99] : memref<6x32xf32, #tpu.memory_space<vmem>>, vector<6x32xf32>
    %226 = tpu.iota {dimensions = array<i32: 0>} : vector<6x32xi32>
    %227 = vector.broadcast %224 : vector<1x32xi32> to vector<6x32xi32>
    %228 = arith.cmpi eq, %226, %227 : vector<6x32xi32>
    %229 = arith.extui %228 : vector<6x32xi1> to vector<6x32xi32>
    %230 = arith.sitofp %229 : vector<6x32xi32> to vector<6x32xf32>
    %cst = arith.constant dense<0.000000e+00> : vector<32x32xf32>
    %231 = tpu.matmul %230, %225, %cst {dimension_numbers = #tpu.dot_dimension_numbers<[0], [0], [1], [1], [0, 1, 1, 1], [], []>} : vector<6x32xf32>, vector<6x32xf32>, vector<32x32xf32> -> vector<32x32xf32>
    %c0_100 = arith.constant 0 : index
    %c0_101 = arith.constant 0 : index
    %232 = vector.load %arg4[%c0_100, %c0_101] : memref<1x32xi32, #tpu.memory_space<vmem>>, vector<1x32xi32>
    %c0_102 = arith.constant 0 : index
    %c0_103 = arith.constant 0 : index
    %233 = vector.load %arg6[%c0_102, %c0_103] : memref<33x32xf32, #tpu.memory_space<vmem>>, vector<33x32xf32>
    %234 = tpu.iota {dimensions = array<i32: 0>} : vector<33x32xi32>
    %235 = vector.broadcast %232 : vector<1x32xi32> to vector<33x32xi32>
    %236 = arith.cmpi eq, %234, %235 : vector<33x32xi32>
    %237 = arith.extui %236 : vector<33x32xi1> to vector<33x32xi32>
    %238 = arith.sitofp %237 : vector<33x32xi32> to vector<33x32xf32>
    %cst_104 = arith.constant dense<0.000000e+00> : vector<32x32xf32>
    %239 = tpu.matmul %238, %233, %cst_104 {dimension_numbers = #tpu.dot_dimension_numbers<[0], [0], [1], [1], [0, 1, 1, 1], [], []>} : vector<33x32xf32>, vector<33x32xf32>, vector<32x32xf32> -> vector<32x32xf32>
    %240 = arith.addf %231, %239 : vector<32x32xf32>
    %c0_i32_105 = arith.constant 0 : i32
    %c0_i32_106 = arith.constant 0 : i32
    %c0_i32_107 = arith.constant 0 : i32
    %c0_i32_108 = arith.constant 0 : i32
    %241 = tpu.memref_slice %arg2[%c0_i32_105, %c0_i32_108] : memref<54x32xf32, #tpu.memory_space<any>> -> memref<1x32xf32, #tpu.memory_space<any>>
    %242 = tpu.memref_squeeze %241 : memref<1x32xf32, #tpu.memory_space<any>> -> memref<32xf32, #tpu.memory_space<any>>
    %c0_i32_109 = arith.constant 0 : i32
    %243 = tpu.memref_slice %arg8[%c0_i32_106, %c0_i32_109] : memref<32x32xf32, #tpu.memory_space<vmem>> -> memref<1x32xf32, #tpu.memory_space<vmem>>
    %244 = tpu.memref_squeeze %243 : memref<1x32xf32, #tpu.memory_space<vmem>> -> memref<32xf32, #tpu.memory_space<vmem>>
    %245 = tpu.memref_slice %arg9[%c0_i32_107] : memref<32x!tpu.dma_semaphore, #tpu.memory_space<semaphore_mem>> -> memref<1x!tpu.dma_semaphore, #tpu.memory_space<semaphore_mem>>
    %246 = tpu.memref_squeeze %245 : memref<1x!tpu.dma_semaphore, #tpu.memory_space<semaphore_mem>> -> memref<!tpu.dma_semaphore, #tpu.memory_space<semaphore_mem>>
    tpu.wait_dma2 semaphore(%246 : memref<!tpu.dma_semaphore, #tpu.memory_space<semaphore_mem>>) src(%242 : memref<32xf32, #tpu.memory_space<any>>) dst(%244 : memref<32xf32, #tpu.memory_space<vmem>>)
    %c0_i32_110 = arith.constant 0 : i32
    %c1_i32_111 = arith.constant 1 : i32
    %c1_i32_112 = arith.constant 1 : i32
    %c0_i32_113 = arith.constant 0 : i32
    %247 = tpu.memref_slice %arg2[%c0_i32_110, %c0_i32_113] : memref<54x32xf32, #tpu.memory_space<any>> -> memref<1x32xf32, #tpu.memory_space<any>>
    %248 = tpu.memref_squeeze %247 : memref<1x32xf32, #tpu.memory_space<any>> -> memref<32xf32, #tpu.memory_space<any>>
    %c0_i32_114 = arith.constant 0 : i32
    %249 = tpu.memref_slice %arg8[%c1_i32_111, %c0_i32_114] : memref<32x32xf32, #tpu.memory_space<vmem>> -> memref<1x32xf32, #tpu.memory_space<vmem>>
    %250 = tpu.memref_squeeze %249 : memref<1x32xf32, #tpu.memory_space<vmem>> -> memref<32xf32, #tpu.memory_space<vmem>>
    %251 = tpu.memref_slice %arg9[%c1_i32_112] : memref<32x!tpu.dma_semaphore, #tpu.memory_space<semaphore_mem>> -> memref<1x!tpu.dma_semaphore, #tpu.memory_space<semaphore_mem>>
    %252 = tpu.memref_squeeze %251 : memref<1x!tpu.dma_semaphore, #tpu.memory_space<semaphore_mem>> -> memref<!tpu.dma_semaphore, #tpu.memory_space<semaphore_mem>>
    tpu.wait_dma2 semaphore(%252 : memref<!tpu.dma_semaphore, #tpu.memory_space<semaphore_mem>>) src(%248 : memref<32xf32, #tpu.memory_space<any>>) dst(%250 : memref<32xf32, #tpu.memory_space<vmem>>)
    %c0_i32_115 = arith.constant 0 : i32
    %c2_i32_116 = arith.constant 2 : i32
    %c2_i32_117 = arith.constant 2 : i32
    %c0_i32_118 = arith.constant 0 : i32
    %253 = tpu.memref_slice %arg2[%c0_i32_115, %c0_i32_118] : memref<54x32xf32, #tpu.memory_space<any>> -> memref<1x32xf32, #tpu.memory_space<any>>
    %254 = tpu.memref_squeeze %253 : memref<1x32xf32, #tpu.memory_space<any>> -> memref<32xf32, #tpu.memory_space<any>>
    %c0_i32_119 = arith.constant 0 : i32
    %255 = tpu.memref_slice %arg8[%c2_i32_116, %c0_i32_119] : memref<32x32xf32, #tpu.memory_space<vmem>> -> memref<1x32xf32, #tpu.memory_space<vmem>>
    %256 = tpu.memref_squeeze %255 : memref<1x32xf32, #tpu.memory_space<vmem>> -> memref<32xf32, #tpu.memory_space<vmem>>
    %257 = tpu.memref_slice %arg9[%c2_i32_117] : memref<32x!tpu.dma_semaphore, #tpu.memory_space<semaphore_mem>> -> memref<1x!tpu.dma_semaphore, #tpu.memory_space<semaphore_mem>>
    %258 = tpu.memref_squeeze %257 : memref<1x!tpu.dma_semaphore, #tpu.memory_space<semaphore_mem>> -> memref<!tpu.dma_semaphore, #tpu.memory_space<semaphore_mem>>
    tpu.wait_dma2 semaphore(%258 : memref<!tpu.dma_semaphore, #tpu.memory_space<semaphore_mem>>) src(%254 : memref<32xf32, #tpu.memory_space<any>>) dst(%256 : memref<32xf32, #tpu.memory_space<vmem>>)
    %c0_i32_120 = arith.constant 0 : i32
    %c3_i32_121 = arith.constant 3 : i32
    %c3_i32_122 = arith.constant 3 : i32
    %c0_i32_123 = arith.constant 0 : i32
    %259 = tpu.memref_slice %arg2[%c0_i32_120, %c0_i32_123] : memref<54x32xf32, #tpu.memory_space<any>> -> memref<1x32xf32, #tpu.memory_space<any>>
    %260 = tpu.memref_squeeze %259 : memref<1x32xf32, #tpu.memory_space<any>> -> memref<32xf32, #tpu.memory_space<any>>
    %c0_i32_124 = arith.constant 0 : i32
    %261 = tpu.memref_slice %arg8[%c3_i32_121, %c0_i32_124] : memref<32x32xf32, #tpu.memory_space<vmem>> -> memref<1x32xf32, #tpu.memory_space<vmem>>
    %262 = tpu.memref_squeeze %261 : memref<1x32xf32, #tpu.memory_space<vmem>> -> memref<32xf32, #tpu.memory_space<vmem>>
    %263 = tpu.memref_slice %arg9[%c3_i32_122] : memref<32x!tpu.dma_semaphore, #tpu.memory_space<semaphore_mem>> -> memref<1x!tpu.dma_semaphore, #tpu.memory_space<semaphore_mem>>
    %264 = tpu.memref_squeeze %263 : memref<1x!tpu.dma_semaphore, #tpu.memory_space<semaphore_mem>> -> memref<!tpu.dma_semaphore, #tpu.memory_space<semaphore_mem>>
    tpu.wait_dma2 semaphore(%264 : memref<!tpu.dma_semaphore, #tpu.memory_space<semaphore_mem>>) src(%260 : memref<32xf32, #tpu.memory_space<any>>) dst(%262 : memref<32xf32, #tpu.memory_space<vmem>>)
    %c0_i32_125 = arith.constant 0 : i32
    %c4_i32_126 = arith.constant 4 : i32
    %c4_i32_127 = arith.constant 4 : i32
    %c0_i32_128 = arith.constant 0 : i32
    %265 = tpu.memref_slice %arg2[%c0_i32_125, %c0_i32_128] : memref<54x32xf32, #tpu.memory_space<any>> -> memref<1x32xf32, #tpu.memory_space<any>>
    %266 = tpu.memref_squeeze %265 : memref<1x32xf32, #tpu.memory_space<any>> -> memref<32xf32, #tpu.memory_space<any>>
    %c0_i32_129 = arith.constant 0 : i32
    %267 = tpu.memref_slice %arg8[%c4_i32_126, %c0_i32_129] : memref<32x32xf32, #tpu.memory_space<vmem>> -> memref<1x32xf32, #tpu.memory_space<vmem>>
    %268 = tpu.memref_squeeze %267 : memref<1x32xf32, #tpu.memory_space<vmem>> -> memref<32xf32, #tpu.memory_space<vmem>>
    %269 = tpu.memref_slice %arg9[%c4_i32_127] : memref<32x!tpu.dma_semaphore, #tpu.memory_space<semaphore_mem>> -> memref<1x!tpu.dma_semaphore, #tpu.memory_space<semaphore_mem>>
    %270 = tpu.memref_squeeze %269 : memref<1x!tpu.dma_semaphore, #tpu.memory_space<semaphore_mem>> -> memref<!tpu.dma_semaphore, #tpu.memory_space<semaphore_mem>>
    tpu.wait_dma2 semaphore(%270 : memref<!tpu.dma_semaphore, #tpu.memory_space<semaphore_mem>>) src(%266 : memref<32xf32, #tpu.memory_space<any>>) dst(%268 : memref<32xf32, #tpu.memory_space<vmem>>)
    %c0_i32_130 = arith.constant 0 : i32
    %c5_i32_131 = arith.constant 5 : i32
    %c5_i32_132 = arith.constant 5 : i32
    %c0_i32_133 = arith.constant 0 : i32
    %271 = tpu.memref_slice %arg2[%c0_i32_130, %c0_i32_133] : memref<54x32xf32, #tpu.memory_space<any>> -> memref<1x32xf32, #tpu.memory_space<any>>
    %272 = tpu.memref_squeeze %271 : memref<1x32xf32, #tpu.memory_space<any>> -> memref<32xf32, #tpu.memory_space<any>>
    %c0_i32_134 = arith.constant 0 : i32
    %273 = tpu.memref_slice %arg8[%c5_i32_131, %c0_i32_134] : memref<32x32xf32, #tpu.memory_space<vmem>> -> memref<1x32xf32, #tpu.memory_space<vmem>>
    %274 = tpu.memref_squeeze %273 : memref<1x32xf32, #tpu.memory_space<vmem>> -> memref<32xf32, #tpu.memory_space<vmem>>
    %275 = tpu.memref_slice %arg9[%c5_i32_132] : memref<32x!tpu.dma_semaphore, #tpu.memory_space<semaphore_mem>> -> memref<1x!tpu.dma_semaphore, #tpu.memory_space<semaphore_mem>>
    %276 = tpu.memref_squeeze %275 : memref<1x!tpu.dma_semaphore, #tpu.memory_space<semaphore_mem>> -> memref<!tpu.dma_semaphore, #tpu.memory_space<semaphore_mem>>
    tpu.wait_dma2 semaphore(%276 : memref<!tpu.dma_semaphore, #tpu.memory_space<semaphore_mem>>) src(%272 : memref<32xf32, #tpu.memory_space<any>>) dst(%274 : memref<32xf32, #tpu.memory_space<vmem>>)
    %c0_i32_135 = arith.constant 0 : i32
    %c6_i32_136 = arith.constant 6 : i32
    %c6_i32_137 = arith.constant 6 : i32
    %c0_i32_138 = arith.constant 0 : i32
    %277 = tpu.memref_slice %arg2[%c0_i32_135, %c0_i32_138] : memref<54x32xf32, #tpu.memory_space<any>> -> memref<1x32xf32, #tpu.memory_space<any>>
    %278 = tpu.memref_squeeze %277 : memref<1x32xf32, #tpu.memory_space<any>> -> memref<32xf32, #tpu.memory_space<any>>
    %c0_i32_139 = arith.constant 0 : i32
    %279 = tpu.memref_slice %arg8[%c6_i32_136, %c0_i32_139] : memref<32x32xf32, #tpu.memory_space<vmem>> -> memref<1x32xf32, #tpu.memory_space<vmem>>
    %280 = tpu.memref_squeeze %279 : memref<1x32xf32, #tpu.memory_space<vmem>> -> memref<32xf32, #tpu.memory_space<vmem>>
    %281 = tpu.memref_slice %arg9[%c6_i32_137] : memref<32x!tpu.dma_semaphore, #tpu.memory_space<semaphore_mem>> -> memref<1x!tpu.dma_semaphore, #tpu.memory_space<semaphore_mem>>
    %282 = tpu.memref_squeeze %281 : memref<1x!tpu.dma_semaphore, #tpu.memory_space<semaphore_mem>> -> memref<!tpu.dma_semaphore, #tpu.memory_space<semaphore_mem>>
    tpu.wait_dma2 semaphore(%282 : memref<!tpu.dma_semaphore, #tpu.memory_space<semaphore_mem>>) src(%278 : memref<32xf32, #tpu.memory_space<any>>) dst(%280 : memref<32xf32, #tpu.memory_space<vmem>>)
    %c0_i32_140 = arith.constant 0 : i32
    %c7_i32_141 = arith.constant 7 : i32
    %c7_i32_142 = arith.constant 7 : i32
    %c0_i32_143 = arith.constant 0 : i32
    %283 = tpu.memref_slice %arg2[%c0_i32_140, %c0_i32_143] : memref<54x32xf32, #tpu.memory_space<any>> -> memref<1x32xf32, #tpu.memory_space<any>>
    %284 = tpu.memref_squeeze %283 : memref<1x32xf32, #tpu.memory_space<any>> -> memref<32xf32, #tpu.memory_space<any>>
    %c0_i32_144 = arith.constant 0 : i32
    %285 = tpu.memref_slice %arg8[%c7_i32_141, %c0_i32_144] : memref<32x32xf32, #tpu.memory_space<vmem>> -> memref<1x32xf32, #tpu.memory_space<vmem>>
    %286 = tpu.memref_squeeze %285 : memref<1x32xf32, #tpu.memory_space<vmem>> -> memref<32xf32, #tpu.memory_space<vmem>>
    %287 = tpu.memref_slice %arg9[%c7_i32_142] : memref<32x!tpu.dma_semaphore, #tpu.memory_space<semaphore_mem>> -> memref<1x!tpu.dma_semaphore, #tpu.memory_space<semaphore_mem>>
    %288 = tpu.memref_squeeze %287 : memref<1x!tpu.dma_semaphore, #tpu.memory_space<semaphore_mem>> -> memref<!tpu.dma_semaphore, #tpu.memory_space<semaphore_mem>>
    tpu.wait_dma2 semaphore(%288 : memref<!tpu.dma_semaphore, #tpu.memory_space<semaphore_mem>>) src(%284 : memref<32xf32, #tpu.memory_space<any>>) dst(%286 : memref<32xf32, #tpu.memory_space<vmem>>)
    %c0_i32_145 = arith.constant 0 : i32
    %c8_i32_146 = arith.constant 8 : i32
    %c8_i32_147 = arith.constant 8 : i32
    %c0_i32_148 = arith.constant 0 : i32
    %289 = tpu.memref_slice %arg2[%c0_i32_145, %c0_i32_148] : memref<54x32xf32, #tpu.memory_space<any>> -> memref<1x32xf32, #tpu.memory_space<any>>
    %290 = tpu.memref_squeeze %289 : memref<1x32xf32, #tpu.memory_space<any>> -> memref<32xf32, #tpu.memory_space<any>>
    %c0_i32_149 = arith.constant 0 : i32
    %291 = tpu.memref_slice %arg8[%c8_i32_146, %c0_i32_149] : memref<32x32xf32, #tpu.memory_space<vmem>> -> memref<1x32xf32, #tpu.memory_space<vmem>>
    %292 = tpu.memref_squeeze %291 : memref<1x32xf32, #tpu.memory_space<vmem>> -> memref<32xf32, #tpu.memory_space<vmem>>
    %293 = tpu.memref_slice %arg9[%c8_i32_147] : memref<32x!tpu.dma_semaphore, #tpu.memory_space<semaphore_mem>> -> memref<1x!tpu.dma_semaphore, #tpu.memory_space<semaphore_mem>>
    %294 = tpu.memref_squeeze %293 : memref<1x!tpu.dma_semaphore, #tpu.memory_space<semaphore_mem>> -> memref<!tpu.dma_semaphore, #tpu.memory_space<semaphore_mem>>
    tpu.wait_dma2 semaphore(%294 : memref<!tpu.dma_semaphore, #tpu.memory_space<semaphore_mem>>) src(%290 : memref<32xf32, #tpu.memory_space<any>>) dst(%292 : memref<32xf32, #tpu.memory_space<vmem>>)
    %c0_i32_150 = arith.constant 0 : i32
    %c9_i32_151 = arith.constant 9 : i32
    %c9_i32_152 = arith.constant 9 : i32
    %c0_i32_153 = arith.constant 0 : i32
    %295 = tpu.memref_slice %arg2[%c0_i32_150, %c0_i32_153] : memref<54x32xf32, #tpu.memory_space<any>> -> memref<1x32xf32, #tpu.memory_space<any>>
    %296 = tpu.memref_squeeze %295 : memref<1x32xf32, #tpu.memory_space<any>> -> memref<32xf32, #tpu.memory_space<any>>
    %c0_i32_154 = arith.constant 0 : i32
    %297 = tpu.memref_slice %arg8[%c9_i32_151, %c0_i32_154] : memref<32x32xf32, #tpu.memory_space<vmem>> -> memref<1x32xf32, #tpu.memory_space<vmem>>
    %298 = tpu.memref_squeeze %297 : memref<1x32xf32, #tpu.memory_space<vmem>> -> memref<32xf32, #tpu.memory_space<vmem>>
    %299 = tpu.memref_slice %arg9[%c9_i32_152] : memref<32x!tpu.dma_semaphore, #tpu.memory_space<semaphore_mem>> -> memref<1x!tpu.dma_semaphore, #tpu.memory_space<semaphore_mem>>
    %300 = tpu.memref_squeeze %299 : memref<1x!tpu.dma_semaphore, #tpu.memory_space<semaphore_mem>> -> memref<!tpu.dma_semaphore, #tpu.memory_space<semaphore_mem>>
    tpu.wait_dma2 semaphore(%300 : memref<!tpu.dma_semaphore, #tpu.memory_space<semaphore_mem>>) src(%296 : memref<32xf32, #tpu.memory_space<any>>) dst(%298 : memref<32xf32, #tpu.memory_space<vmem>>)
    %c0_i32_155 = arith.constant 0 : i32
    %c10_i32_156 = arith.constant 10 : i32
    %c10_i32_157 = arith.constant 10 : i32
    %c0_i32_158 = arith.constant 0 : i32
    %301 = tpu.memref_slice %arg2[%c0_i32_155, %c0_i32_158] : memref<54x32xf32, #tpu.memory_space<any>> -> memref<1x32xf32, #tpu.memory_space<any>>
    %302 = tpu.memref_squeeze %301 : memref<1x32xf32, #tpu.memory_space<any>> -> memref<32xf32, #tpu.memory_space<any>>
    %c0_i32_159 = arith.constant 0 : i32
    %303 = tpu.memref_slice %arg8[%c10_i32_156, %c0_i32_159] : memref<32x32xf32, #tpu.memory_space<vmem>> -> memref<1x32xf32, #tpu.memory_space<vmem>>
    %304 = tpu.memref_squeeze %303 : memref<1x32xf32, #tpu.memory_space<vmem>> -> memref<32xf32, #tpu.memory_space<vmem>>
    %305 = tpu.memref_slice %arg9[%c10_i32_157] : memref<32x!tpu.dma_semaphore, #tpu.memory_space<semaphore_mem>> -> memref<1x!tpu.dma_semaphore, #tpu.memory_space<semaphore_mem>>
    %306 = tpu.memref_squeeze %305 : memref<1x!tpu.dma_semaphore, #tpu.memory_space<semaphore_mem>> -> memref<!tpu.dma_semaphore, #tpu.memory_space<semaphore_mem>>
    tpu.wait_dma2 semaphore(%306 : memref<!tpu.dma_semaphore, #tpu.memory_space<semaphore_mem>>) src(%302 : memref<32xf32, #tpu.memory_space<any>>) dst(%304 : memref<32xf32, #tpu.memory_space<vmem>>)
    %c0_i32_160 = arith.constant 0 : i32
    %c11_i32_161 = arith.constant 11 : i32
    %c11_i32_162 = arith.constant 11 : i32
    %c0_i32_163 = arith.constant 0 : i32
    %307 = tpu.memref_slice %arg2[%c0_i32_160, %c0_i32_163] : memref<54x32xf32, #tpu.memory_space<any>> -> memref<1x32xf32, #tpu.memory_space<any>>
    %308 = tpu.memref_squeeze %307 : memref<1x32xf32, #tpu.memory_space<any>> -> memref<32xf32, #tpu.memory_space<any>>
    %c0_i32_164 = arith.constant 0 : i32
    %309 = tpu.memref_slice %arg8[%c11_i32_161, %c0_i32_164] : memref<32x32xf32, #tpu.memory_space<vmem>> -> memref<1x32xf32, #tpu.memory_space<vmem>>
    %310 = tpu.memref_squeeze %309 : memref<1x32xf32, #tpu.memory_space<vmem>> -> memref<32xf32, #tpu.memory_space<vmem>>
    %311 = tpu.memref_slice %arg9[%c11_i32_162] : memref<32x!tpu.dma_semaphore, #tpu.memory_space<semaphore_mem>> -> memref<1x!tpu.dma_semaphore, #tpu.memory_space<semaphore_mem>>
    %312 = tpu.memref_squeeze %311 : memref<1x!tpu.dma_semaphore, #tpu.memory_space<semaphore_mem>> -> memref<!tpu.dma_semaphore, #tpu.memory_space<semaphore_mem>>
    tpu.wait_dma2 semaphore(%312 : memref<!tpu.dma_semaphore, #tpu.memory_space<semaphore_mem>>) src(%308 : memref<32xf32, #tpu.memory_space<any>>) dst(%310 : memref<32xf32, #tpu.memory_space<vmem>>)
    %c0_i32_165 = arith.constant 0 : i32
    %c12_i32_166 = arith.constant 12 : i32
    %c12_i32_167 = arith.constant 12 : i32
    %c0_i32_168 = arith.constant 0 : i32
    %313 = tpu.memref_slice %arg2[%c0_i32_165, %c0_i32_168] : memref<54x32xf32, #tpu.memory_space<any>> -> memref<1x32xf32, #tpu.memory_space<any>>
    %314 = tpu.memref_squeeze %313 : memref<1x32xf32, #tpu.memory_space<any>> -> memref<32xf32, #tpu.memory_space<any>>
    %c0_i32_169 = arith.constant 0 : i32
    %315 = tpu.memref_slice %arg8[%c12_i32_166, %c0_i32_169] : memref<32x32xf32, #tpu.memory_space<vmem>> -> memref<1x32xf32, #tpu.memory_space<vmem>>
    %316 = tpu.memref_squeeze %315 : memref<1x32xf32, #tpu.memory_space<vmem>> -> memref<32xf32, #tpu.memory_space<vmem>>
    %317 = tpu.memref_slice %arg9[%c12_i32_167] : memref<32x!tpu.dma_semaphore, #tpu.memory_space<semaphore_mem>> -> memref<1x!tpu.dma_semaphore, #tpu.memory_space<semaphore_mem>>
    %318 = tpu.memref_squeeze %317 : memref<1x!tpu.dma_semaphore, #tpu.memory_space<semaphore_mem>> -> memref<!tpu.dma_semaphore, #tpu.memory_space<semaphore_mem>>
    tpu.wait_dma2 semaphore(%318 : memref<!tpu.dma_semaphore, #tpu.memory_space<semaphore_mem>>) src(%314 : memref<32xf32, #tpu.memory_space<any>>) dst(%316 : memref<32xf32, #tpu.memory_space<vmem>>)
    %c0_i32_170 = arith.constant 0 : i32
    %c13_i32_171 = arith.constant 13 : i32
    %c13_i32_172 = arith.constant 13 : i32
    %c0_i32_173 = arith.constant 0 : i32
    %319 = tpu.memref_slice %arg2[%c0_i32_170, %c0_i32_173] : memref<54x32xf32, #tpu.memory_space<any>> -> memref<1x32xf32, #tpu.memory_space<any>>
    %320 = tpu.memref_squeeze %319 : memref<1x32xf32, #tpu.memory_space<any>> -> memref<32xf32, #tpu.memory_space<any>>
    %c0_i32_174 = arith.constant 0 : i32
    %321 = tpu.memref_slice %arg8[%c13_i32_171, %c0_i32_174] : memref<32x32xf32, #tpu.memory_space<vmem>> -> memref<1x32xf32, #tpu.memory_space<vmem>>
    %322 = tpu.memref_squeeze %321 : memref<1x32xf32, #tpu.memory_space<vmem>> -> memref<32xf32, #tpu.memory_space<vmem>>
    %323 = tpu.memref_slice %arg9[%c13_i32_172] : memref<32x!tpu.dma_semaphore, #tpu.memory_space<semaphore_mem>> -> memref<1x!tpu.dma_semaphore, #tpu.memory_space<semaphore_mem>>
    %324 = tpu.memref_squeeze %323 : memref<1x!tpu.dma_semaphore, #tpu.memory_space<semaphore_mem>> -> memref<!tpu.dma_semaphore, #tpu.memory_space<semaphore_mem>>
    tpu.wait_dma2 semaphore(%324 : memref<!tpu.dma_semaphore, #tpu.memory_space<semaphore_mem>>) src(%320 : memref<32xf32, #tpu.memory_space<any>>) dst(%322 : memref<32xf32, #tpu.memory_space<vmem>>)
    %c0_i32_175 = arith.constant 0 : i32
    %c14_i32_176 = arith.constant 14 : i32
    %c14_i32_177 = arith.constant 14 : i32
    %c0_i32_178 = arith.constant 0 : i32
    %325 = tpu.memref_slice %arg2[%c0_i32_175, %c0_i32_178] : memref<54x32xf32, #tpu.memory_space<any>> -> memref<1x32xf32, #tpu.memory_space<any>>
    %326 = tpu.memref_squeeze %325 : memref<1x32xf32, #tpu.memory_space<any>> -> memref<32xf32, #tpu.memory_space<any>>
    %c0_i32_179 = arith.constant 0 : i32
    %327 = tpu.memref_slice %arg8[%c14_i32_176, %c0_i32_179] : memref<32x32xf32, #tpu.memory_space<vmem>> -> memref<1x32xf32, #tpu.memory_space<vmem>>
    %328 = tpu.memref_squeeze %327 : memref<1x32xf32, #tpu.memory_space<vmem>> -> memref<32xf32, #tpu.memory_space<vmem>>
    %329 = tpu.memref_slice %arg9[%c14_i32_177] : memref<32x!tpu.dma_semaphore, #tpu.memory_space<semaphore_mem>> -> memref<1x!tpu.dma_semaphore, #tpu.memory_space<semaphore_mem>>
    %330 = tpu.memref_squeeze %329 : memref<1x!tpu.dma_semaphore, #tpu.memory_space<semaphore_mem>> -> memref<!tpu.dma_semaphore, #tpu.memory_space<semaphore_mem>>
    tpu.wait_dma2 semaphore(%330 : memref<!tpu.dma_semaphore, #tpu.memory_space<semaphore_mem>>) src(%326 : memref<32xf32, #tpu.memory_space<any>>) dst(%328 : memref<32xf32, #tpu.memory_space<vmem>>)
    %c0_i32_180 = arith.constant 0 : i32
    %c15_i32_181 = arith.constant 15 : i32
    %c15_i32_182 = arith.constant 15 : i32
    %c0_i32_183 = arith.constant 0 : i32
    %331 = tpu.memref_slice %arg2[%c0_i32_180, %c0_i32_183] : memref<54x32xf32, #tpu.memory_space<any>> -> memref<1x32xf32, #tpu.memory_space<any>>
    %332 = tpu.memref_squeeze %331 : memref<1x32xf32, #tpu.memory_space<any>> -> memref<32xf32, #tpu.memory_space<any>>
    %c0_i32_184 = arith.constant 0 : i32
    %333 = tpu.memref_slice %arg8[%c15_i32_181, %c0_i32_184] : memref<32x32xf32, #tpu.memory_space<vmem>> -> memref<1x32xf32, #tpu.memory_space<vmem>>
    %334 = tpu.memref_squeeze %333 : memref<1x32xf32, #tpu.memory_space<vmem>> -> memref<32xf32, #tpu.memory_space<vmem>>
    %335 = tpu.memref_slice %arg9[%c15_i32_182] : memref<32x!tpu.dma_semaphore, #tpu.memory_space<semaphore_mem>> -> memref<1x!tpu.dma_semaphore, #tpu.memory_space<semaphore_mem>>
    %336 = tpu.memref_squeeze %335 : memref<1x!tpu.dma_semaphore, #tpu.memory_space<semaphore_mem>> -> memref<!tpu.dma_semaphore, #tpu.memory_space<semaphore_mem>>
    tpu.wait_dma2 semaphore(%336 : memref<!tpu.dma_semaphore, #tpu.memory_space<semaphore_mem>>) src(%332 : memref<32xf32, #tpu.memory_space<any>>) dst(%334 : memref<32xf32, #tpu.memory_space<vmem>>)
    %c0_i32_185 = arith.constant 0 : i32
    %c16_i32_186 = arith.constant 16 : i32
    %c16_i32_187 = arith.constant 16 : i32
    %c0_i32_188 = arith.constant 0 : i32
    %337 = tpu.memref_slice %arg2[%c0_i32_185, %c0_i32_188] : memref<54x32xf32, #tpu.memory_space<any>> -> memref<1x32xf32, #tpu.memory_space<any>>
    %338 = tpu.memref_squeeze %337 : memref<1x32xf32, #tpu.memory_space<any>> -> memref<32xf32, #tpu.memory_space<any>>
    %c0_i32_189 = arith.constant 0 : i32
    %339 = tpu.memref_slice %arg8[%c16_i32_186, %c0_i32_189] : memref<32x32xf32, #tpu.memory_space<vmem>> -> memref<1x32xf32, #tpu.memory_space<vmem>>
    %340 = tpu.memref_squeeze %339 : memref<1x32xf32, #tpu.memory_space<vmem>> -> memref<32xf32, #tpu.memory_space<vmem>>
    %341 = tpu.memref_slice %arg9[%c16_i32_187] : memref<32x!tpu.dma_semaphore, #tpu.memory_space<semaphore_mem>> -> memref<1x!tpu.dma_semaphore, #tpu.memory_space<semaphore_mem>>
    %342 = tpu.memref_squeeze %341 : memref<1x!tpu.dma_semaphore, #tpu.memory_space<semaphore_mem>> -> memref<!tpu.dma_semaphore, #tpu.memory_space<semaphore_mem>>
    tpu.wait_dma2 semaphore(%342 : memref<!tpu.dma_semaphore, #tpu.memory_space<semaphore_mem>>) src(%338 : memref<32xf32, #tpu.memory_space<any>>) dst(%340 : memref<32xf32, #tpu.memory_space<vmem>>)
    %c0_i32_190 = arith.constant 0 : i32
    %c17_i32_191 = arith.constant 17 : i32
    %c17_i32_192 = arith.constant 17 : i32
    %c0_i32_193 = arith.constant 0 : i32
    %343 = tpu.memref_slice %arg2[%c0_i32_190, %c0_i32_193] : memref<54x32xf32, #tpu.memory_space<any>> -> memref<1x32xf32, #tpu.memory_space<any>>
    %344 = tpu.memref_squeeze %343 : memref<1x32xf32, #tpu.memory_space<any>> -> memref<32xf32, #tpu.memory_space<any>>
    %c0_i32_194 = arith.constant 0 : i32
    %345 = tpu.memref_slice %arg8[%c17_i32_191, %c0_i32_194] : memref<32x32xf32, #tpu.memory_space<vmem>> -> memref<1x32xf32, #tpu.memory_space<vmem>>
    %346 = tpu.memref_squeeze %345 : memref<1x32xf32, #tpu.memory_space<vmem>> -> memref<32xf32, #tpu.memory_space<vmem>>
    %347 = tpu.memref_slice %arg9[%c17_i32_192] : memref<32x!tpu.dma_semaphore, #tpu.memory_space<semaphore_mem>> -> memref<1x!tpu.dma_semaphore, #tpu.memory_space<semaphore_mem>>
    %348 = tpu.memref_squeeze %347 : memref<1x!tpu.dma_semaphore, #tpu.memory_space<semaphore_mem>> -> memref<!tpu.dma_semaphore, #tpu.memory_space<semaphore_mem>>
    tpu.wait_dma2 semaphore(%348 : memref<!tpu.dma_semaphore, #tpu.memory_space<semaphore_mem>>) src(%344 : memref<32xf32, #tpu.memory_space<any>>) dst(%346 : memref<32xf32, #tpu.memory_space<vmem>>)
    %c0_i32_195 = arith.constant 0 : i32
    %c18_i32_196 = arith.constant 18 : i32
    %c18_i32_197 = arith.constant 18 : i32
    %c0_i32_198 = arith.constant 0 : i32
    %349 = tpu.memref_slice %arg2[%c0_i32_195, %c0_i32_198] : memref<54x32xf32, #tpu.memory_space<any>> -> memref<1x32xf32, #tpu.memory_space<any>>
    %350 = tpu.memref_squeeze %349 : memref<1x32xf32, #tpu.memory_space<any>> -> memref<32xf32, #tpu.memory_space<any>>
    %c0_i32_199 = arith.constant 0 : i32
    %351 = tpu.memref_slice %arg8[%c18_i32_196, %c0_i32_199] : memref<32x32xf32, #tpu.memory_space<vmem>> -> memref<1x32xf32, #tpu.memory_space<vmem>>
    %352 = tpu.memref_squeeze %351 : memref<1x32xf32, #tpu.memory_space<vmem>> -> memref<32xf32, #tpu.memory_space<vmem>>
    %353 = tpu.memref_slice %arg9[%c18_i32_197] : memref<32x!tpu.dma_semaphore, #tpu.memory_space<semaphore_mem>> -> memref<1x!tpu.dma_semaphore, #tpu.memory_space<semaphore_mem>>
    %354 = tpu.memref_squeeze %353 : memref<1x!tpu.dma_semaphore, #tpu.memory_space<semaphore_mem>> -> memref<!tpu.dma_semaphore, #tpu.memory_space<semaphore_mem>>
    tpu.wait_dma2 semaphore(%354 : memref<!tpu.dma_semaphore, #tpu.memory_space<semaphore_mem>>) src(%350 : memref<32xf32, #tpu.memory_space<any>>) dst(%352 : memref<32xf32, #tpu.memory_space<vmem>>)
    %c0_i32_200 = arith.constant 0 : i32
    %c19_i32_201 = arith.constant 19 : i32
    %c19_i32_202 = arith.constant 19 : i32
    %c0_i32_203 = arith.constant 0 : i32
    %355 = tpu.memref_slice %arg2[%c0_i32_200, %c0_i32_203] : memref<54x32xf32, #tpu.memory_space<any>> -> memref<1x32xf32, #tpu.memory_space<any>>
    %356 = tpu.memref_squeeze %355 : memref<1x32xf32, #tpu.memory_space<any>> -> memref<32xf32, #tpu.memory_space<any>>
    %c0_i32_204 = arith.constant 0 : i32
    %357 = tpu.memref_slice %arg8[%c19_i32_201, %c0_i32_204] : memref<32x32xf32, #tpu.memory_space<vmem>> -> memref<1x32xf32, #tpu.memory_space<vmem>>
    %358 = tpu.memref_squeeze %357 : memref<1x32xf32, #tpu.memory_space<vmem>> -> memref<32xf32, #tpu.memory_space<vmem>>
    %359 = tpu.memref_slice %arg9[%c19_i32_202] : memref<32x!tpu.dma_semaphore, #tpu.memory_space<semaphore_mem>> -> memref<1x!tpu.dma_semaphore, #tpu.memory_space<semaphore_mem>>
    %360 = tpu.memref_squeeze %359 : memref<1x!tpu.dma_semaphore, #tpu.memory_space<semaphore_mem>> -> memref<!tpu.dma_semaphore, #tpu.memory_space<semaphore_mem>>
    tpu.wait_dma2 semaphore(%360 : memref<!tpu.dma_semaphore, #tpu.memory_space<semaphore_mem>>) src(%356 : memref<32xf32, #tpu.memory_space<any>>) dst(%358 : memref<32xf32, #tpu.memory_space<vmem>>)
    %c0_i32_205 = arith.constant 0 : i32
    %c20_i32_206 = arith.constant 20 : i32
    %c20_i32_207 = arith.constant 20 : i32
    %c0_i32_208 = arith.constant 0 : i32
    %361 = tpu.memref_slice %arg2[%c0_i32_205, %c0_i32_208] : memref<54x32xf32, #tpu.memory_space<any>> -> memref<1x32xf32, #tpu.memory_space<any>>
    %362 = tpu.memref_squeeze %361 : memref<1x32xf32, #tpu.memory_space<any>> -> memref<32xf32, #tpu.memory_space<any>>
    %c0_i32_209 = arith.constant 0 : i32
    %363 = tpu.memref_slice %arg8[%c20_i32_206, %c0_i32_209] : memref<32x32xf32, #tpu.memory_space<vmem>> -> memref<1x32xf32, #tpu.memory_space<vmem>>
    %364 = tpu.memref_squeeze %363 : memref<1x32xf32, #tpu.memory_space<vmem>> -> memref<32xf32, #tpu.memory_space<vmem>>
    %365 = tpu.memref_slice %arg9[%c20_i32_207] : memref<32x!tpu.dma_semaphore, #tpu.memory_space<semaphore_mem>> -> memref<1x!tpu.dma_semaphore, #tpu.memory_space<semaphore_mem>>
    %366 = tpu.memref_squeeze %365 : memref<1x!tpu.dma_semaphore, #tpu.memory_space<semaphore_mem>> -> memref<!tpu.dma_semaphore, #tpu.memory_space<semaphore_mem>>
    tpu.wait_dma2 semaphore(%366 : memref<!tpu.dma_semaphore, #tpu.memory_space<semaphore_mem>>) src(%362 : memref<32xf32, #tpu.memory_space<any>>) dst(%364 : memref<32xf32, #tpu.memory_space<vmem>>)
    %c0_i32_210 = arith.constant 0 : i32
    %c21_i32_211 = arith.constant 21 : i32
    %c21_i32_212 = arith.constant 21 : i32
    %c0_i32_213 = arith.constant 0 : i32
    %367 = tpu.memref_slice %arg2[%c0_i32_210, %c0_i32_213] : memref<54x32xf32, #tpu.memory_space<any>> -> memref<1x32xf32, #tpu.memory_space<any>>
    %368 = tpu.memref_squeeze %367 : memref<1x32xf32, #tpu.memory_space<any>> -> memref<32xf32, #tpu.memory_space<any>>
    %c0_i32_214 = arith.constant 0 : i32
    %369 = tpu.memref_slice %arg8[%c21_i32_211, %c0_i32_214] : memref<32x32xf32, #tpu.memory_space<vmem>> -> memref<1x32xf32, #tpu.memory_space<vmem>>
    %370 = tpu.memref_squeeze %369 : memref<1x32xf32, #tpu.memory_space<vmem>> -> memref<32xf32, #tpu.memory_space<vmem>>
    %371 = tpu.memref_slice %arg9[%c21_i32_212] : memref<32x!tpu.dma_semaphore, #tpu.memory_space<semaphore_mem>> -> memref<1x!tpu.dma_semaphore, #tpu.memory_space<semaphore_mem>>
    %372 = tpu.memref_squeeze %371 : memref<1x!tpu.dma_semaphore, #tpu.memory_space<semaphore_mem>> -> memref<!tpu.dma_semaphore, #tpu.memory_space<semaphore_mem>>
    tpu.wait_dma2 semaphore(%372 : memref<!tpu.dma_semaphore, #tpu.memory_space<semaphore_mem>>) src(%368 : memref<32xf32, #tpu.memory_space<any>>) dst(%370 : memref<32xf32, #tpu.memory_space<vmem>>)
    %c0_i32_215 = arith.constant 0 : i32
    %c22_i32_216 = arith.constant 22 : i32
    %c22_i32_217 = arith.constant 22 : i32
    %c0_i32_218 = arith.constant 0 : i32
    %373 = tpu.memref_slice %arg2[%c0_i32_215, %c0_i32_218] : memref<54x32xf32, #tpu.memory_space<any>> -> memref<1x32xf32, #tpu.memory_space<any>>
    %374 = tpu.memref_squeeze %373 : memref<1x32xf32, #tpu.memory_space<any>> -> memref<32xf32, #tpu.memory_space<any>>
    %c0_i32_219 = arith.constant 0 : i32
    %375 = tpu.memref_slice %arg8[%c22_i32_216, %c0_i32_219] : memref<32x32xf32, #tpu.memory_space<vmem>> -> memref<1x32xf32, #tpu.memory_space<vmem>>
    %376 = tpu.memref_squeeze %375 : memref<1x32xf32, #tpu.memory_space<vmem>> -> memref<32xf32, #tpu.memory_space<vmem>>
    %377 = tpu.memref_slice %arg9[%c22_i32_217] : memref<32x!tpu.dma_semaphore, #tpu.memory_space<semaphore_mem>> -> memref<1x!tpu.dma_semaphore, #tpu.memory_space<semaphore_mem>>
    %378 = tpu.memref_squeeze %377 : memref<1x!tpu.dma_semaphore, #tpu.memory_space<semaphore_mem>> -> memref<!tpu.dma_semaphore, #tpu.memory_space<semaphore_mem>>
    tpu.wait_dma2 semaphore(%378 : memref<!tpu.dma_semaphore, #tpu.memory_space<semaphore_mem>>) src(%374 : memref<32xf32, #tpu.memory_space<any>>) dst(%376 : memref<32xf32, #tpu.memory_space<vmem>>)
    %c0_i32_220 = arith.constant 0 : i32
    %c23_i32_221 = arith.constant 23 : i32
    %c23_i32_222 = arith.constant 23 : i32
    %c0_i32_223 = arith.constant 0 : i32
    %379 = tpu.memref_slice %arg2[%c0_i32_220, %c0_i32_223] : memref<54x32xf32, #tpu.memory_space<any>> -> memref<1x32xf32, #tpu.memory_space<any>>
    %380 = tpu.memref_squeeze %379 : memref<1x32xf32, #tpu.memory_space<any>> -> memref<32xf32, #tpu.memory_space<any>>
    %c0_i32_224 = arith.constant 0 : i32
    %381 = tpu.memref_slice %arg8[%c23_i32_221, %c0_i32_224] : memref<32x32xf32, #tpu.memory_space<vmem>> -> memref<1x32xf32, #tpu.memory_space<vmem>>
    %382 = tpu.memref_squeeze %381 : memref<1x32xf32, #tpu.memory_space<vmem>> -> memref<32xf32, #tpu.memory_space<vmem>>
    %383 = tpu.memref_slice %arg9[%c23_i32_222] : memref<32x!tpu.dma_semaphore, #tpu.memory_space<semaphore_mem>> -> memref<1x!tpu.dma_semaphore, #tpu.memory_space<semaphore_mem>>
    %384 = tpu.memref_squeeze %383 : memref<1x!tpu.dma_semaphore, #tpu.memory_space<semaphore_mem>> -> memref<!tpu.dma_semaphore, #tpu.memory_space<semaphore_mem>>
    tpu.wait_dma2 semaphore(%384 : memref<!tpu.dma_semaphore, #tpu.memory_space<semaphore_mem>>) src(%380 : memref<32xf32, #tpu.memory_space<any>>) dst(%382 : memref<32xf32, #tpu.memory_space<vmem>>)
    %c0_i32_225 = arith.constant 0 : i32
    %c24_i32_226 = arith.constant 24 : i32
    %c24_i32_227 = arith.constant 24 : i32
    %c0_i32_228 = arith.constant 0 : i32
    %385 = tpu.memref_slice %arg2[%c0_i32_225, %c0_i32_228] : memref<54x32xf32, #tpu.memory_space<any>> -> memref<1x32xf32, #tpu.memory_space<any>>
    %386 = tpu.memref_squeeze %385 : memref<1x32xf32, #tpu.memory_space<any>> -> memref<32xf32, #tpu.memory_space<any>>
    %c0_i32_229 = arith.constant 0 : i32
    %387 = tpu.memref_slice %arg8[%c24_i32_226, %c0_i32_229] : memref<32x32xf32, #tpu.memory_space<vmem>> -> memref<1x32xf32, #tpu.memory_space<vmem>>
    %388 = tpu.memref_squeeze %387 : memref<1x32xf32, #tpu.memory_space<vmem>> -> memref<32xf32, #tpu.memory_space<vmem>>
    %389 = tpu.memref_slice %arg9[%c24_i32_227] : memref<32x!tpu.dma_semaphore, #tpu.memory_space<semaphore_mem>> -> memref<1x!tpu.dma_semaphore, #tpu.memory_space<semaphore_mem>>
    %390 = tpu.memref_squeeze %389 : memref<1x!tpu.dma_semaphore, #tpu.memory_space<semaphore_mem>> -> memref<!tpu.dma_semaphore, #tpu.memory_space<semaphore_mem>>
    tpu.wait_dma2 semaphore(%390 : memref<!tpu.dma_semaphore, #tpu.memory_space<semaphore_mem>>) src(%386 : memref<32xf32, #tpu.memory_space<any>>) dst(%388 : memref<32xf32, #tpu.memory_space<vmem>>)
    %c0_i32_230 = arith.constant 0 : i32
    %c25_i32_231 = arith.constant 25 : i32
    %c25_i32_232 = arith.constant 25 : i32
    %c0_i32_233 = arith.constant 0 : i32
    %391 = tpu.memref_slice %arg2[%c0_i32_230, %c0_i32_233] : memref<54x32xf32, #tpu.memory_space<any>> -> memref<1x32xf32, #tpu.memory_space<any>>
    %392 = tpu.memref_squeeze %391 : memref<1x32xf32, #tpu.memory_space<any>> -> memref<32xf32, #tpu.memory_space<any>>
    %c0_i32_234 = arith.constant 0 : i32
    %393 = tpu.memref_slice %arg8[%c25_i32_231, %c0_i32_234] : memref<32x32xf32, #tpu.memory_space<vmem>> -> memref<1x32xf32, #tpu.memory_space<vmem>>
    %394 = tpu.memref_squeeze %393 : memref<1x32xf32, #tpu.memory_space<vmem>> -> memref<32xf32, #tpu.memory_space<vmem>>
    %395 = tpu.memref_slice %arg9[%c25_i32_232] : memref<32x!tpu.dma_semaphore, #tpu.memory_space<semaphore_mem>> -> memref<1x!tpu.dma_semaphore, #tpu.memory_space<semaphore_mem>>
    %396 = tpu.memref_squeeze %395 : memref<1x!tpu.dma_semaphore, #tpu.memory_space<semaphore_mem>> -> memref<!tpu.dma_semaphore, #tpu.memory_space<semaphore_mem>>
    tpu.wait_dma2 semaphore(%396 : memref<!tpu.dma_semaphore, #tpu.memory_space<semaphore_mem>>) src(%392 : memref<32xf32, #tpu.memory_space<any>>) dst(%394 : memref<32xf32, #tpu.memory_space<vmem>>)
    %c0_i32_235 = arith.constant 0 : i32
    %c26_i32_236 = arith.constant 26 : i32
    %c26_i32_237 = arith.constant 26 : i32
    %c0_i32_238 = arith.constant 0 : i32
    %397 = tpu.memref_slice %arg2[%c0_i32_235, %c0_i32_238] : memref<54x32xf32, #tpu.memory_space<any>> -> memref<1x32xf32, #tpu.memory_space<any>>
    %398 = tpu.memref_squeeze %397 : memref<1x32xf32, #tpu.memory_space<any>> -> memref<32xf32, #tpu.memory_space<any>>
    %c0_i32_239 = arith.constant 0 : i32
    %399 = tpu.memref_slice %arg8[%c26_i32_236, %c0_i32_239] : memref<32x32xf32, #tpu.memory_space<vmem>> -> memref<1x32xf32, #tpu.memory_space<vmem>>
    %400 = tpu.memref_squeeze %399 : memref<1x32xf32, #tpu.memory_space<vmem>> -> memref<32xf32, #tpu.memory_space<vmem>>
    %401 = tpu.memref_slice %arg9[%c26_i32_237] : memref<32x!tpu.dma_semaphore, #tpu.memory_space<semaphore_mem>> -> memref<1x!tpu.dma_semaphore, #tpu.memory_space<semaphore_mem>>
    %402 = tpu.memref_squeeze %401 : memref<1x!tpu.dma_semaphore, #tpu.memory_space<semaphore_mem>> -> memref<!tpu.dma_semaphore, #tpu.memory_space<semaphore_mem>>
    tpu.wait_dma2 semaphore(%402 : memref<!tpu.dma_semaphore, #tpu.memory_space<semaphore_mem>>) src(%398 : memref<32xf32, #tpu.memory_space<any>>) dst(%400 : memref<32xf32, #tpu.memory_space<vmem>>)
    %c0_i32_240 = arith.constant 0 : i32
    %c27_i32_241 = arith.constant 27 : i32
    %c27_i32_242 = arith.constant 27 : i32
    %c0_i32_243 = arith.constant 0 : i32
    %403 = tpu.memref_slice %arg2[%c0_i32_240, %c0_i32_243] : memref<54x32xf32, #tpu.memory_space<any>> -> memref<1x32xf32, #tpu.memory_space<any>>
    %404 = tpu.memref_squeeze %403 : memref<1x32xf32, #tpu.memory_space<any>> -> memref<32xf32, #tpu.memory_space<any>>
    %c0_i32_244 = arith.constant 0 : i32
    %405 = tpu.memref_slice %arg8[%c27_i32_241, %c0_i32_244] : memref<32x32xf32, #tpu.memory_space<vmem>> -> memref<1x32xf32, #tpu.memory_space<vmem>>
    %406 = tpu.memref_squeeze %405 : memref<1x32xf32, #tpu.memory_space<vmem>> -> memref<32xf32, #tpu.memory_space<vmem>>
    %407 = tpu.memref_slice %arg9[%c27_i32_242] : memref<32x!tpu.dma_semaphore, #tpu.memory_space<semaphore_mem>> -> memref<1x!tpu.dma_semaphore, #tpu.memory_space<semaphore_mem>>
    %408 = tpu.memref_squeeze %407 : memref<1x!tpu.dma_semaphore, #tpu.memory_space<semaphore_mem>> -> memref<!tpu.dma_semaphore, #tpu.memory_space<semaphore_mem>>
    tpu.wait_dma2 semaphore(%408 : memref<!tpu.dma_semaphore, #tpu.memory_space<semaphore_mem>>) src(%404 : memref<32xf32, #tpu.memory_space<any>>) dst(%406 : memref<32xf32, #tpu.memory_space<vmem>>)
    %c0_i32_245 = arith.constant 0 : i32
    %c28_i32_246 = arith.constant 28 : i32
    %c28_i32_247 = arith.constant 28 : i32
    %c0_i32_248 = arith.constant 0 : i32
    %409 = tpu.memref_slice %arg2[%c0_i32_245, %c0_i32_248] : memref<54x32xf32, #tpu.memory_space<any>> -> memref<1x32xf32, #tpu.memory_space<any>>
    %410 = tpu.memref_squeeze %409 : memref<1x32xf32, #tpu.memory_space<any>> -> memref<32xf32, #tpu.memory_space<any>>
    %c0_i32_249 = arith.constant 0 : i32
    %411 = tpu.memref_slice %arg8[%c28_i32_246, %c0_i32_249] : memref<32x32xf32, #tpu.memory_space<vmem>> -> memref<1x32xf32, #tpu.memory_space<vmem>>
    %412 = tpu.memref_squeeze %411 : memref<1x32xf32, #tpu.memory_space<vmem>> -> memref<32xf32, #tpu.memory_space<vmem>>
    %413 = tpu.memref_slice %arg9[%c28_i32_247] : memref<32x!tpu.dma_semaphore, #tpu.memory_space<semaphore_mem>> -> memref<1x!tpu.dma_semaphore, #tpu.memory_space<semaphore_mem>>
    %414 = tpu.memref_squeeze %413 : memref<1x!tpu.dma_semaphore, #tpu.memory_space<semaphore_mem>> -> memref<!tpu.dma_semaphore, #tpu.memory_space<semaphore_mem>>
    tpu.wait_dma2 semaphore(%414 : memref<!tpu.dma_semaphore, #tpu.memory_space<semaphore_mem>>) src(%410 : memref<32xf32, #tpu.memory_space<any>>) dst(%412 : memref<32xf32, #tpu.memory_space<vmem>>)
    %c0_i32_250 = arith.constant 0 : i32
    %c29_i32_251 = arith.constant 29 : i32
    %c29_i32_252 = arith.constant 29 : i32
    %c0_i32_253 = arith.constant 0 : i32
    %415 = tpu.memref_slice %arg2[%c0_i32_250, %c0_i32_253] : memref<54x32xf32, #tpu.memory_space<any>> -> memref<1x32xf32, #tpu.memory_space<any>>
    %416 = tpu.memref_squeeze %415 : memref<1x32xf32, #tpu.memory_space<any>> -> memref<32xf32, #tpu.memory_space<any>>
    %c0_i32_254 = arith.constant 0 : i32
    %417 = tpu.memref_slice %arg8[%c29_i32_251, %c0_i32_254] : memref<32x32xf32, #tpu.memory_space<vmem>> -> memref<1x32xf32, #tpu.memory_space<vmem>>
    %418 = tpu.memref_squeeze %417 : memref<1x32xf32, #tpu.memory_space<vmem>> -> memref<32xf32, #tpu.memory_space<vmem>>
    %419 = tpu.memref_slice %arg9[%c29_i32_252] : memref<32x!tpu.dma_semaphore, #tpu.memory_space<semaphore_mem>> -> memref<1x!tpu.dma_semaphore, #tpu.memory_space<semaphore_mem>>
    %420 = tpu.memref_squeeze %419 : memref<1x!tpu.dma_semaphore, #tpu.memory_space<semaphore_mem>> -> memref<!tpu.dma_semaphore, #tpu.memory_space<semaphore_mem>>
    tpu.wait_dma2 semaphore(%420 : memref<!tpu.dma_semaphore, #tpu.memory_space<semaphore_mem>>) src(%416 : memref<32xf32, #tpu.memory_space<any>>) dst(%418 : memref<32xf32, #tpu.memory_space<vmem>>)
    %c0_i32_255 = arith.constant 0 : i32
    %c30_i32_256 = arith.constant 30 : i32
    %c30_i32_257 = arith.constant 30 : i32
    %c0_i32_258 = arith.constant 0 : i32
    %421 = tpu.memref_slice %arg2[%c0_i32_255, %c0_i32_258] : memref<54x32xf32, #tpu.memory_space<any>> -> memref<1x32xf32, #tpu.memory_space<any>>
    %422 = tpu.memref_squeeze %421 : memref<1x32xf32, #tpu.memory_space<any>> -> memref<32xf32, #tpu.memory_space<any>>
    %c0_i32_259 = arith.constant 0 : i32
    %423 = tpu.memref_slice %arg8[%c30_i32_256, %c0_i32_259] : memref<32x32xf32, #tpu.memory_space<vmem>> -> memref<1x32xf32, #tpu.memory_space<vmem>>
    %424 = tpu.memref_squeeze %423 : memref<1x32xf32, #tpu.memory_space<vmem>> -> memref<32xf32, #tpu.memory_space<vmem>>
    %425 = tpu.memref_slice %arg9[%c30_i32_257] : memref<32x!tpu.dma_semaphore, #tpu.memory_space<semaphore_mem>> -> memref<1x!tpu.dma_semaphore, #tpu.memory_space<semaphore_mem>>
    %426 = tpu.memref_squeeze %425 : memref<1x!tpu.dma_semaphore, #tpu.memory_space<semaphore_mem>> -> memref<!tpu.dma_semaphore, #tpu.memory_space<semaphore_mem>>
    tpu.wait_dma2 semaphore(%426 : memref<!tpu.dma_semaphore, #tpu.memory_space<semaphore_mem>>) src(%422 : memref<32xf32, #tpu.memory_space<any>>) dst(%424 : memref<32xf32, #tpu.memory_space<vmem>>)
    %c0_i32_260 = arith.constant 0 : i32
    %c31_i32_261 = arith.constant 31 : i32
    %c31_i32_262 = arith.constant 31 : i32
    %c0_i32_263 = arith.constant 0 : i32
    %427 = tpu.memref_slice %arg2[%c0_i32_260, %c0_i32_263] : memref<54x32xf32, #tpu.memory_space<any>> -> memref<1x32xf32, #tpu.memory_space<any>>
    %428 = tpu.memref_squeeze %427 : memref<1x32xf32, #tpu.memory_space<any>> -> memref<32xf32, #tpu.memory_space<any>>
    %c0_i32_264 = arith.constant 0 : i32
    %429 = tpu.memref_slice %arg8[%c31_i32_261, %c0_i32_264] : memref<32x32xf32, #tpu.memory_space<vmem>> -> memref<1x32xf32, #tpu.memory_space<vmem>>
    %430 = tpu.memref_squeeze %429 : memref<1x32xf32, #tpu.memory_space<vmem>> -> memref<32xf32, #tpu.memory_space<vmem>>
    %431 = tpu.memref_slice %arg9[%c31_i32_262] : memref<32x!tpu.dma_semaphore, #tpu.memory_space<semaphore_mem>> -> memref<1x!tpu.dma_semaphore, #tpu.memory_space<semaphore_mem>>
    %432 = tpu.memref_squeeze %431 : memref<1x!tpu.dma_semaphore, #tpu.memory_space<semaphore_mem>> -> memref<!tpu.dma_semaphore, #tpu.memory_space<semaphore_mem>>
    tpu.wait_dma2 semaphore(%432 : memref<!tpu.dma_semaphore, #tpu.memory_space<semaphore_mem>>) src(%428 : memref<32xf32, #tpu.memory_space<any>>) dst(%430 : memref<32xf32, #tpu.memory_space<vmem>>)
    %c0_265 = arith.constant 0 : index
    %c0_266 = arith.constant 0 : index
    %433 = vector.load %arg8[%c0_265, %c0_266] : memref<32x32xf32, #tpu.memory_space<vmem>>, vector<32x32xf32>
    %434 = arith.addf %433, %240 : vector<32x32xf32>
    %c0_267 = arith.constant 0 : index
    %c0_268 = arith.constant 0 : index
    %435 = vector.load %arg7[%c0_267, %c0_268] : memref<32x32xf32, #tpu.memory_space<vmem>>, vector<32x32xf32>
    tpu.vector_store %arg7[%c0_267, %c0_268], %434 {strides = array<i32>} : memref<32x32xf32, #tpu.memory_space<vmem>>, vector<32x32xf32>,
    return
  }
  func.func @transform_1(%arg0: i32, %arg1: memref<32xi32, #tpu.memory_space<smem>>) -> (i32, i32) {
    %c0_i32 = arith.constant 0 : i32
    %c0_i32_0 = arith.constant 0 : i32
    %c0_i32_1 = arith.constant 0 : i32
    return %c0_i32, %c0_i32_0 : i32, i32
  }
  func.func @transform_2(%arg0: i32, %arg1: memref<32xi32, #tpu.memory_space<smem>>) -> (i32, i32) {
    %c0_i32 = arith.constant 0 : i32
    %c0_i32_0 = arith.constant 0 : i32
    %c0_i32_1 = arith.constant 0 : i32
    return %c0_i32, %c0_i32_0 : i32, i32
  }
  func.func @transform_3(%arg0: i32, %arg1: memref<32xi32, #tpu.memory_space<smem>>) -> (i32, i32) {
    %c0_i32 = arith.constant 0 : i32
    %c0_i32_0 = arith.constant 0 : i32
    %c0_i32_1 = arith.constant 0 : i32
    return %c0_i32, %c0_i32_0 : i32, i32
  }
  func.func @transform_4(%arg0: i32, %arg1: memref<32xi32, #tpu.memory_space<smem>>) -> (i32, i32) {
    %c0_i32 = arith.constant 0 : i32
    %c0_i32_0 = arith.constant 0 : i32
    %c0_i32_1 = arith.constant 0 : i32
    return %c0_i32, %c0_i32_0 : i32, i32
  }
  func.func @transform_5(%arg0: i32, %arg1: memref<32xi32, #tpu.memory_space<smem>>) -> (i32, i32) {
    %c0_i32 = arith.constant 0 : i32
    %c0_i32_0 = arith.constant 0 : i32
    %c0_i32_1 = arith.constant 0 : i32
    return %c0_i32, %c0_i32_0 : i32, i32
  }
}

</mosaic_0001>

<llo_original>
// kernel: embedder_encode.1
$region0: #{embedder_encode.1}
  #allocation0 [shape = 'u32[]', space=smem, size = 0x4, offset = 0x4, fixed_abs, tag = 'smem constant byte address 0x4 - core index']
  #allocation1 [shape = 'u32[144,128]{1,0:T(1,128)}', space=vmem, size = 0x12000, scoped, tag = 'internal scratch']
  #allocation2 [shape = 'f32[32,32]{1,0:T(8,128)}', space=vmem, size = 0x4000, scoped, tag = 'scratch operand']
  #allocation3 [shape = 's32[32]{0}', space=sflag, size = 0x80, scoped, tag = 'scratch operand']
  #allocation4 [shape = 's32[1]{0}', space=sflag, size = 0x4, scoped, tag = 'scoped memory for embedder_encode.1']
  #allocation5 [shape = 'u8[512]{0}', space=smem, size = 0x200, scoped, tag = 'prefetched SMEM operand 0']
  #allocation8 [shape = 's32[]', space=sflag, size = 0x4, offset = 0, fixed_abs, tag = 'sflag constant byte address 0x0 - dummy sync flag']
  #allocation9 [shape = 's32[]', space=sflag, size = 0x4, offset = 0, fixed_abs, tag = 'sflag constant byte address 0x0 - dummy sync flag']
  #allocation10 [shape = 's32[]', space=sflag, size = 0x4, offset = 0, fixed_abs, tag = 'sflag constant byte address 0x0 - dummy sync flag']
  #allocation11 [shape = 's32[]', space=sflag, size = 0x4, offset = 0, fixed_abs, tag = 'sflag constant byte address 0x0 - dummy sync flag']
  #allocation12 [shape = 's32[]', space=sflag, size = 0x4, offset = 0, fixed_abs, tag = 'sflag constant byte address 0x0 - dummy sync flag']
  #allocation13 [shape = 's32[]', space=sflag, size = 0x4, offset = 0, fixed_abs, tag = 'sflag constant byte address 0x0 - dummy sync flag']
  #allocation14 [shape = 's32[]', space=sflag, size = 0x4, offset = 0, fixed_abs, tag = 'sflag constant byte address 0x0 - dummy sync flag']
  #allocation15 [shape = 's32[]', space=sflag, size = 0x4, offset = 0, fixed_abs, tag = 'sflag constant byte address 0x0 - dummy sync flag']
  #allocation16 [shape = 's32[]', space=sflag, size = 0x4, offset = 0, fixed_abs, tag = 'sflag constant byte address 0x0 - dummy sync flag']
  #allocation17 [shape = 's32[]', space=sflag, size = 0x4, offset = 0, fixed_abs, tag = 'sflag constant byte address 0x0 - dummy sync flag']
  #allocation18 [shape = 's32[]', space=sflag, size = 0x4, offset = 0, fixed_abs, tag = 'sflag constant byte address 0x0 - dummy sync flag']
  #allocation19 [shape = 's32[]', space=sflag, size = 0x4, offset = 0, fixed_abs, tag = 'sflag constant byte address 0x0 - dummy sync flag']
  #allocation20 [shape = 's32[]', space=sflag, size = 0x4, offset = 0, fixed_abs, tag = 'sflag constant byte address 0x0 - dummy sync flag']
  #allocation21 [shape = 's32[]', space=sflag, size = 0x4, offset = 0, fixed_abs, tag = 'sflag constant byte address 0x0 - dummy sync flag']
  #allocation22 [shape = 's32[]', space=sflag, size = 0x4, offset = 0, fixed_abs, tag = 'sflag constant byte address 0x0 - dummy sync flag']
  #allocation23 [shape = 's32[]', space=sflag, size = 0x4, offset = 0, fixed_abs, tag = 'sflag constant byte address 0x0 - dummy sync flag']
  #allocation24 [shape = 's32[]', space=sflag, size = 0x4, offset = 0, fixed_abs, tag = 'sflag constant byte address 0x0 - dummy sync flag']
  #allocation25 [shape = 's32[]', space=sflag, size = 0x4, offset = 0, fixed_abs, tag = 'sflag constant byte address 0x0 - dummy sync flag']
  #allocation26 [shape = 's32[]', space=sflag, size = 0x4, offset = 0, fixed_abs, tag = 'sflag constant byte address 0x0 - dummy sync flag']
  #allocation27 [shape = 's32[]', space=sflag, size = 0x4, offset = 0, fixed_abs, tag = 'sflag constant byte address 0x0 - dummy sync flag']
  #allocation28 [shape = 's32[]', space=sflag, size = 0x4, offset = 0, fixed_abs, tag = 'sflag constant byte address 0x0 - dummy sync flag']
  #allocation29 [shape = 's32[]', space=sflag, size = 0x4, offset = 0, fixed_abs, tag = 'sflag constant byte address 0x0 - dummy sync flag']
  #allocation30 [shape = 's32[]', space=sflag, size = 0x4, offset = 0, fixed_abs, tag = 'sflag constant byte address 0x0 - dummy sync flag']
  #allocation31 [shape = 's32[]', space=sflag, size = 0x4, offset = 0, fixed_abs, tag = 'sflag constant byte address 0x0 - dummy sync flag']
  #allocation32 [shape = 's32[]', space=sflag, size = 0x4, offset = 0, fixed_abs, tag = 'sflag constant byte address 0x0 - dummy sync flag']
  #allocation33 [shape = 's32[]', space=sflag, size = 0x4, offset = 0, fixed_abs, tag = 'sflag constant byte address 0x0 - dummy sync flag']
  #allocation34 [shape = 's32[]', space=sflag, size = 0x4, offset = 0, fixed_abs, tag = 'sflag constant byte address 0x0 - dummy sync flag']
  #allocation35 [shape = 's32[]', space=sflag, size = 0x4, offset = 0, fixed_abs, tag = 'sflag constant byte address 0x0 - dummy sync flag']
  #allocation36 [shape = 's32[]', space=sflag, size = 0x4, offset = 0, fixed_abs, tag = 'sflag constant byte address 0x0 - dummy sync flag']
  #allocation37 [shape = 's32[]', space=sflag, size = 0x4, offset = 0, fixed_abs, tag = 'sflag constant byte address 0x0 - dummy sync flag']
  #allocation38 [shape = 's32[]', space=sflag, size = 0x4, offset = 0, fixed_abs, tag = 'sflag constant byte address 0x0 - dummy sync flag']
  #allocation39 [shape = 's32[]', space=sflag, size = 0x4, offset = 0, fixed_abs, tag = 'sflag constant byte address 0x0 - dummy sync flag']
  %s0 = inlined_call_operand.vmem [shape: s32[32], index: 0, kind: input, shape index: {}]
  %s1 = inlined_call_operand.vmem [shape: f32[54,32], index: 1, kind: input, shape index: {}]
  %s2 = inlined_call_operand.vmem [shape: s32[1,32], index: 2, kind: input, shape index: {}]
  %s3 = inlined_call_operand.vmem [shape: s32[1,32], index: 3, kind: input, shape index: {}]
  %s4 = inlined_call_operand.vmem [shape: f32[6,32], index: 4, kind: input, shape index: {}]
  %s5 = inlined_call_operand.vmem [shape: f32[33,32], index: 5, kind: input, shape index: {}]
  %s6 = inlined_call_operand.hbm [shape: f32[32,32], index: 6, kind: output, shape index: {}]
  %s7 = sld [smem:[#allocation0]]
  $region986: #{embedder_encode.1} parent=0
    _
  %s9 = ssub.s32 1, %s7
  %s10 = scalar_select 0, %s9, %s7
  %s11 = sshll.u32 %s0, 4
  %s12 = int_to_ptr.vmem [resolvable:$true] %s11
  %14 = dma.vmem_to_smem %s12, 16, [#allocation5], [#allocation4]
  %15 = dma.done [#allocation4], 16
  %16 = sfence
  $region1: #{embedder_encode.1} parent=0
    #allocation6 [shape = 'u8[16384]{0}', space=vmem, size = 0x4000, scoped, tag = 'output window, operand 0, single buffered']
    #allocation7 [shape = 's32[1]{0}', space=sflag, size = 0x4, scoped, tag = 'scoped memory for embedder_encode.1']
    %17 = vsyncpa [#allocation7], 0
    // Predicated region
    $region2: #{embedder_encode.1} parent=1 // pred_check
      _
    $region3: #{embedder_encode.1} parent=1 // pred_check_branch
      %19 = sbr.rel (0) target = $region5
    $region4: #{embedder_encode.1} parent=1 // pred_region
      _
    $region5: #{embedder_encode.1} parent=1 // pred_fallthru
      _
    // Predicated region
    $region6: #{embedder_encode.1} parent=1 // pred_check
      _
    $region7: #{embedder_encode.1} parent=1 // pred_check_branch
      %21 = sbr.rel (0) target = $region9
    $region8: #{embedder_encode.1} parent=1 // pred_region
      _
    $region9: #{embedder_encode.1} parent=1 // pred_fallthru
      _
    // Predicated region
    $region10: #{embedder_encode.1} parent=1 // pred_check
      _
    $region11: #{embedder_encode.1} parent=1 // pred_check_branch
      %23 = sbr.rel (0) target = $region13
    $region12: #{embedder_encode.1} parent=1 // pred_region
      _
    $region13: #{embedder_encode.1} parent=1 // pred_fallthru
      _
    // Predicated region
    $region14: #{embedder_encode.1} parent=1 // pred_check
      _
    $region15: #{embedder_encode.1} parent=1 // pred_check_branch
      %25 = sbr.rel (0) target = $region17
    $region16: #{embedder_encode.1} parent=1 // pred_region
      _
    $region17: #{embedder_encode.1} parent=1 // pred_fallthru
      _
    %s26 = sld [smem:[#allocation5]]
    %s27 = scalar_lea.vmem %s1, %s26
    %p29 = scmp.lt.u32.totalorder 1, 8
    %p30 = pneg %p29
    // Predicated region
    $region18: #{embedder_encode.1} parent=1 // pred_check
      _
    $region19: #{embedder_encode.1} parent=1 // pred_check_branch
      %32 = sbr.rel (%p29) target = $region21
    $region20: #{embedder_encode.1} parent=1 // pred_region
      %s47 = sand.u32 1, 7
      %p48 = scmp.eq.s32.totalorder %s47, 0
      %p49 = pneg %p48
      // Predicated region
      $region33: #{embedder_encode.1} parent=20 // pred_check
        _
      $region34: #{embedder_encode.1} parent=20 // pred_check_branch
        %51 = sbr.rel (%p48) target = $region36
      $region35: #{embedder_encode.1} parent=20 // pred_region
        %s52 = sand.u32 1, 7
        %s53 = ssub.s32 1, %s52
        %s54 = scalar_lea.vmem %s27, %s53
        %s55 = ssub.s32 1, %s52
        %s56 = scalar_lea.vmem [#allocation2], %s55
        %s57 = sshllo.u32 0, %s52
        loop: start=0, step=1, limit=1
        $region37: #{embedder_encode.1} parent=35 // loop_pre_header
          _
        $region38: #{embedder_encode.1} parent=35 // loop_header
          %s59 = sphi 0, %s63
          %p60 = scmp.ge.s32.totalorder %s59, 1
          %s64 = sphi %s54, %s54
          %s65 = sphi %s56, %s56
        $region39: #{embedder_encode.1} parent=35 // loop_header_branch
          %62 = sbr.rel (%p60) target = $region43
        $region40: #{embedder_encode.1} parent=35 // loop_body
          %v66 = vld [vmem:[%s64] sm:%s57]
          %67 = vst [vmem:[%s65] sm:%s57] %v66
        $region41: #{embedder_encode.1} parent=35 // loop_footer
          %s63 = sadd.s32 1, %s59
        $region42: #{embedder_encode.1} parent=35 // loop_footer_branch
          %58 = sbr.rel target = $region38
        $region43: #{embedder_encode.1} parent=35 // loop_exit
          _
      $region36: #{embedder_encode.1} parent=20 // pred_fallthru
        _
    $region21: #{embedder_encode.1} parent=1 // pred_fallthru
      _
    // Predicated region
    $region22: #{embedder_encode.1} parent=1 // pred_check
      %p33 = pneg %p29
    $region23: #{embedder_encode.1} parent=1 // pred_check_branch
      %35 = sbr.rel (%p33) target = $region25
    $region24: #{embedder_encode.1} parent=1 // pred_region
      %s36 = sshllo.u32 0, 1
      loop: start=0, step=1, limit=1
      $region26: #{embedder_encode.1} parent=24 // loop_pre_header
        _
      $region27: #{embedder_encode.1} parent=24 // loop_header
        %s38 = sphi 0, %s42
        %p39 = scmp.ge.s32.totalorder %s38, 1
        %s43 = sphi %s27, %s27
        %s44 = sphi [#allocation2], [#allocation2]
      $region28: #{embedder_encode.1} parent=24 // loop_header_branch
        %41 = sbr.rel (%p39) target = $region32
      $region29: #{embedder_encode.1} parent=24 // loop_body
        %v45 = vld [vmem:[%s43] sm:%s36]
        %46 = vst [vmem:[%s44] sm:%s36] %v45
      $region30: #{embedder_encode.1} parent=24 // loop_footer
        %s42 = sadd.s32 1, %s38
      $region31: #{embedder_encode.1} parent=24 // loop_footer_branch
        %37 = sbr.rel target = $region27
      $region32: #{embedder_encode.1} parent=24 // loop_exit
        _
    $region25: #{embedder_encode.1} parent=1 // pred_fallthru
      _
    // Predicated region
    $region44: #{embedder_encode.1} parent=1 // pred_check
      _
    $region45: #{embedder_encode.1} parent=1 // pred_check_branch
      %70 = sbr.rel (0) target = $region47
    $region46: #{embedder_encode.1} parent=1 // pred_region
      %71 = vsyncadd [#allocation3], 16
    $region47: #{embedder_encode.1} parent=1 // pred_fallthru
      _
    %s72 = sld [smem:[#allocation5 + $0x1]]
    %s73 = scalar_lea.vmem %s1, %s72
    %s74 = scalar_lea.vmem [#allocation2], 1
    %s75 = scalar_lea.sflag [#allocation3], 1
    %p77 = scmp.lt.u32.totalorder 1, 8
    %p78 = pneg %p77
    // Predicated region
    $region48: #{embedder_encode.1} parent=1 // pred_check
      _
    $region49: #{embedder_encode.1} parent=1 // pred_check_branch
      %80 = sbr.rel (%p77) target = $region51
    $region50: #{embedder_encode.1} parent=1 // pred_region
      %s95 = sand.u32 1, 7
      %p96 = scmp.eq.s32.totalorder %s95, 0
      %p97 = pneg %p96
      // Predicated region
      $region63: #{embedder_encode.1} parent=50 // pred_check
        _
      $region64: #{embedder_encode.1} parent=50 // pred_check_branch
        %99 = sbr.rel (%p96) target = $region66
      $region65: #{embedder_encode.1} parent=50 // pred_region
        %s100 = sand.u32 1, 7
        %s101 = ssub.s32 1, %s100
        %s102 = scalar_lea.vmem %s73, %s101
        %s103 = ssub.s32 1, %s100
        %s104 = scalar_lea.vmem %s74, %s103 [#allocation2]
        %s105 = sshllo.u32 0, %s100
        loop: start=0, step=1, limit=1
        $region67: #{embedder_encode.1} parent=65 // loop_pre_header
          _
        $region68: #{embedder_encode.1} parent=65 // loop_header
          %s107 = sphi 0, %s111
          %p108 = scmp.ge.s32.totalorder %s107, 1
          %s112 = sphi %s102, %s102
          %s113 = sphi %s104, %s104
        $region69: #{embedder_encode.1} parent=65 // loop_header_branch
          %110 = sbr.rel (%p108) target = $region73
        $region70: #{embedder_encode.1} parent=65 // loop_body
          %v114 = vld [vmem:[%s112] sm:%s105]
          %115 = vst [vmem:[%s113] sm:%s105] %v114
        $region71: #{embedder_encode.1} parent=65 // loop_footer
          %s111 = sadd.s32 1, %s107
        $region72: #{embedder_encode.1} parent=65 // loop_footer_branch
          %106 = sbr.rel target = $region68
        $region73: #{embedder_encode.1} parent=65 // loop_exit
          _
      $region66: #{embedder_encode.1} parent=50 // pred_fallthru
        _
    $region51: #{embedder_encode.1} parent=1 // pred_fallthru
      _
    // Predicated region
    $region52: #{embedder_encode.1} parent=1 // pred_check
      %p81 = pneg %p77
    $region53: #{embedder_encode.1} parent=1 // pred_check_branch
      %83 = sbr.rel (%p81) target = $region55
    $region54: #{embedder_encode.1} parent=1 // pred_region
      %s84 = sshllo.u32 0, 1
      loop: start=0, step=1, limit=1
      $region56: #{embedder_encode.1} parent=54 // loop_pre_header
        _
      $region57: #{embedder_encode.1} parent=54 // loop_header
        %s86 = sphi 0, %s90
        %p87 = scmp.ge.s32.totalorder %s86, 1
        %s91 = sphi %s73, %s73
        %s92 = sphi %s74, %s74
      $region58: #{embedder_encode.1} parent=54 // loop_header_branch
        %89 = sbr.rel (%p87) target = $region62
      $region59: #{embedder_encode.1} parent=54 // loop_body
        %v93 = vld [vmem:[%s91] sm:%s84]
        %94 = vst [vmem:[%s92] sm:%s84] %v93
      $region60: #{embedder_encode.1} parent=54 // loop_footer
        %s90 = sadd.s32 1, %s86
      $region61: #{embedder_encode.1} parent=54 // loop_footer_branch
        %85 = sbr.rel target = $region57
      $region62: #{embedder_encode.1} parent=54 // loop_exit
        _
    $region55: #{embedder_encode.1} parent=1 // pred_fallthru
      _
    // Predicated region
    $region74: #{embedder_encode.1} parent=1 // pred_check
      _
    $region75: #{embedder_encode.1} parent=1 // pred_check_branch
      %118 = sbr.rel (0) target = $region77
    $region76: #{embedder_encode.1} parent=1 // pred_region
      %119 = vsyncadd %s75, 16
    $region77: #{embedder_encode.1} parent=1 // pred_fallthru
      _
    %s120 = sld [smem:[#allocation5 + $0x2]]
    %s121 = scalar_lea.vmem %s1, %s120
    %s122 = scalar_lea.vmem [#allocation2], 2
    %s123 = scalar_lea.sflag [#allocation3], 2
    %p125 = scmp.lt.u32.totalorder 1, 8
    %p126 = pneg %p125
    // Predicated region
    $region78: #{embedder_encode.1} parent=1 // pred_check
      _
    $region79: #{embedder_encode.1} parent=1 // pred_check_branch
      %128 = sbr.rel (%p125) target = $region81
    $region80: #{embedder_encode.1} parent=1 // pred_region
      %s143 = sand.u32 1, 7
      %p144 = scmp.eq.s32.totalorder %s143, 0
      %p145 = pneg %p144
      // Predicated region
      $region93: #{embedder_encode.1} parent=80 // pred_check
        _
      $region94: #{embedder_encode.1} parent=80 // pred_check_branch
        %147 = sbr.rel (%p144) target = $region96
      $region95: #{embedder_encode.1} parent=80 // pred_region
        %s148 = sand.u32 1, 7
        %s149 = ssub.s32 1, %s148
        %s150 = scalar_lea.vmem %s121, %s149
        %s151 = ssub.s32 1, %s148
        %s152 = scalar_lea.vmem %s122, %s151 [#allocation2]
        %s153 = sshllo.u32 0, %s148
        loop: start=0, step=1, limit=1
        $region97: #{embedder_encode.1} parent=95 // loop_pre_header
          _
        $region98: #{embedder_encode.1} parent=95 // loop_header
          %s155 = sphi 0, %s159
          %p156 = scmp.ge.s32.totalorder %s155, 1
          %s160 = sphi %s150, %s150
          %s161 = sphi %s152, %s152
        $region99: #{embedder_encode.1} parent=95 // loop_header_branch
          %158 = sbr.rel (%p156) target = $region103
        $region100: #{embedder_encode.1} parent=95 // loop_body
          %v162 = vld [vmem:[%s160] sm:%s153]
          %163 = vst [vmem:[%s161] sm:%s153] %v162
        $region101: #{embedder_encode.1} parent=95 // loop_footer
          %s159 = sadd.s32 1, %s155
        $region102: #{embedder_encode.1} parent=95 // loop_footer_branch
          %154 = sbr.rel target = $region98
        $region103: #{embedder_encode.1} parent=95 // loop_exit
          _
      $region96: #{embedder_encode.1} parent=80 // pred_fallthru
        _
    $region81: #{embedder_encode.1} parent=1 // pred_fallthru
      _
    // Predicated region
    $region82: #{embedder_encode.1} parent=1 // pred_check
      %p129 = pneg %p125
    $region83: #{embedder_encode.1} parent=1 // pred_check_branch
      %131 = sbr.rel (%p129) target = $region85
    $region84: #{embedder_encode.1} parent=1 // pred_region
      %s132 = sshllo.u32 0, 1
      loop: start=0, step=1, limit=1
      $region86: #{embedder_encode.1} parent=84 // loop_pre_header
        _
      $region87: #{embedder_encode.1} parent=84 // loop_header
        %s134 = sphi 0, %s138
        %p135 = scmp.ge.s32.totalorder %s134, 1
        %s139 = sphi %s121, %s121
        %s140 = sphi %s122, %s122
      $region88: #{embedder_encode.1} parent=84 // loop_header_branch
        %137 = sbr.rel (%p135) target = $region92
      $region89: #{embedder_encode.1} parent=84 // loop_body
        %v141 = vld [vmem:[%s139] sm:%s132]
        %142 = vst [vmem:[%s140] sm:%s132] %v141
      $region90: #{embedder_encode.1} parent=84 // loop_footer
        %s138 = sadd.s32 1, %s134
      $region91: #{embedder_encode.1} parent=84 // loop_footer_branch
        %133 = sbr.rel target = $region87
      $region92: #{embedder_encode.1} parent=84 // loop_exit
        _
    $region85: #{embedder_encode.1} parent=1 // pred_fallthru
      _
    // Predicated region
    $region104: #{embedder_encode.1} parent=1 // pred_check
      _
    $region105: #{embedder_encode.1} parent=1 // pred_check_branch
      %166 = sbr.rel (0) target = $region107
    $region106: #{embedder_encode.1} parent=1 // pred_region
      %167 = vsyncadd %s123, 16
    $region107: #{embedder_encode.1} parent=1 // pred_fallthru
      _
    %s168 = sld [smem:[#allocation5 + $0x3]]
    %s169 = scalar_lea.vmem %s1, %s168
    %s170 = scalar_lea.vmem [#allocation2], 3
    %s171 = scalar_lea.sflag [#allocation3], 3
    %p173 = scmp.lt.u32.totalorder 1, 8
    %p174 = pneg %p173
    // Predicated region
    $region108: #{embedder_encode.1} parent=1 // pred_check
      _
    $region109: #{embedder_encode.1} parent=1 // pred_check_branch
      %176 = sbr.rel (%p173) target = $region111
    $region110: #{embedder_encode.1} parent=1 // pred_region
      %s191 = sand.u32 1, 7
      %p192 = scmp.eq.s32.totalorder %s191, 0
      %p193 = pneg %p192
      // Predicated region
      $region123: #{embedder_encode.1} parent=110 // pred_check
        _
      $region124: #{embedder_encode.1} parent=110 // pred_check_branch
        %195 = sbr.rel (%p192) target = $region126
      $region125: #{embedder_encode.1} parent=110 // pred_region
        %s196 = sand.u32 1, 7
        %s197 = ssub.s32 1, %s196
        %s198 = scalar_lea.vmem %s169, %s197
        %s199 = ssub.s32 1, %s196
        %s200 = scalar_lea.vmem %s170, %s199 [#allocation2]
        %s201 = sshllo.u32 0, %s196
        loop: start=0, step=1, limit=1
        $region127: #{embedder_encode.1} parent=125 // loop_pre_header
          _
        $region128: #{embedder_encode.1} parent=125 // loop_header
          %s203 = sphi 0, %s207
          %p204 = scmp.ge.s32.totalorder %s203, 1
          %s208 = sphi %s198, %s198
          %s209 = sphi %s200, %s200
        $region129: #{embedder_encode.1} parent=125 // loop_header_branch
          %206 = sbr.rel (%p204) target = $region133
        $region130: #{embedder_encode.1} parent=125 // loop_body
          %v210 = vld [vmem:[%s208] sm:%s201]
          %211 = vst [vmem:[%s209] sm:%s201] %v210
        $region131: #{embedder_encode.1} parent=125 // loop_footer
          %s207 = sadd.s32 1, %s203
        $region132: #{embedder_encode.1} parent=125 // loop_footer_branch
          %202 = sbr.rel target = $region128
        $region133: #{embedder_encode.1} parent=125 // loop_exit
          _
      $region126: #{embedder_encode.1} parent=110 // pred_fallthru
        _
    $region111: #{embedder_encode.1} parent=1 // pred_fallthru
      _
    // Predicated region
    $region112: #{embedder_encode.1} parent=1 // pred_check
      %p177 = pneg %p173
    $region113: #{embedder_encode.1} parent=1 // pred_check_branch
      %179 = sbr.rel (%p177) target = $region115
    $region114: #{embedder_encode.1} parent=1 // pred_region
      %s180 = sshllo.u32 0, 1
      loop: start=0, step=1, limit=1
      $region116: #{embedder_encode.1} parent=114 // loop_pre_header
        _
      $region117: #{embedder_encode.1} parent=114 // loop_header
        %s182 = sphi 0, %s186
        %p183 = scmp.ge.s32.totalorder %s182, 1
        %s187 = sphi %s169, %s169
        %s188 = sphi %s170, %s170
      $region118: #{embedder_encode.1} parent=114 // loop_header_branch
        %185 = sbr.rel (%p183) target = $region122
      $region119: #{embedder_encode.1} parent=114 // loop_body
        %v189 = vld [vmem:[%s187] sm:%s180]
        %190 = vst [vmem:[%s188] sm:%s180] %v189
      $region120: #{embedder_encode.1} parent=114 // loop_footer
        %s186 = sadd.s32 1, %s182
      $region121: #{embedder_encode.1} parent=114 // loop_footer_branch
        %181 = sbr.rel target = $region117
      $region122: #{embedder_encode.1} parent=114 // loop_exit
        _
    $region115: #{embedder_encode.1} parent=1 // pred_fallthru
      _
    // Predicated region
    $region134: #{embedder_encode.1} parent=1 // pred_check
      _
    $region135: #{embedder_encode.1} parent=1 // pred_check_branch
      %214 = sbr.rel (0) target = $region137
    $region136: #{embedder_encode.1} parent=1 // pred_region
      %215 = vsyncadd %s171, 16
    $region137: #{embedder_encode.1} parent=1 // pred_fallthru
      _
    %s216 = sld [smem:[#allocation5 + $0x4]]
    %s217 = scalar_lea.vmem %s1, %s216
    %s218 = scalar_lea.vmem [#allocation2], 4
    %s219 = scalar_lea.sflag [#allocation3], 4
    %p221 = scmp.lt.u32.totalorder 1, 8
    %p222 = pneg %p221
    // Predicated region
    $region138: #{embedder_encode.1} parent=1 // pred_check
      _
    $region139: #{embedder_encode.1} parent=1 // pred_check_branch
      %224 = sbr.rel (%p221) target = $region141
    $region140: #{embedder_encode.1} parent=1 // pred_region
      %s239 = sand.u32 1, 7
      %p240 = scmp.eq.s32.totalorder %s239, 0
      %p241 = pneg %p240
      // Predicated region
      $region153: #{embedder_encode.1} parent=140 // pred_check
        _
      $region154: #{embedder_encode.1} parent=140 // pred_check_branch
        %243 = sbr.rel (%p240) target = $region156
      $region155: #{embedder_encode.1} parent=140 // pred_region
        %s244 = sand.u32 1, 7
        %s245 = ssub.s32 1, %s244
        %s246 = scalar_lea.vmem %s217, %s245
        %s247 = ssub.s32 1, %s244
        %s248 = scalar_lea.vmem %s218, %s247 [#allocation2]
        %s249 = sshllo.u32 0, %s244
        loop: start=0, step=1, limit=1
        $region157: #{embedder_encode.1} parent=155 // loop_pre_header
          _
        $region158: #{embedder_encode.1} parent=155 // loop_header
          %s251 = sphi 0, %s255
          %p252 = scmp.ge.s32.totalorder %s251, 1
          %s256 = sphi %s246, %s246
          %s257 = sphi %s248, %s248
        $region159: #{embedder_encode.1} parent=155 // loop_header_branch
          %254 = sbr.rel (%p252) target = $region163
        $region160: #{embedder_encode.1} parent=155 // loop_body
          %v258 = vld [vmem:[%s256] sm:%s249]
          %259 = vst [vmem:[%s257] sm:%s249] %v258
        $region161: #{embedder_encode.1} parent=155 // loop_footer
          %s255 = sadd.s32 1, %s251
        $region162: #{embedder_encode.1} parent=155 // loop_footer_branch
          %250 = sbr.rel target = $region158
        $region163: #{embedder_encode.1} parent=155 // loop_exit
          _
      $region156: #{embedder_encode.1} parent=140 // pred_fallthru
        _
    $region141: #{embedder_encode.1} parent=1 // pred_fallthru
      _
    // Predicated region
    $region142: #{embedder_encode.1} parent=1 // pred_check
      %p225 = pneg %p221
    $region143: #{embedder_encode.1} parent=1 // pred_check_branch
      %227 = sbr.rel (%p225) target = $region145
    $region144: #{embedder_encode.1} parent=1 // pred_region
      %s228 = sshllo.u32 0, 1
      loop: start=0, step=1, limit=1
      $region146: #{embedder_encode.1} parent=144 // loop_pre_header
        _
      $region147: #{embedder_encode.1} parent=144 // loop_header
        %s230 = sphi 0, %s234
        %p231 = scmp.ge.s32.totalorder %s230, 1
        %s235 = sphi %s217, %s217
        %s236 = sphi %s218, %s218
      $region148: #{embedder_encode.1} parent=144 // loop_header_branch
        %233 = sbr.rel (%p231) target = $region152
      $region149: #{embedder_encode.1} parent=144 // loop_body
        %v237 = vld [vmem:[%s235] sm:%s228]
        %238 = vst [vmem:[%s236] sm:%s228] %v237
      $region150: #{embedder_encode.1} parent=144 // loop_footer
        %s234 = sadd.s32 1, %s230
      $region151: #{embedder_encode.1} parent=144 // loop_footer_branch
        %229 = sbr.rel target = $region147
      $region152: #{embedder_encode.1} parent=144 // loop_exit
        _
    $region145: #{embedder_encode.1} parent=1 // pred_fallthru
      _
    // Predicated region
    $region164: #{embedder_encode.1} parent=1 // pred_check
      _
    $region165: #{embedder_encode.1} parent=1 // pred_check_branch
      %262 = sbr.rel (0) target = $region167
    $region166: #{embedder_encode.1} parent=1 // pred_region
      %263 = vsyncadd %s219, 16
    $region167: #{embedder_encode.1} parent=1 // pred_fallthru
      _
    %s264 = sld [smem:[#allocation5 + $0x5]]
    %s265 = scalar_lea.vmem %s1, %s264
    %s266 = scalar_lea.vmem [#allocation2], 5
    %s267 = scalar_lea.sflag [#allocation3], 5
    %p269 = scmp.lt.u32.totalorder 1, 8
    %p270 = pneg %p269
    // Predicated region
    $region168: #{embedder_encode.1} parent=1 // pred_check
      _
    $region169: #{embedder_encode.1} parent=1 // pred_check_branch
      %272 = sbr.rel (%p269) target = $region171
    $region170: #{embedder_encode.1} parent=1 // pred_region
      %s287 = sand.u32 1, 7
      %p288 = scmp.eq.s32.totalorder %s287, 0
      %p289 = pneg %p288
      // Predicated region
      $region183: #{embedder_encode.1} parent=170 // pred_check
        _
      $region184: #{embedder_encode.1} parent=170 // pred_check_branch
        %291 = sbr.rel (%p288) target = $region186
      $region185: #{embedder_encode.1} parent=170 // pred_region
        %s292 = sand.u32 1, 7
        %s293 = ssub.s32 1, %s292
        %s294 = scalar_lea.vmem %s265, %s293
        %s295 = ssub.s32 1, %s292
        %s296 = scalar_lea.vmem %s266, %s295 [#allocation2]
        %s297 = sshllo.u32 0, %s292
        loop: start=0, step=1, limit=1
        $region187: #{embedder_encode.1} parent=185 // loop_pre_header
          _
        $region188: #{embedder_encode.1} parent=185 // loop_header
          %s299 = sphi 0, %s303
          %p300 = scmp.ge.s32.totalorder %s299, 1
          %s304 = sphi %s294, %s294
          %s305 = sphi %s296, %s296
        $region189: #{embedder_encode.1} parent=185 // loop_header_branch
          %302 = sbr.rel (%p300) target = $region193
        $region190: #{embedder_encode.1} parent=185 // loop_body
          %v306 = vld [vmem:[%s304] sm:%s297]
          %307 = vst [vmem:[%s305] sm:%s297] %v306
        $region191: #{embedder_encode.1} parent=185 // loop_footer
          %s303 = sadd.s32 1, %s299
        $region192: #{embedder_encode.1} parent=185 // loop_footer_branch
          %298 = sbr.rel target = $region188
        $region193: #{embedder_encode.1} parent=185 // loop_exit
          _
      $region186: #{embedder_encode.1} parent=170 // pred_fallthru
        _
    $region171: #{embedder_encode.1} parent=1 // pred_fallthru
      _
    // Predicated region
    $region172: #{embedder_encode.1} parent=1 // pred_check
      %p273 = pneg %p269
    $region173: #{embedder_encode.1} parent=1 // pred_check_branch
      %275 = sbr.rel (%p273) target = $region175
    $region174: #{embedder_encode.1} parent=1 // pred_region
      %s276 = sshllo.u32 0, 1
      loop: start=0, step=1, limit=1
      $region176: #{embedder_encode.1} parent=174 // loop_pre_header
        _
      $region177: #{embedder_encode.1} parent=174 // loop_header
        %s278 = sphi 0, %s282
        %p279 = scmp.ge.s32.totalorder %s278, 1
        %s283 = sphi %s265, %s265
        %s284 = sphi %s266, %s266
      $region178: #{embedder_encode.1} parent=174 // loop_header_branch
        %281 = sbr.rel (%p279) target = $region182
      $region179: #{embedder_encode.1} parent=174 // loop_body
        %v285 = vld [vmem:[%s283] sm:%s276]
        %286 = vst [vmem:[%s284] sm:%s276] %v285
      $region180: #{embedder_encode.1} parent=174 // loop_footer
        %s282 = sadd.s32 1, %s278
      $region181: #{embedder_encode.1} parent=174 // loop_footer_branch
        %277 = sbr.rel target = $region177
      $region182: #{embedder_encode.1} parent=174 // loop_exit
        _
    $region175: #{embedder_encode.1} parent=1 // pred_fallthru
      _
    // Predicated region
    $region194: #{embedder_encode.1} parent=1 // pred_check
      _
    $region195: #{embedder_encode.1} parent=1 // pred_check_branch
      %310 = sbr.rel (0) target = $region197
    $region196: #{embedder_encode.1} parent=1 // pred_region
      %311 = vsyncadd %s267, 16
    $region197: #{embedder_encode.1} parent=1 // pred_fallthru
      _
    %s312 = sld [smem:[#allocation5 + $0x6]]
    %s313 = scalar_lea.vmem %s1, %s312
    %s314 = scalar_lea.vmem [#allocation2], 6
    %s315 = scalar_lea.sflag [#allocation3], 6
    %p317 = scmp.lt.u32.totalorder 1, 8
    %p318 = pneg %p317
    // Predicated region
    $region198: #{embedder_encode.1} parent=1 // pred_check
      _
    $region199: #{embedder_encode.1} parent=1 // pred_check_branch
      %320 = sbr.rel (%p317) target = $region201
    $region200: #{embedder_encode.1} parent=1 // pred_region
      %s335 = sand.u32 1, 7
      %p336 = scmp.eq.s32.totalorder %s335, 0
      %p337 = pneg %p336
      // Predicated region
      $region213: #{embedder_encode.1} parent=200 // pred_check
        _
      $region214: #{embedder_encode.1} parent=200 // pred_check_branch
        %339 = sbr.rel (%p336) target = $region216
      $region215: #{embedder_encode.1} parent=200 // pred_region
        %s340 = sand.u32 1, 7
        %s341 = ssub.s32 1, %s340
        %s342 = scalar_lea.vmem %s313, %s341
        %s343 = ssub.s32 1, %s340
        %s344 = scalar_lea.vmem %s314, %s343 [#allocation2]
        %s345 = sshllo.u32 0, %s340
        loop: start=0, step=1, limit=1
        $region217: #{embedder_encode.1} parent=215 // loop_pre_header
          _
        $region218: #{embedder_encode.1} parent=215 // loop_header
          %s347 = sphi 0, %s351
          %p348 = scmp.ge.s32.totalorder %s347, 1
          %s352 = sphi %s342, %s342
          %s353 = sphi %s344, %s344
        $region219: #{embedder_encode.1} parent=215 // loop_header_branch
          %350 = sbr.rel (%p348) target = $region223
        $region220: #{embedder_encode.1} parent=215 // loop_body
          %v354 = vld [vmem:[%s352] sm:%s345]
          %355 = vst [vmem:[%s353] sm:%s345] %v354
        $region221: #{embedder_encode.1} parent=215 // loop_footer
          %s351 = sadd.s32 1, %s347
        $region222: #{embedder_encode.1} parent=215 // loop_footer_branch
          %346 = sbr.rel target = $region218
        $region223: #{embedder_encode.1} parent=215 // loop_exit
          _
      $region216: #{embedder_encode.1} parent=200 // pred_fallthru
        _
    $region201: #{embedder_encode.1} parent=1 // pred_fallthru
      _
    // Predicated region
    $region202: #{embedder_encode.1} parent=1 // pred_check
      %p321 = pneg %p317
    $region203: #{embedder_encode.1} parent=1 // pred_check_branch
      %323 = sbr.rel (%p321) target = $region205
    $region204: #{embedder_encode.1} parent=1 // pred_region
      %s324 = sshllo.u32 0, 1
      loop: start=0, step=1, limit=1
      $region206: #{embedder_encode.1} parent=204 // loop_pre_header
        _
      $region207: #{embedder_encode.1} parent=204 // loop_header
        %s326 = sphi 0, %s330
        %p327 = scmp.ge.s32.totalorder %s326, 1
        %s331 = sphi %s313, %s313
        %s332 = sphi %s314, %s314
      $region208: #{embedder_encode.1} parent=204 // loop_header_branch
        %329 = sbr.rel (%p327) target = $region212
      $region209: #{embedder_encode.1} parent=204 // loop_body
        %v333 = vld [vmem:[%s331] sm:%s324]
        %334 = vst [vmem:[%s332] sm:%s324] %v333
      $region210: #{embedder_encode.1} parent=204 // loop_footer
        %s330 = sadd.s32 1, %s326
      $region211: #{embedder_encode.1} parent=204 // loop_footer_branch
        %325 = sbr.rel target = $region207
      $region212: #{embedder_encode.1} parent=204 // loop_exit
        _
    $region205: #{embedder_encode.1} parent=1 // pred_fallthru
      _
    // Predicated region
    $region224: #{embedder_encode.1} parent=1 // pred_check
      _
    $region225: #{embedder_encode.1} parent=1 // pred_check_branch
      %358 = sbr.rel (0) target = $region227
    $region226: #{embedder_encode.1} parent=1 // pred_region
      %359 = vsyncadd %s315, 16
    $region227: #{embedder_encode.1} parent=1 // pred_fallthru
      _
    %s360 = sld [smem:[#allocation5 + $0x7]]
    %s361 = scalar_lea.vmem %s1, %s360
    %s362 = scalar_lea.vmem [#allocation2], 7
    %s363 = scalar_lea.sflag [#allocation3], 7
    %p365 = scmp.lt.u32.totalorder 1, 8
    %p366 = pneg %p365
    // Predicated region
    $region228: #{embedder_encode.1} parent=1 // pred_check
      _
    $region229: #{embedder_encode.1} parent=1 // pred_check_branch
      %368 = sbr.rel (%p365) target = $region231
    $region230: #{embedder_encode.1} parent=1 // pred_region
      %s383 = sand.u32 1, 7
      %p384 = scmp.eq.s32.totalorder %s383, 0
      %p385 = pneg %p384
      // Predicated region
      $region243: #{embedder_encode.1} parent=230 // pred_check
        _
      $region244: #{embedder_encode.1} parent=230 // pred_check_branch
        %387 = sbr.rel (%p384) target = $region246
      $region245: #{embedder_encode.1} parent=230 // pred_region
        %s388 = sand.u32 1, 7
        %s389 = ssub.s32 1, %s388
        %s390 = scalar_lea.vmem %s361, %s389
        %s391 = ssub.s32 1, %s388
        %s392 = scalar_lea.vmem %s362, %s391 [#allocation2]
        %s393 = sshllo.u32 0, %s388
        loop: start=0, step=1, limit=1
        $region247: #{embedder_encode.1} parent=245 // loop_pre_header
          _
        $region248: #{embedder_encode.1} parent=245 // loop_header
          %s395 = sphi 0, %s399
          %p396 = scmp.ge.s32.totalorder %s395, 1
          %s400 = sphi %s390, %s390
          %s401 = sphi %s392, %s392
        $region249: #{embedder_encode.1} parent=245 // loop_header_branch
          %398 = sbr.rel (%p396) target = $region253
        $region250: #{embedder_encode.1} parent=245 // loop_body
          %v402 = vld [vmem:[%s400] sm:%s393]
          %403 = vst [vmem:[%s401] sm:%s393] %v402
        $region251: #{embedder_encode.1} parent=245 // loop_footer
          %s399 = sadd.s32 1, %s395
        $region252: #{embedder_encode.1} parent=245 // loop_footer_branch
          %394 = sbr.rel target = $region248
        $region253: #{embedder_encode.1} parent=245 // loop_exit
          _
      $region246: #{embedder_encode.1} parent=230 // pred_fallthru
        _
    $region231: #{embedder_encode.1} parent=1 // pred_fallthru
      _
    // Predicated region
    $region232: #{embedder_encode.1} parent=1 // pred_check
      %p369 = pneg %p365
    $region233: #{embedder_encode.1} parent=1 // pred_check_branch
      %371 = sbr.rel (%p369) target = $region235
    $region234: #{embedder_encode.1} parent=1 // pred_region
      %s372 = sshllo.u32 0, 1
      loop: start=0, step=1, limit=1
      $region236: #{embedder_encode.1} parent=234 // loop_pre_header
        _
      $region237: #{embedder_encode.1} parent=234 // loop_header
        %s374 = sphi 0, %s378
        %p375 = scmp.ge.s32.totalorder %s374, 1
        %s379 = sphi %s361, %s361
        %s380 = sphi %s362, %s362
      $region238: #{embedder_encode.1} parent=234 // loop_header_branch
        %377 = sbr.rel (%p375) target = $region242
      $region239: #{embedder_encode.1} parent=234 // loop_body
        %v381 = vld [vmem:[%s379] sm:%s372]
        %382 = vst [vmem:[%s380] sm:%s372] %v381
      $region240: #{embedder_encode.1} parent=234 // loop_footer
        %s378 = sadd.s32 1, %s374
      $region241: #{embedder_encode.1} parent=234 // loop_footer_branch
        %373 = sbr.rel target = $region237
      $region242: #{embedder_encode.1} parent=234 // loop_exit
        _
    $region235: #{embedder_encode.1} parent=1 // pred_fallthru
      _
    // Predicated region
    $region254: #{embedder_encode.1} parent=1 // pred_check
      _
    $region255: #{embedder_encode.1} parent=1 // pred_check_branch
      %406 = sbr.rel (0) target = $region257
    $region256: #{embedder_encode.1} parent=1 // pred_region
      %407 = vsyncadd %s363, 16
    $region257: #{embedder_encode.1} parent=1 // pred_fallthru
      _
    %s408 = sld [smem:[#allocation5 + $0x8]]
    %s409 = scalar_lea.vmem %s1, %s408
    %s410 = scalar_lea.vmem [#allocation2], 8
    %s411 = scalar_lea.sflag [#allocation3], 8
    %p413 = scmp.lt.u32.totalorder 1, 8
    %p414 = pneg %p413
    // Predicated region
    $region258: #{embedder_encode.1} parent=1 // pred_check
      _
    $region259: #{embedder_encode.1} parent=1 // pred_check_branch
      %416 = sbr.rel (%p413) target = $region261
    $region260: #{embedder_encode.1} parent=1 // pred_region
      %s431 = sand.u32 1, 7
      %p432 = scmp.eq.s32.totalorder %s431, 0
      %p433 = pneg %p432
      // Predicated region
      $region273: #{embedder_encode.1} parent=260 // pred_check
        _
      $region274: #{embedder_encode.1} parent=260 // pred_check_branch
        %435 = sbr.rel (%p432) target = $region276
      $region275: #{embedder_encode.1} parent=260 // pred_region
        %s436 = sand.u32 1, 7
        %s437 = ssub.s32 1, %s436
        %s438 = scalar_lea.vmem %s409, %s437
        %s439 = ssub.s32 1, %s436
        %s440 = scalar_lea.vmem %s410, %s439 [#allocation2]
        %s441 = sshllo.u32 0, %s436
        loop: start=0, step=1, limit=1
        $region277: #{embedder_encode.1} parent=275 // loop_pre_header
          _
        $region278: #{embedder_encode.1} parent=275 // loop_header
          %s443 = sphi 0, %s447
          %p444 = scmp.ge.s32.totalorder %s443, 1
          %s448 = sphi %s438, %s438
          %s449 = sphi %s440, %s440
        $region279: #{embedder_encode.1} parent=275 // loop_header_branch
          %446 = sbr.rel (%p444) target = $region283
        $region280: #{embedder_encode.1} parent=275 // loop_body
          %v450 = vld [vmem:[%s448] sm:%s441]
          %451 = vst [vmem:[%s449] sm:%s441] %v450
        $region281: #{embedder_encode.1} parent=275 // loop_footer
          %s447 = sadd.s32 1, %s443
        $region282: #{embedder_encode.1} parent=275 // loop_footer_branch
          %442 = sbr.rel target = $region278
        $region283: #{embedder_encode.1} parent=275 // loop_exit
          _
      $region276: #{embedder_encode.1} parent=260 // pred_fallthru
        _
    $region261: #{embedder_encode.1} parent=1 // pred_fallthru
      _
    // Predicated region
    $region262: #{embedder_encode.1} parent=1 // pred_check
      %p417 = pneg %p413
    $region263: #{embedder_encode.1} parent=1 // pred_check_branch
      %419 = sbr.rel (%p417) target = $region265
    $region264: #{embedder_encode.1} parent=1 // pred_region
      %s420 = sshllo.u32 0, 1
      loop: start=0, step=1, limit=1
      $region266: #{embedder_encode.1} parent=264 // loop_pre_header
        _
      $region267: #{embedder_encode.1} parent=264 // loop_header
        %s422 = sphi 0, %s426
        %p423 = scmp.ge.s32.totalorder %s422, 1
        %s427 = sphi %s409, %s409
        %s428 = sphi %s410, %s410
      $region268: #{embedder_encode.1} parent=264 // loop_header_branch
        %425 = sbr.rel (%p423) target = $region272
      $region269: #{embedder_encode.1} parent=264 // loop_body
        %v429 = vld [vmem:[%s427] sm:%s420]
        %430 = vst [vmem:[%s428] sm:%s420] %v429
      $region270: #{embedder_encode.1} parent=264 // loop_footer
        %s426 = sadd.s32 1, %s422
      $region271: #{embedder_encode.1} parent=264 // loop_footer_branch
        %421 = sbr.rel target = $region267
      $region272: #{embedder_encode.1} parent=264 // loop_exit
        _
    $region265: #{embedder_encode.1} parent=1 // pred_fallthru
      _
    // Predicated region
    $region284: #{embedder_encode.1} parent=1 // pred_check
      _
    $region285: #{embedder_encode.1} parent=1 // pred_check_branch
      %454 = sbr.rel (0) target = $region287
    $region286: #{embedder_encode.1} parent=1 // pred_region
      %455 = vsyncadd %s411, 16
    $region287: #{embedder_encode.1} parent=1 // pred_fallthru
      _
    %s456 = sld [smem:[#allocation5 + $0x9]]
    %s457 = scalar_lea.vmem %s1, %s456
    %s458 = scalar_lea.vmem [#allocation2], 9
    %s459 = scalar_lea.sflag [#allocation3], 9
    %p461 = scmp.lt.u32.totalorder 1, 8
    %p462 = pneg %p461
    // Predicated region
    $region288: #{embedder_encode.1} parent=1 // pred_check
      _
    $region289: #{embedder_encode.1} parent=1 // pred_check_branch
      %464 = sbr.rel (%p461) target = $region291
    $region290: #{embedder_encode.1} parent=1 // pred_region
      %s479 = sand.u32 1, 7
      %p480 = scmp.eq.s32.totalorder %s479, 0
      %p481 = pneg %p480
      // Predicated region
      $region303: #{embedder_encode.1} parent=290 // pred_check
        _
      $region304: #{embedder_encode.1} parent=290 // pred_check_branch
        %483 = sbr.rel (%p480) target = $region306
      $region305: #{embedder_encode.1} parent=290 // pred_region
        %s484 = sand.u32 1, 7
        %s485 = ssub.s32 1, %s484
        %s486 = scalar_lea.vmem %s457, %s485
        %s487 = ssub.s32 1, %s484
        %s488 = scalar_lea.vmem %s458, %s487 [#allocation2]
        %s489 = sshllo.u32 0, %s484
        loop: start=0, step=1, limit=1
        $region307: #{embedder_encode.1} parent=305 // loop_pre_header
          _
        $region308: #{embedder_encode.1} parent=305 // loop_header
          %s491 = sphi 0, %s495
          %p492 = scmp.ge.s32.totalorder %s491, 1
          %s496 = sphi %s486, %s486
          %s497 = sphi %s488, %s488
        $region309: #{embedder_encode.1} parent=305 // loop_header_branch
          %494 = sbr.rel (%p492) target = $region313
        $region310: #{embedder_encode.1} parent=305 // loop_body
          %v498 = vld [vmem:[%s496] sm:%s489]
          %499 = vst [vmem:[%s497] sm:%s489] %v498
        $region311: #{embedder_encode.1} parent=305 // loop_footer
          %s495 = sadd.s32 1, %s491
        $region312: #{embedder_encode.1} parent=305 // loop_footer_branch
          %490 = sbr.rel target = $region308
        $region313: #{embedder_encode.1} parent=305 // loop_exit
          _
      $region306: #{embedder_encode.1} parent=290 // pred_fallthru
        _
    $region291: #{embedder_encode.1} parent=1 // pred_fallthru
      _
    // Predicated region
    $region292: #{embedder_encode.1} parent=1 // pred_check
      %p465 = pneg %p461
    $region293: #{embedder_encode.1} parent=1 // pred_check_branch
      %467 = sbr.rel (%p465) target = $region295
    $region294: #{embedder_encode.1} parent=1 // pred_region
      %s468 = sshllo.u32 0, 1
      loop: start=0, step=1, limit=1
      $region296: #{embedder_encode.1} parent=294 // loop_pre_header
        _
      $region297: #{embedder_encode.1} parent=294 // loop_header
        %s470 = sphi 0, %s474
        %p471 = scmp.ge.s32.totalorder %s470, 1
        %s475 = sphi %s457, %s457
        %s476 = sphi %s458, %s458
      $region298: #{embedder_encode.1} parent=294 // loop_header_branch
        %473 = sbr.rel (%p471) target = $region302
      $region299: #{embedder_encode.1} parent=294 // loop_body
        %v477 = vld [vmem:[%s475] sm:%s468]
        %478 = vst [vmem:[%s476] sm:%s468] %v477
      $region300: #{embedder_encode.1} parent=294 // loop_footer
        %s474 = sadd.s32 1, %s470
      $region301: #{embedder_encode.1} parent=294 // loop_footer_branch
        %469 = sbr.rel target = $region297
      $region302: #{embedder_encode.1} parent=294 // loop_exit
        _
    $region295: #{embedder_encode.1} parent=1 // pred_fallthru
      _
    // Predicated region
    $region314: #{embedder_encode.1} parent=1 // pred_check
      _
    $region315: #{embedder_encode.1} parent=1 // pred_check_branch
      %502 = sbr.rel (0) target = $region317
    $region316: #{embedder_encode.1} parent=1 // pred_region
      %503 = vsyncadd %s459, 16
    $region317: #{embedder_encode.1} parent=1 // pred_fallthru
      _
    %s504 = sld [smem:[#allocation5 + $0xa]]
    %s505 = scalar_lea.vmem %s1, %s504
    %s506 = scalar_lea.vmem [#allocation2], 10
    %s507 = scalar_lea.sflag [#allocation3], 10
    %p509 = scmp.lt.u32.totalorder 1, 8
    %p510 = pneg %p509
    // Predicated region
    $region318: #{embedder_encode.1} parent=1 // pred_check
      _
    $region319: #{embedder_encode.1} parent=1 // pred_check_branch
      %512 = sbr.rel (%p509) target = $region321
    $region320: #{embedder_encode.1} parent=1 // pred_region
      %s527 = sand.u32 1, 7
      %p528 = scmp.eq.s32.totalorder %s527, 0
      %p529 = pneg %p528
      // Predicated region
      $region333: #{embedder_encode.1} parent=320 // pred_check
        _
      $region334: #{embedder_encode.1} parent=320 // pred_check_branch
        %531 = sbr.rel (%p528) target = $region336
      $region335: #{embedder_encode.1} parent=320 // pred_region
        %s532 = sand.u32 1, 7
        %s533 = ssub.s32 1, %s532
        %s534 = scalar_lea.vmem %s505, %s533
        %s535 = ssub.s32 1, %s532
        %s536 = scalar_lea.vmem %s506, %s535 [#allocation2]
        %s537 = sshllo.u32 0, %s532
        loop: start=0, step=1, limit=1
        $region337: #{embedder_encode.1} parent=335 // loop_pre_header
          _
        $region338: #{embedder_encode.1} parent=335 // loop_header
          %s539 = sphi 0, %s543
          %p540 = scmp.ge.s32.totalorder %s539, 1
          %s544 = sphi %s534, %s534
          %s545 = sphi %s536, %s536
        $region339: #{embedder_encode.1} parent=335 // loop_header_branch
          %542 = sbr.rel (%p540) target = $region343
        $region340: #{embedder_encode.1} parent=335 // loop_body
          %v546 = vld [vmem:[%s544] sm:%s537]
          %547 = vst [vmem:[%s545] sm:%s537] %v546
        $region341: #{embedder_encode.1} parent=335 // loop_footer
          %s543 = sadd.s32 1, %s539
        $region342: #{embedder_encode.1} parent=335 // loop_footer_branch
          %538 = sbr.rel target = $region338
        $region343: #{embedder_encode.1} parent=335 // loop_exit
          _
      $region336: #{embedder_encode.1} parent=320 // pred_fallthru
        _
    $region321: #{embedder_encode.1} parent=1 // pred_fallthru
      _
    // Predicated region
    $region322: #{embedder_encode.1} parent=1 // pred_check
      %p513 = pneg %p509
    $region323: #{embedder_encode.1} parent=1 // pred_check_branch
      %515 = sbr.rel (%p513) target = $region325
    $region324: #{embedder_encode.1} parent=1 // pred_region
      %s516 = sshllo.u32 0, 1
      loop: start=0, step=1, limit=1
      $region326: #{embedder_encode.1} parent=324 // loop_pre_header
        _
      $region327: #{embedder_encode.1} parent=324 // loop_header
        %s518 = sphi 0, %s522
        %p519 = scmp.ge.s32.totalorder %s518, 1
        %s523 = sphi %s505, %s505
        %s524 = sphi %s506, %s506
      $region328: #{embedder_encode.1} parent=324 // loop_header_branch
        %521 = sbr.rel (%p519) target = $region332
      $region329: #{embedder_encode.1} parent=324 // loop_body
        %v525 = vld [vmem:[%s523] sm:%s516]
        %526 = vst [vmem:[%s524] sm:%s516] %v525
      $region330: #{embedder_encode.1} parent=324 // loop_footer
        %s522 = sadd.s32 1, %s518
      $region331: #{embedder_encode.1} parent=324 // loop_footer_branch
        %517 = sbr.rel target = $region327
      $region332: #{embedder_encode.1} parent=324 // loop_exit
        _
    $region325: #{embedder_encode.1} parent=1 // pred_fallthru
      _
    // Predicated region
    $region344: #{embedder_encode.1} parent=1 // pred_check
      _
    $region345: #{embedder_encode.1} parent=1 // pred_check_branch
      %550 = sbr.rel (0) target = $region347
    $region346: #{embedder_encode.1} parent=1 // pred_region
      %551 = vsyncadd %s507, 16
    $region347: #{embedder_encode.1} parent=1 // pred_fallthru
      _
    %s552 = sld [smem:[#allocation5 + $0xb]]
    %s553 = scalar_lea.vmem %s1, %s552
    %s554 = scalar_lea.vmem [#allocation2], 11
    %s555 = scalar_lea.sflag [#allocation3], 11
    %p557 = scmp.lt.u32.totalorder 1, 8
    %p558 = pneg %p557
    // Predicated region
    $region348: #{embedder_encode.1} parent=1 // pred_check
      _
    $region349: #{embedder_encode.1} parent=1 // pred_check_branch
      %560 = sbr.rel (%p557) target = $region351
    $region350: #{embedder_encode.1} parent=1 // pred_region
      %s575 = sand.u32 1, 7
      %p576 = scmp.eq.s32.totalorder %s575, 0
      %p577 = pneg %p576
      // Predicated region
      $region363: #{embedder_encode.1} parent=350 // pred_check
        _
      $region364: #{embedder_encode.1} parent=350 // pred_check_branch
        %579 = sbr.rel (%p576) target = $region366
      $region365: #{embedder_encode.1} parent=350 // pred_region
        %s580 = sand.u32 1, 7
        %s581 = ssub.s32 1, %s580
        %s582 = scalar_lea.vmem %s553, %s581
        %s583 = ssub.s32 1, %s580
        %s584 = scalar_lea.vmem %s554, %s583 [#allocation2]
        %s585 = sshllo.u32 0, %s580
        loop: start=0, step=1, limit=1
        $region367: #{embedder_encode.1} parent=365 // loop_pre_header
          _
        $region368: #{embedder_encode.1} parent=365 // loop_header
          %s587 = sphi 0, %s591
          %p588 = scmp.ge.s32.totalorder %s587, 1
          %s592 = sphi %s582, %s582
          %s593 = sphi %s584, %s584
        $region369: #{embedder_encode.1} parent=365 // loop_header_branch
          %590 = sbr.rel (%p588) target = $region373
        $region370: #{embedder_encode.1} parent=365 // loop_body
          %v594 = vld [vmem:[%s592] sm:%s585]
          %595 = vst [vmem:[%s593] sm:%s585] %v594
        $region371: #{embedder_encode.1} parent=365 // loop_footer
          %s591 = sadd.s32 1, %s587
        $region372: #{embedder_encode.1} parent=365 // loop_footer_branch
          %586 = sbr.rel target = $region368
        $region373: #{embedder_encode.1} parent=365 // loop_exit
          _
      $region366: #{embedder_encode.1} parent=350 // pred_fallthru
        _
    $region351: #{embedder_encode.1} parent=1 // pred_fallthru
      _
    // Predicated region
    $region352: #{embedder_encode.1} parent=1 // pred_check
      %p561 = pneg %p557
    $region353: #{embedder_encode.1} parent=1 // pred_check_branch
      %563 = sbr.rel (%p561) target = $region355
    $region354: #{embedder_encode.1} parent=1 // pred_region
      %s564 = sshllo.u32 0, 1
      loop: start=0, step=1, limit=1
      $region356: #{embedder_encode.1} parent=354 // loop_pre_header
        _
      $region357: #{embedder_encode.1} parent=354 // loop_header
        %s566 = sphi 0, %s570
        %p567 = scmp.ge.s32.totalorder %s566, 1
        %s571 = sphi %s553, %s553
        %s572 = sphi %s554, %s554
      $region358: #{embedder_encode.1} parent=354 // loop_header_branch
        %569 = sbr.rel (%p567) target = $region362
      $region359: #{embedder_encode.1} parent=354 // loop_body
        %v573 = vld [vmem:[%s571] sm:%s564]
        %574 = vst [vmem:[%s572] sm:%s564] %v573
      $region360: #{embedder_encode.1} parent=354 // loop_footer
        %s570 = sadd.s32 1, %s566
      $region361: #{embedder_encode.1} parent=354 // loop_footer_branch
        %565 = sbr.rel target = $region357
      $region362: #{embedder_encode.1} parent=354 // loop_exit
        _
    $region355: #{embedder_encode.1} parent=1 // pred_fallthru
      _
    // Predicated region
    $region374: #{embedder_encode.1} parent=1 // pred_check
      _
    $region375: #{embedder_encode.1} parent=1 // pred_check_branch
      %598 = sbr.rel (0) target = $region377
    $region376: #{embedder_encode.1} parent=1 // pred_region
      %599 = vsyncadd %s555, 16
    $region377: #{embedder_encode.1} parent=1 // pred_fallthru
      _
    %s600 = sld [smem:[#allocation5 + $0xc]]
    %s601 = scalar_lea.vmem %s1, %s600
    %s602 = scalar_lea.vmem [#allocation2], 12
    %s603 = scalar_lea.sflag [#allocation3], 12
    %p605 = scmp.lt.u32.totalorder 1, 8
    %p606 = pneg %p605
    // Predicated region
    $region378: #{embedder_encode.1} parent=1 // pred_check
      _
    $region379: #{embedder_encode.1} parent=1 // pred_check_branch
      %608 = sbr.rel (%p605) target = $region381
    $region380: #{embedder_encode.1} parent=1 // pred_region
      %s623 = sand.u32 1, 7
      %p624 = scmp.eq.s32.totalorder %s623, 0
      %p625 = pneg %p624
      // Predicated region
      $region393: #{embedder_encode.1} parent=380 // pred_check
        _
      $region394: #{embedder_encode.1} parent=380 // pred_check_branch
        %627 = sbr.rel (%p624) target = $region396
      $region395: #{embedder_encode.1} parent=380 // pred_region
        %s628 = sand.u32 1, 7
        %s629 = ssub.s32 1, %s628
        %s630 = scalar_lea.vmem %s601, %s629
        %s631 = ssub.s32 1, %s628
        %s632 = scalar_lea.vmem %s602, %s631 [#allocation2]
        %s633 = sshllo.u32 0, %s628
        loop: start=0, step=1, limit=1
        $region397: #{embedder_encode.1} parent=395 // loop_pre_header
          _
        $region398: #{embedder_encode.1} parent=395 // loop_header
          %s635 = sphi 0, %s639
          %p636 = scmp.ge.s32.totalorder %s635, 1
          %s640 = sphi %s630, %s630
          %s641 = sphi %s632, %s632
        $region399: #{embedder_encode.1} parent=395 // loop_header_branch
          %638 = sbr.rel (%p636) target = $region403
        $region400: #{embedder_encode.1} parent=395 // loop_body
          %v642 = vld [vmem:[%s640] sm:%s633]
          %643 = vst [vmem:[%s641] sm:%s633] %v642
        $region401: #{embedder_encode.1} parent=395 // loop_footer
          %s639 = sadd.s32 1, %s635
        $region402: #{embedder_encode.1} parent=395 // loop_footer_branch
          %634 = sbr.rel target = $region398
        $region403: #{embedder_encode.1} parent=395 // loop_exit
          _
      $region396: #{embedder_encode.1} parent=380 // pred_fallthru
        _
    $region381: #{embedder_encode.1} parent=1 // pred_fallthru
      _
    // Predicated region
    $region382: #{embedder_encode.1} parent=1 // pred_check
      %p609 = pneg %p605
    $region383: #{embedder_encode.1} parent=1 // pred_check_branch
      %611 = sbr.rel (%p609) target = $region385
    $region384: #{embedder_encode.1} parent=1 // pred_region
      %s612 = sshllo.u32 0, 1
      loop: start=0, step=1, limit=1
      $region386: #{embedder_encode.1} parent=384 // loop_pre_header
        _
      $region387: #{embedder_encode.1} parent=384 // loop_header
        %s614 = sphi 0, %s618
        %p615 = scmp.ge.s32.totalorder %s614, 1
        %s619 = sphi %s601, %s601
        %s620 = sphi %s602, %s602
      $region388: #{embedder_encode.1} parent=384 // loop_header_branch
        %617 = sbr.rel (%p615) target = $region392
      $region389: #{embedder_encode.1} parent=384 // loop_body
        %v621 = vld [vmem:[%s619] sm:%s612]
        %622 = vst [vmem:[%s620] sm:%s612] %v621
      $region390: #{embedder_encode.1} parent=384 // loop_footer
        %s618 = sadd.s32 1, %s614
      $region391: #{embedder_encode.1} parent=384 // loop_footer_branch
        %613 = sbr.rel target = $region387
      $region392: #{embedder_encode.1} parent=384 // loop_exit
        _
    $region385: #{embedder_encode.1} parent=1 // pred_fallthru
      _
    // Predicated region
    $region404: #{embedder_encode.1} parent=1 // pred_check
      _
    $region405: #{embedder_encode.1} parent=1 // pred_check_branch
      %646 = sbr.rel (0) target = $region407
    $region406: #{embedder_encode.1} parent=1 // pred_region
      %647 = vsyncadd %s603, 16
    $region407: #{embedder_encode.1} parent=1 // pred_fallthru
      _
    %s648 = sld [smem:[#allocation5 + $0xd]]
    %s649 = scalar_lea.vmem %s1, %s648
    %s650 = scalar_lea.vmem [#allocation2], 13
    %s651 = scalar_lea.sflag [#allocation3], 13
    %p653 = scmp.lt.u32.totalorder 1, 8
    %p654 = pneg %p653
    // Predicated region
    $region408: #{embedder_encode.1} parent=1 // pred_check
      _
    $region409: #{embedder_encode.1} parent=1 // pred_check_branch
      %656 = sbr.rel (%p653) target = $region411
    $region410: #{embedder_encode.1} parent=1 // pred_region
      %s671 = sand.u32 1, 7
      %p672 = scmp.eq.s32.totalorder %s671, 0
      %p673 = pneg %p672
      // Predicated region
      $region423: #{embedder_encode.1} parent=410 // pred_check
        _
      $region424: #{embedder_encode.1} parent=410 // pred_check_branch
        %675 = sbr.rel (%p672) target = $region426
      $region425: #{embedder_encode.1} parent=410 // pred_region
        %s676 = sand.u32 1, 7
        %s677 = ssub.s32 1, %s676
        %s678 = scalar_lea.vmem %s649, %s677
        %s679 = ssub.s32 1, %s676
        %s680 = scalar_lea.vmem %s650, %s679 [#allocation2]
        %s681 = sshllo.u32 0, %s676
        loop: start=0, step=1, limit=1
        $region427: #{embedder_encode.1} parent=425 // loop_pre_header
          _
        $region428: #{embedder_encode.1} parent=425 // loop_header
          %s683 = sphi 0, %s687
          %p684 = scmp.ge.s32.totalorder %s683, 1
          %s688 = sphi %s678, %s678
          %s689 = sphi %s680, %s680
        $region429: #{embedder_encode.1} parent=425 // loop_header_branch
          %686 = sbr.rel (%p684) target = $region433
        $region430: #{embedder_encode.1} parent=425 // loop_body
          %v690 = vld [vmem:[%s688] sm:%s681]
          %691 = vst [vmem:[%s689] sm:%s681] %v690
        $region431: #{embedder_encode.1} parent=425 // loop_footer
          %s687 = sadd.s32 1, %s683
        $region432: #{embedder_encode.1} parent=425 // loop_footer_branch
          %682 = sbr.rel target = $region428
        $region433: #{embedder_encode.1} parent=425 // loop_exit
          _
      $region426: #{embedder_encode.1} parent=410 // pred_fallthru
        _
    $region411: #{embedder_encode.1} parent=1 // pred_fallthru
      _
    // Predicated region
    $region412: #{embedder_encode.1} parent=1 // pred_check
      %p657 = pneg %p653
    $region413: #{embedder_encode.1} parent=1 // pred_check_branch
      %659 = sbr.rel (%p657) target = $region415
    $region414: #{embedder_encode.1} parent=1 // pred_region
      %s660 = sshllo.u32 0, 1
      loop: start=0, step=1, limit=1
      $region416: #{embedder_encode.1} parent=414 // loop_pre_header
        _
      $region417: #{embedder_encode.1} parent=414 // loop_header
        %s662 = sphi 0, %s666
        %p663 = scmp.ge.s32.totalorder %s662, 1
        %s667 = sphi %s649, %s649
        %s668 = sphi %s650, %s650
      $region418: #{embedder_encode.1} parent=414 // loop_header_branch
        %665 = sbr.rel (%p663) target = $region422
      $region419: #{embedder_encode.1} parent=414 // loop_body
        %v669 = vld [vmem:[%s667] sm:%s660]
        %670 = vst [vmem:[%s668] sm:%s660] %v669
      $region420: #{embedder_encode.1} parent=414 // loop_footer
        %s666 = sadd.s32 1, %s662
      $region421: #{embedder_encode.1} parent=414 // loop_footer_branch
        %661 = sbr.rel target = $region417
      $region422: #{embedder_encode.1} parent=414 // loop_exit
        _
    $region415: #{embedder_encode.1} parent=1 // pred_fallthru
      _
    // Predicated region
    $region434: #{embedder_encode.1} parent=1 // pred_check
      _
    $region435: #{embedder_encode.1} parent=1 // pred_check_branch
      %694 = sbr.rel (0) target = $region437
    $region436: #{embedder_encode.1} parent=1 // pred_region
      %695 = vsyncadd %s651, 16
    $region437: #{embedder_encode.1} parent=1 // pred_fallthru
      _
    %s696 = sld [smem:[#allocation5 + $0xe]]
    %s697 = scalar_lea.vmem %s1, %s696
    %s698 = scalar_lea.vmem [#allocation2], 14
    %s699 = scalar_lea.sflag [#allocation3], 14
    %p701 = scmp.lt.u32.totalorder 1, 8
    %p702 = pneg %p701
    // Predicated region
    $region438: #{embedder_encode.1} parent=1 // pred_check
      _
    $region439: #{embedder_encode.1} parent=1 // pred_check_branch
      %704 = sbr.rel (%p701) target = $region441
    $region440: #{embedder_encode.1} parent=1 // pred_region
      %s719 = sand.u32 1, 7
      %p720 = scmp.eq.s32.totalorder %s719, 0
      %p721 = pneg %p720
      // Predicated region
      $region453: #{embedder_encode.1} parent=440 // pred_check
        _
      $region454: #{embedder_encode.1} parent=440 // pred_check_branch
        %723 = sbr.rel (%p720) target = $region456
      $region455: #{embedder_encode.1} parent=440 // pred_region
        %s724 = sand.u32 1, 7
        %s725 = ssub.s32 1, %s724
        %s726 = scalar_lea.vmem %s697, %s725
        %s727 = ssub.s32 1, %s724
        %s728 = scalar_lea.vmem %s698, %s727 [#allocation2]
        %s729 = sshllo.u32 0, %s724
        loop: start=0, step=1, limit=1
        $region457: #{embedder_encode.1} parent=455 // loop_pre_header
          _
        $region458: #{embedder_encode.1} parent=455 // loop_header
          %s731 = sphi 0, %s735
          %p732 = scmp.ge.s32.totalorder %s731, 1
          %s736 = sphi %s726, %s726
          %s737 = sphi %s728, %s728
        $region459: #{embedder_encode.1} parent=455 // loop_header_branch
          %734 = sbr.rel (%p732) target = $region463
        $region460: #{embedder_encode.1} parent=455 // loop_body
          %v738 = vld [vmem:[%s736] sm:%s729]
          %739 = vst [vmem:[%s737] sm:%s729] %v738
        $region461: #{embedder_encode.1} parent=455 // loop_footer
          %s735 = sadd.s32 1, %s731
        $region462: #{embedder_encode.1} parent=455 // loop_footer_branch
          %730 = sbr.rel target = $region458
        $region463: #{embedder_encode.1} parent=455 // loop_exit
          _
      $region456: #{embedder_encode.1} parent=440 // pred_fallthru
        _
    $region441: #{embedder_encode.1} parent=1 // pred_fallthru
      _
    // Predicated region
    $region442: #{embedder_encode.1} parent=1 // pred_check
      %p705 = pneg %p701
    $region443: #{embedder_encode.1} parent=1 // pred_check_branch
      %707 = sbr.rel (%p705) target = $region445
    $region444: #{embedder_encode.1} parent=1 // pred_region
      %s708 = sshllo.u32 0, 1
      loop: start=0, step=1, limit=1
      $region446: #{embedder_encode.1} parent=444 // loop_pre_header
        _
      $region447: #{embedder_encode.1} parent=444 // loop_header
        %s710 = sphi 0, %s714
        %p711 = scmp.ge.s32.totalorder %s710, 1
        %s715 = sphi %s697, %s697
        %s716 = sphi %s698, %s698
      $region448: #{embedder_encode.1} parent=444 // loop_header_branch
        %713 = sbr.rel (%p711) target = $region452
      $region449: #{embedder_encode.1} parent=444 // loop_body
        %v717 = vld [vmem:[%s715] sm:%s708]
        %718 = vst [vmem:[%s716] sm:%s708] %v717
      $region450: #{embedder_encode.1} parent=444 // loop_footer
        %s714 = sadd.s32 1, %s710
      $region451: #{embedder_encode.1} parent=444 // loop_footer_branch
        %709 = sbr.rel target = $region447
      $region452: #{embedder_encode.1} parent=444 // loop_exit
        _
    $region445: #{embedder_encode.1} parent=1 // pred_fallthru
      _
    // Predicated region
    $region464: #{embedder_encode.1} parent=1 // pred_check
      _
    $region465: #{embedder_encode.1} parent=1 // pred_check_branch
      %742 = sbr.rel (0) target = $region467
    $region466: #{embedder_encode.1} parent=1 // pred_region
      %743 = vsyncadd %s699, 16
    $region467: #{embedder_encode.1} parent=1 // pred_fallthru
      _
    %s744 = sld [smem:[#allocation5 + $0xf]]
    %s745 = scalar_lea.vmem %s1, %s744
    %s746 = scalar_lea.vmem [#allocation2], 15
    %s747 = scalar_lea.sflag [#allocation3], 15
    %p749 = scmp.lt.u32.totalorder 1, 8
    %p750 = pneg %p749
    // Predicated region
    $region468: #{embedder_encode.1} parent=1 // pred_check
      _
    $region469: #{embedder_encode.1} parent=1 // pred_check_branch
      %752 = sbr.rel (%p749) target = $region471
    $region470: #{embedder_encode.1} parent=1 // pred_region
      %s767 = sand.u32 1, 7
      %p768 = scmp.eq.s32.totalorder %s767, 0
      %p769 = pneg %p768
      // Predicated region
      $region483: #{embedder_encode.1} parent=470 // pred_check
        _
      $region484: #{embedder_encode.1} parent=470 // pred_check_branch
        %771 = sbr.rel (%p768) target = $region486
      $region485: #{embedder_encode.1} parent=470 // pred_region
        %s772 = sand.u32 1, 7
        %s773 = ssub.s32 1, %s772
        %s774 = scalar_lea.vmem %s745, %s773
        %s775 = ssub.s32 1, %s772
        %s776 = scalar_lea.vmem %s746, %s775 [#allocation2]
        %s777 = sshllo.u32 0, %s772
        loop: start=0, step=1, limit=1
        $region487: #{embedder_encode.1} parent=485 // loop_pre_header
          _
        $region488: #{embedder_encode.1} parent=485 // loop_header
          %s779 = sphi 0, %s783
          %p780 = scmp.ge.s32.totalorder %s779, 1
          %s784 = sphi %s774, %s774
          %s785 = sphi %s776, %s776
        $region489: #{embedder_encode.1} parent=485 // loop_header_branch
          %782 = sbr.rel (%p780) target = $region493
        $region490: #{embedder_encode.1} parent=485 // loop_body
          %v786 = vld [vmem:[%s784] sm:%s777]
          %787 = vst [vmem:[%s785] sm:%s777] %v786
        $region491: #{embedder_encode.1} parent=485 // loop_footer
          %s783 = sadd.s32 1, %s779
        $region492: #{embedder_encode.1} parent=485 // loop_footer_branch
          %778 = sbr.rel target = $region488
        $region493: #{embedder_encode.1} parent=485 // loop_exit
          _
      $region486: #{embedder_encode.1} parent=470 // pred_fallthru
        _
    $region471: #{embedder_encode.1} parent=1 // pred_fallthru
      _
    // Predicated region
    $region472: #{embedder_encode.1} parent=1 // pred_check
      %p753 = pneg %p749
    $region473: #{embedder_encode.1} parent=1 // pred_check_branch
      %755 = sbr.rel (%p753) target = $region475
    $region474: #{embedder_encode.1} parent=1 // pred_region
      %s756 = sshllo.u32 0, 1
      loop: start=0, step=1, limit=1
      $region476: #{embedder_encode.1} parent=474 // loop_pre_header
        _
      $region477: #{embedder_encode.1} parent=474 // loop_header
        %s758 = sphi 0, %s762
        %p759 = scmp.ge.s32.totalorder %s758, 1
        %s763 = sphi %s745, %s745
        %s764 = sphi %s746, %s746
      $region478: #{embedder_encode.1} parent=474 // loop_header_branch
        %761 = sbr.rel (%p759) target = $region482
      $region479: #{embedder_encode.1} parent=474 // loop_body
        %v765 = vld [vmem:[%s763] sm:%s756]
        %766 = vst [vmem:[%s764] sm:%s756] %v765
      $region480: #{embedder_encode.1} parent=474 // loop_footer
        %s762 = sadd.s32 1, %s758
      $region481: #{embedder_encode.1} parent=474 // loop_footer_branch
        %757 = sbr.rel target = $region477
      $region482: #{embedder_encode.1} parent=474 // loop_exit
        _
    $region475: #{embedder_encode.1} parent=1 // pred_fallthru
      _
    // Predicated region
    $region494: #{embedder_encode.1} parent=1 // pred_check
      _
    $region495: #{embedder_encode.1} parent=1 // pred_check_branch
      %790 = sbr.rel (0) target = $region497
    $region496: #{embedder_encode.1} parent=1 // pred_region
      %791 = vsyncadd %s747, 16
    $region497: #{embedder_encode.1} parent=1 // pred_fallthru
      _
    %s792 = sld [smem:[#allocation5 + $0x10]]
    %s793 = scalar_lea.vmem %s1, %s792
    %s794 = scalar_lea.vmem [#allocation2], 16
    %s795 = scalar_lea.sflag [#allocation3], 16
    %p797 = scmp.lt.u32.totalorder 1, 8
    %p798 = pneg %p797
    // Predicated region
    $region498: #{embedder_encode.1} parent=1 // pred_check
      _
    $region499: #{embedder_encode.1} parent=1 // pred_check_branch
      %800 = sbr.rel (%p797) target = $region501
    $region500: #{embedder_encode.1} parent=1 // pred_region
      %s815 = sand.u32 1, 7
      %p816 = scmp.eq.s32.totalorder %s815, 0
      %p817 = pneg %p816
      // Predicated region
      $region513: #{embedder_encode.1} parent=500 // pred_check
        _
      $region514: #{embedder_encode.1} parent=500 // pred_check_branch
        %819 = sbr.rel (%p816) target = $region516
      $region515: #{embedder_encode.1} parent=500 // pred_region
        %s820 = sand.u32 1, 7
        %s821 = ssub.s32 1, %s820
        %s822 = scalar_lea.vmem %s793, %s821
        %s823 = ssub.s32 1, %s820
        %s824 = scalar_lea.vmem %s794, %s823 [#allocation2]
        %s825 = sshllo.u32 0, %s820
        loop: start=0, step=1, limit=1
        $region517: #{embedder_encode.1} parent=515 // loop_pre_header
          _
        $region518: #{embedder_encode.1} parent=515 // loop_header
          %s827 = sphi 0, %s831
          %p828 = scmp.ge.s32.totalorder %s827, 1
          %s832 = sphi %s822, %s822
          %s833 = sphi %s824, %s824
        $region519: #{embedder_encode.1} parent=515 // loop_header_branch
          %830 = sbr.rel (%p828) target = $region523
        $region520: #{embedder_encode.1} parent=515 // loop_body
          %v834 = vld [vmem:[%s832] sm:%s825]
          %835 = vst [vmem:[%s833] sm:%s825] %v834
        $region521: #{embedder_encode.1} parent=515 // loop_footer
          %s831 = sadd.s32 1, %s827
        $region522: #{embedder_encode.1} parent=515 // loop_footer_branch
          %826 = sbr.rel target = $region518
        $region523: #{embedder_encode.1} parent=515 // loop_exit
          _
      $region516: #{embedder_encode.1} parent=500 // pred_fallthru
        _
    $region501: #{embedder_encode.1} parent=1 // pred_fallthru
      _
    // Predicated region
    $region502: #{embedder_encode.1} parent=1 // pred_check
      %p801 = pneg %p797
    $region503: #{embedder_encode.1} parent=1 // pred_check_branch
      %803 = sbr.rel (%p801) target = $region505
    $region504: #{embedder_encode.1} parent=1 // pred_region
      %s804 = sshllo.u32 0, 1
      loop: start=0, step=1, limit=1
      $region506: #{embedder_encode.1} parent=504 // loop_pre_header
        _
      $region507: #{embedder_encode.1} parent=504 // loop_header
        %s806 = sphi 0, %s810
        %p807 = scmp.ge.s32.totalorder %s806, 1
        %s811 = sphi %s793, %s793
        %s812 = sphi %s794, %s794
      $region508: #{embedder_encode.1} parent=504 // loop_header_branch
        %809 = sbr.rel (%p807) target = $region512
      $region509: #{embedder_encode.1} parent=504 // loop_body
        %v813 = vld [vmem:[%s811] sm:%s804]
        %814 = vst [vmem:[%s812] sm:%s804] %v813
      $region510: #{embedder_encode.1} parent=504 // loop_footer
        %s810 = sadd.s32 1, %s806
      $region511: #{embedder_encode.1} parent=504 // loop_footer_branch
        %805 = sbr.rel target = $region507
      $region512: #{embedder_encode.1} parent=504 // loop_exit
        _
    $region505: #{embedder_encode.1} parent=1 // pred_fallthru
      _
    // Predicated region
    $region524: #{embedder_encode.1} parent=1 // pred_check
      _
    $region525: #{embedder_encode.1} parent=1 // pred_check_branch
      %838 = sbr.rel (0) target = $region527
    $region526: #{embedder_encode.1} parent=1 // pred_region
      %839 = vsyncadd %s795, 16
    $region527: #{embedder_encode.1} parent=1 // pred_fallthru
      _
    %s840 = sld [smem:[#allocation5 + $0x11]]
    %s841 = scalar_lea.vmem %s1, %s840
    %s842 = scalar_lea.vmem [#allocation2], 17
    %s843 = scalar_lea.sflag [#allocation3], 17
    %p845 = scmp.lt.u32.totalorder 1, 8
    %p846 = pneg %p845
    // Predicated region
    $region528: #{embedder_encode.1} parent=1 // pred_check
      _
    $region529: #{embedder_encode.1} parent=1 // pred_check_branch
      %848 = sbr.rel (%p845) target = $region531
    $region530: #{embedder_encode.1} parent=1 // pred_region
      %s863 = sand.u32 1, 7
      %p864 = scmp.eq.s32.totalorder %s863, 0
      %p865 = pneg %p864
      // Predicated region
      $region543: #{embedder_encode.1} parent=530 // pred_check
        _
      $region544: #{embedder_encode.1} parent=530 // pred_check_branch
        %867 = sbr.rel (%p864) target = $region546
      $region545: #{embedder_encode.1} parent=530 // pred_region
        %s868 = sand.u32 1, 7
        %s869 = ssub.s32 1, %s868
        %s870 = scalar_lea.vmem %s841, %s869
        %s871 = ssub.s32 1, %s868
        %s872 = scalar_lea.vmem %s842, %s871 [#allocation2]
        %s873 = sshllo.u32 0, %s868
        loop: start=0, step=1, limit=1
        $region547: #{embedder_encode.1} parent=545 // loop_pre_header
          _
        $region548: #{embedder_encode.1} parent=545 // loop_header
          %s875 = sphi 0, %s879
          %p876 = scmp.ge.s32.totalorder %s875, 1
          %s880 = sphi %s870, %s870
          %s881 = sphi %s872, %s872
        $region549: #{embedder_encode.1} parent=545 // loop_header_branch
          %878 = sbr.rel (%p876) target = $region553
        $region550: #{embedder_encode.1} parent=545 // loop_body
          %v882 = vld [vmem:[%s880] sm:%s873]
          %883 = vst [vmem:[%s881] sm:%s873] %v882
        $region551: #{embedder_encode.1} parent=545 // loop_footer
          %s879 = sadd.s32 1, %s875
        $region552: #{embedder_encode.1} parent=545 // loop_footer_branch
          %874 = sbr.rel target = $region548
        $region553: #{embedder_encode.1} parent=545 // loop_exit
          _
      $region546: #{embedder_encode.1} parent=530 // pred_fallthru
        _
    $region531: #{embedder_encode.1} parent=1 // pred_fallthru
      _
    // Predicated region
    $region532: #{embedder_encode.1} parent=1 // pred_check
      %p849 = pneg %p845
    $region533: #{embedder_encode.1} parent=1 // pred_check_branch
      %851 = sbr.rel (%p849) target = $region535
    $region534: #{embedder_encode.1} parent=1 // pred_region
      %s852 = sshllo.u32 0, 1
      loop: start=0, step=1, limit=1
      $region536: #{embedder_encode.1} parent=534 // loop_pre_header
        _
      $region537: #{embedder_encode.1} parent=534 // loop_header
        %s854 = sphi 0, %s858
        %p855 = scmp.ge.s32.totalorder %s854, 1
        %s859 = sphi %s841, %s841
        %s860 = sphi %s842, %s842
      $region538: #{embedder_encode.1} parent=534 // loop_header_branch
        %857 = sbr.rel (%p855) target = $region542
      $region539: #{embedder_encode.1} parent=534 // loop_body
        %v861 = vld [vmem:[%s859] sm:%s852]
        %862 = vst [vmem:[%s860] sm:%s852] %v861
      $region540: #{embedder_encode.1} parent=534 // loop_footer
        %s858 = sadd.s32 1, %s854
      $region541: #{embedder_encode.1} parent=534 // loop_footer_branch
        %853 = sbr.rel target = $region537
      $region542: #{embedder_encode.1} parent=534 // loop_exit
        _
    $region535: #{embedder_encode.1} parent=1 // pred_fallthru
      _
    // Predicated region
    $region554: #{embedder_encode.1} parent=1 // pred_check
      _
    $region555: #{embedder_encode.1} parent=1 // pred_check_branch
      %886 = sbr.rel (0) target = $region557
    $region556: #{embedder_encode.1} parent=1 // pred_region
      %887 = vsyncadd %s843, 16
    $region557: #{embedder_encode.1} parent=1 // pred_fallthru
      _
    %s888 = sld [smem:[#allocation5 + $0x12]]
    %s889 = scalar_lea.vmem %s1, %s888
    %s890 = scalar_lea.vmem [#allocation2], 18
    %s891 = scalar_lea.sflag [#allocation3], 18
    %p893 = scmp.lt.u32.totalorder 1, 8
    %p894 = pneg %p893
    // Predicated region
    $region558: #{embedder_encode.1} parent=1 // pred_check
      _
    $region559: #{embedder_encode.1} parent=1 // pred_check_branch
      %896 = sbr.rel (%p893) target = $region561
    $region560: #{embedder_encode.1} parent=1 // pred_region
      %s911 = sand.u32 1, 7
      %p912 = scmp.eq.s32.totalorder %s911, 0
      %p913 = pneg %p912
      // Predicated region
      $region573: #{embedder_encode.1} parent=560 // pred_check
        _
      $region574: #{embedder_encode.1} parent=560 // pred_check_branch
        %915 = sbr.rel (%p912) target = $region576
      $region575: #{embedder_encode.1} parent=560 // pred_region
        %s916 = sand.u32 1, 7
        %s917 = ssub.s32 1, %s916
        %s918 = scalar_lea.vmem %s889, %s917
        %s919 = ssub.s32 1, %s916
        %s920 = scalar_lea.vmem %s890, %s919 [#allocation2]
        %s921 = sshllo.u32 0, %s916
        loop: start=0, step=1, limit=1
        $region577: #{embedder_encode.1} parent=575 // loop_pre_header
          _
        $region578: #{embedder_encode.1} parent=575 // loop_header
          %s923 = sphi 0, %s927
          %p924 = scmp.ge.s32.totalorder %s923, 1
          %s928 = sphi %s918, %s918
          %s929 = sphi %s920, %s920
        $region579: #{embedder_encode.1} parent=575 // loop_header_branch
          %926 = sbr.rel (%p924) target = $region583
        $region580: #{embedder_encode.1} parent=575 // loop_body
          %v930 = vld [vmem:[%s928] sm:%s921]
          %931 = vst [vmem:[%s929] sm:%s921] %v930
        $region581: #{embedder_encode.1} parent=575 // loop_footer
          %s927 = sadd.s32 1, %s923
        $region582: #{embedder_encode.1} parent=575 // loop_footer_branch
          %922 = sbr.rel target = $region578
        $region583: #{embedder_encode.1} parent=575 // loop_exit
          _
      $region576: #{embedder_encode.1} parent=560 // pred_fallthru
        _
    $region561: #{embedder_encode.1} parent=1 // pred_fallthru
      _
    // Predicated region
    $region562: #{embedder_encode.1} parent=1 // pred_check
      %p897 = pneg %p893
    $region563: #{embedder_encode.1} parent=1 // pred_check_branch
      %899 = sbr.rel (%p897) target = $region565
    $region564: #{embedder_encode.1} parent=1 // pred_region
      %s900 = sshllo.u32 0, 1
      loop: start=0, step=1, limit=1
      $region566: #{embedder_encode.1} parent=564 // loop_pre_header
        _
      $region567: #{embedder_encode.1} parent=564 // loop_header
        %s902 = sphi 0, %s906
        %p903 = scmp.ge.s32.totalorder %s902, 1
        %s907 = sphi %s889, %s889
        %s908 = sphi %s890, %s890
      $region568: #{embedder_encode.1} parent=564 // loop_header_branch
        %905 = sbr.rel (%p903) target = $region572
      $region569: #{embedder_encode.1} parent=564 // loop_body
        %v909 = vld [vmem:[%s907] sm:%s900]
        %910 = vst [vmem:[%s908] sm:%s900] %v909
      $region570: #{embedder_encode.1} parent=564 // loop_footer
        %s906 = sadd.s32 1, %s902
      $region571: #{embedder_encode.1} parent=564 // loop_footer_branch
        %901 = sbr.rel target = $region567
      $region572: #{embedder_encode.1} parent=564 // loop_exit
        _
    $region565: #{embedder_encode.1} parent=1 // pred_fallthru
      _
    // Predicated region
    $region584: #{embedder_encode.1} parent=1 // pred_check
      _
    $region585: #{embedder_encode.1} parent=1 // pred_check_branch
      %934 = sbr.rel (0) target = $region587
    $region586: #{embedder_encode.1} parent=1 // pred_region
      %935 = vsyncadd %s891, 16
    $region587: #{embedder_encode.1} parent=1 // pred_fallthru
      _
    %s936 = sld [smem:[#allocation5 + $0x13]]
    %s937 = scalar_lea.vmem %s1, %s936
    %s938 = scalar_lea.vmem [#allocation2], 19
    %s939 = scalar_lea.sflag [#allocation3], 19
    %p941 = scmp.lt.u32.totalorder 1, 8
    %p942 = pneg %p941
    // Predicated region
    $region588: #{embedder_encode.1} parent=1 // pred_check
      _
    $region589: #{embedder_encode.1} parent=1 // pred_check_branch
      %944 = sbr.rel (%p941) target = $region591
    $region590: #{embedder_encode.1} parent=1 // pred_region
      %s959 = sand.u32 1, 7
      %p960 = scmp.eq.s32.totalorder %s959, 0
      %p961 = pneg %p960
      // Predicated region
      $region603: #{embedder_encode.1} parent=590 // pred_check
        _
      $region604: #{embedder_encode.1} parent=590 // pred_check_branch
        %963 = sbr.rel (%p960) target = $region606
      $region605: #{embedder_encode.1} parent=590 // pred_region
        %s964 = sand.u32 1, 7
        %s965 = ssub.s32 1, %s964
        %s966 = scalar_lea.vmem %s937, %s965
        %s967 = ssub.s32 1, %s964
        %s968 = scalar_lea.vmem %s938, %s967 [#allocation2]
        %s969 = sshllo.u32 0, %s964
        loop: start=0, step=1, limit=1
        $region607: #{embedder_encode.1} parent=605 // loop_pre_header
          _
        $region608: #{embedder_encode.1} parent=605 // loop_header
          %s971 = sphi 0, %s975
          %p972 = scmp.ge.s32.totalorder %s971, 1
          %s976 = sphi %s966, %s966
          %s977 = sphi %s968, %s968
        $region609: #{embedder_encode.1} parent=605 // loop_header_branch
          %974 = sbr.rel (%p972) target = $region613
        $region610: #{embedder_encode.1} parent=605 // loop_body
          %v978 = vld [vmem:[%s976] sm:%s969]
          %979 = vst [vmem:[%s977] sm:%s969] %v978
        $region611: #{embedder_encode.1} parent=605 // loop_footer
          %s975 = sadd.s32 1, %s971
        $region612: #{embedder_encode.1} parent=605 // loop_footer_branch
          %970 = sbr.rel target = $region608
        $region613: #{embedder_encode.1} parent=605 // loop_exit
          _
      $region606: #{embedder_encode.1} parent=590 // pred_fallthru
        _
    $region591: #{embedder_encode.1} parent=1 // pred_fallthru
      _
    // Predicated region
    $region592: #{embedder_encode.1} parent=1 // pred_check
      %p945 = pneg %p941
    $region593: #{embedder_encode.1} parent=1 // pred_check_branch
      %947 = sbr.rel (%p945) target = $region595
    $region594: #{embedder_encode.1} parent=1 // pred_region
      %s948 = sshllo.u32 0, 1
      loop: start=0, step=1, limit=1
      $region596: #{embedder_encode.1} parent=594 // loop_pre_header
        _
      $region597: #{embedder_encode.1} parent=594 // loop_header
        %s950 = sphi 0, %s954
        %p951 = scmp.ge.s32.totalorder %s950, 1
        %s955 = sphi %s937, %s937
        %s956 = sphi %s938, %s938
      $region598: #{embedder_encode.1} parent=594 // loop_header_branch
        %953 = sbr.rel (%p951) target = $region602
      $region599: #{embedder_encode.1} parent=594 // loop_body
        %v957 = vld [vmem:[%s955] sm:%s948]
        %958 = vst [vmem:[%s956] sm:%s948] %v957
      $region600: #{embedder_encode.1} parent=594 // loop_footer
        %s954 = sadd.s32 1, %s950
      $region601: #{embedder_encode.1} parent=594 // loop_footer_branch
        %949 = sbr.rel target = $region597
      $region602: #{embedder_encode.1} parent=594 // loop_exit
        _
    $region595: #{embedder_encode.1} parent=1 // pred_fallthru
      _
    // Predicated region
    $region614: #{embedder_encode.1} parent=1 // pred_check
      _
    $region615: #{embedder_encode.1} parent=1 // pred_check_branch
      %982 = sbr.rel (0) target = $region617
    $region616: #{embedder_encode.1} parent=1 // pred_region
      %983 = vsyncadd %s939, 16
    $region617: #{embedder_encode.1} parent=1 // pred_fallthru
      _
    %s984 = sld [smem:[#allocation5 + $0x14]]
    %s985 = scalar_lea.vmem %s1, %s984
    %s986 = scalar_lea.vmem [#allocation2], 20
    %s987 = scalar_lea.sflag [#allocation3], 20
    %p989 = scmp.lt.u32.totalorder 1, 8
    %p990 = pneg %p989
    // Predicated region
    $region618: #{embedder_encode.1} parent=1 // pred_check
      _
    $region619: #{embedder_encode.1} parent=1 // pred_check_branch
      %992 = sbr.rel (%p989) target = $region621
    $region620: #{embedder_encode.1} parent=1 // pred_region
      %s1007 = sand.u32 1, 7
      %p1008 = scmp.eq.s32.totalorder %s1007, 0
      %p1009 = pneg %p1008
      // Predicated region
      $region633: #{embedder_encode.1} parent=620 // pred_check
        _
      $region634: #{embedder_encode.1} parent=620 // pred_check_branch
        %1011 = sbr.rel (%p1008) target = $region636
      $region635: #{embedder_encode.1} parent=620 // pred_region
        %s1012 = sand.u32 1, 7
        %s1013 = ssub.s32 1, %s1012
        %s1014 = scalar_lea.vmem %s985, %s1013
        %s1015 = ssub.s32 1, %s1012
        %s1016 = scalar_lea.vmem %s986, %s1015 [#allocation2]
        %s1017 = sshllo.u32 0, %s1012
        loop: start=0, step=1, limit=1
        $region637: #{embedder_encode.1} parent=635 // loop_pre_header
          _
        $region638: #{embedder_encode.1} parent=635 // loop_header
          %s1019 = sphi 0, %s1023
          %p1020 = scmp.ge.s32.totalorder %s1019, 1
          %s1024 = sphi %s1014, %s1014
          %s1025 = sphi %s1016, %s1016
        $region639: #{embedder_encode.1} parent=635 // loop_header_branch
          %1022 = sbr.rel (%p1020) target = $region643
        $region640: #{embedder_encode.1} parent=635 // loop_body
          %v1026 = vld [vmem:[%s1024] sm:%s1017]
          %1027 = vst [vmem:[%s1025] sm:%s1017] %v1026
        $region641: #{embedder_encode.1} parent=635 // loop_footer
          %s1023 = sadd.s32 1, %s1019
        $region642: #{embedder_encode.1} parent=635 // loop_footer_branch
          %1018 = sbr.rel target = $region638
        $region643: #{embedder_encode.1} parent=635 // loop_exit
          _
      $region636: #{embedder_encode.1} parent=620 // pred_fallthru
        _
    $region621: #{embedder_encode.1} parent=1 // pred_fallthru
      _
    // Predicated region
    $region622: #{embedder_encode.1} parent=1 // pred_check
      %p993 = pneg %p989
    $region623: #{embedder_encode.1} parent=1 // pred_check_branch
      %995 = sbr.rel (%p993) target = $region625
    $region624: #{embedder_encode.1} parent=1 // pred_region
      %s996 = sshllo.u32 0, 1
      loop: start=0, step=1, limit=1
      $region626: #{embedder_encode.1} parent=624 // loop_pre_header
        _
      $region627: #{embedder_encode.1} parent=624 // loop_header
        %s998 = sphi 0, %s1002
        %p999 = scmp.ge.s32.totalorder %s998, 1
        %s1003 = sphi %s985, %s985
        %s1004 = sphi %s986, %s986
      $region628: #{embedder_encode.1} parent=624 // loop_header_branch
        %1001 = sbr.rel (%p999) target = $region632
      $region629: #{embedder_encode.1} parent=624 // loop_body
        %v1005 = vld [vmem:[%s1003] sm:%s996]
        %1006 = vst [vmem:[%s1004] sm:%s996] %v1005
      $region630: #{embedder_encode.1} parent=624 // loop_footer
        %s1002 = sadd.s32 1, %s998
      $region631: #{embedder_encode.1} parent=624 // loop_footer_branch
        %997 = sbr.rel target = $region627
      $region632: #{embedder_encode.1} parent=624 // loop_exit
        _
    $region625: #{embedder_encode.1} parent=1 // pred_fallthru
      _
    // Predicated region
    $region644: #{embedder_encode.1} parent=1 // pred_check
      _
    $region645: #{embedder_encode.1} parent=1 // pred_check_branch
      %1030 = sbr.rel (0) target = $region647
    $region646: #{embedder_encode.1} parent=1 // pred_region
      %1031 = vsyncadd %s987, 16
    $region647: #{embedder_encode.1} parent=1 // pred_fallthru
      _
    %s1032 = sld [smem:[#allocation5 + $0x15]]
    %s1033 = scalar_lea.vmem %s1, %s1032
    %s1034 = scalar_lea.vmem [#allocation2], 21
    %s1035 = scalar_lea.sflag [#allocation3], 21
    %p1037 = scmp.lt.u32.totalorder 1, 8
    %p1038 = pneg %p1037
    // Predicated region
    $region648: #{embedder_encode.1} parent=1 // pred_check
      _
    $region649: #{embedder_encode.1} parent=1 // pred_check_branch
      %1040 = sbr.rel (%p1037) target = $region651
    $region650: #{embedder_encode.1} parent=1 // pred_region
      %s1055 = sand.u32 1, 7
      %p1056 = scmp.eq.s32.totalorder %s1055, 0
      %p1057 = pneg %p1056
      // Predicated region
      $region663: #{embedder_encode.1} parent=650 // pred_check
        _
      $region664: #{embedder_encode.1} parent=650 // pred_check_branch
        %1059 = sbr.rel (%p1056) target = $region666
      $region665: #{embedder_encode.1} parent=650 // pred_region
        %s1060 = sand.u32 1, 7
        %s1061 = ssub.s32 1, %s1060
        %s1062 = scalar_lea.vmem %s1033, %s1061
        %s1063 = ssub.s32 1, %s1060
        %s1064 = scalar_lea.vmem %s1034, %s1063 [#allocation2]
        %s1065 = sshllo.u32 0, %s1060
        loop: start=0, step=1, limit=1
        $region667: #{embedder_encode.1} parent=665 // loop_pre_header
          _
        $region668: #{embedder_encode.1} parent=665 // loop_header
          %s1067 = sphi 0, %s1071
          %p1068 = scmp.ge.s32.totalorder %s1067, 1
          %s1072 = sphi %s1062, %s1062
          %s1073 = sphi %s1064, %s1064
        $region669: #{embedder_encode.1} parent=665 // loop_header_branch
          %1070 = sbr.rel (%p1068) target = $region673
        $region670: #{embedder_encode.1} parent=665 // loop_body
          %v1074 = vld [vmem:[%s1072] sm:%s1065]
          %1075 = vst [vmem:[%s1073] sm:%s1065] %v1074
        $region671: #{embedder_encode.1} parent=665 // loop_footer
          %s1071 = sadd.s32 1, %s1067
        $region672: #{embedder_encode.1} parent=665 // loop_footer_branch
          %1066 = sbr.rel target = $region668
        $region673: #{embedder_encode.1} parent=665 // loop_exit
          _
      $region666: #{embedder_encode.1} parent=650 // pred_fallthru
        _
    $region651: #{embedder_encode.1} parent=1 // pred_fallthru
      _
    // Predicated region
    $region652: #{embedder_encode.1} parent=1 // pred_check
      %p1041 = pneg %p1037
    $region653: #{embedder_encode.1} parent=1 // pred_check_branch
      %1043 = sbr.rel (%p1041) target = $region655
    $region654: #{embedder_encode.1} parent=1 // pred_region
      %s1044 = sshllo.u32 0, 1
      loop: start=0, step=1, limit=1
      $region656: #{embedder_encode.1} parent=654 // loop_pre_header
        _
      $region657: #{embedder_encode.1} parent=654 // loop_header
        %s1046 = sphi 0, %s1050
        %p1047 = scmp.ge.s32.totalorder %s1046, 1
        %s1051 = sphi %s1033, %s1033
        %s1052 = sphi %s1034, %s1034
      $region658: #{embedder_encode.1} parent=654 // loop_header_branch
        %1049 = sbr.rel (%p1047) target = $region662
      $region659: #{embedder_encode.1} parent=654 // loop_body
        %v1053 = vld [vmem:[%s1051] sm:%s1044]
        %1054 = vst [vmem:[%s1052] sm:%s1044] %v1053
      $region660: #{embedder_encode.1} parent=654 // loop_footer
        %s1050 = sadd.s32 1, %s1046
      $region661: #{embedder_encode.1} parent=654 // loop_footer_branch
        %1045 = sbr.rel target = $region657
      $region662: #{embedder_encode.1} parent=654 // loop_exit
        _
    $region655: #{embedder_encode.1} parent=1 // pred_fallthru
      _
    // Predicated region
    $region674: #{embedder_encode.1} parent=1 // pred_check
      _
    $region675: #{embedder_encode.1} parent=1 // pred_check_branch
      %1078 = sbr.rel (0) target = $region677
    $region676: #{embedder_encode.1} parent=1 // pred_region
      %1079 = vsyncadd %s1035, 16
    $region677: #{embedder_encode.1} parent=1 // pred_fallthru
      _
    %s1080 = sld [smem:[#allocation5 + $0x16]]
    %s1081 = scalar_lea.vmem %s1, %s1080
    %s1082 = scalar_lea.vmem [#allocation2], 22
    %s1083 = scalar_lea.sflag [#allocation3], 22
    %p1085 = scmp.lt.u32.totalorder 1, 8
    %p1086 = pneg %p1085
    // Predicated region
    $region678: #{embedder_encode.1} parent=1 // pred_check
      _
    $region679: #{embedder_encode.1} parent=1 // pred_check_branch
      %1088 = sbr.rel (%p1085) target = $region681
    $region680: #{embedder_encode.1} parent=1 // pred_region
      %s1103 = sand.u32 1, 7
      %p1104 = scmp.eq.s32.totalorder %s1103, 0
      %p1105 = pneg %p1104
      // Predicated region
      $region693: #{embedder_encode.1} parent=680 // pred_check
        _
      $region694: #{embedder_encode.1} parent=680 // pred_check_branch
        %1107 = sbr.rel (%p1104) target = $region696
      $region695: #{embedder_encode.1} parent=680 // pred_region
        %s1108 = sand.u32 1, 7
        %s1109 = ssub.s32 1, %s1108
        %s1110 = scalar_lea.vmem %s1081, %s1109
        %s1111 = ssub.s32 1, %s1108
        %s1112 = scalar_lea.vmem %s1082, %s1111 [#allocation2]
        %s1113 = sshllo.u32 0, %s1108
        loop: start=0, step=1, limit=1
        $region697: #{embedder_encode.1} parent=695 // loop_pre_header
          _
        $region698: #{embedder_encode.1} parent=695 // loop_header
          %s1115 = sphi 0, %s1119
          %p1116 = scmp.ge.s32.totalorder %s1115, 1
          %s1120 = sphi %s1110, %s1110
          %s1121 = sphi %s1112, %s1112
        $region699: #{embedder_encode.1} parent=695 // loop_header_branch
          %1118 = sbr.rel (%p1116) target = $region703
        $region700: #{embedder_encode.1} parent=695 // loop_body
          %v1122 = vld [vmem:[%s1120] sm:%s1113]
          %1123 = vst [vmem:[%s1121] sm:%s1113] %v1122
        $region701: #{embedder_encode.1} parent=695 // loop_footer
          %s1119 = sadd.s32 1, %s1115
        $region702: #{embedder_encode.1} parent=695 // loop_footer_branch
          %1114 = sbr.rel target = $region698
        $region703: #{embedder_encode.1} parent=695 // loop_exit
          _
      $region696: #{embedder_encode.1} parent=680 // pred_fallthru
        _
    $region681: #{embedder_encode.1} parent=1 // pred_fallthru
      _
    // Predicated region
    $region682: #{embedder_encode.1} parent=1 // pred_check
      %p1089 = pneg %p1085
    $region683: #{embedder_encode.1} parent=1 // pred_check_branch
      %1091 = sbr.rel (%p1089) target = $region685
    $region684: #{embedder_encode.1} parent=1 // pred_region
      %s1092 = sshllo.u32 0, 1
      loop: start=0, step=1, limit=1
      $region686: #{embedder_encode.1} parent=684 // loop_pre_header
        _
      $region687: #{embedder_encode.1} parent=684 // loop_header
        %s1094 = sphi 0, %s1098
        %p1095 = scmp.ge.s32.totalorder %s1094, 1
        %s1099 = sphi %s1081, %s1081
        %s1100 = sphi %s1082, %s1082
      $region688: #{embedder_encode.1} parent=684 // loop_header_branch
        %1097 = sbr.rel (%p1095) target = $region692
      $region689: #{embedder_encode.1} parent=684 // loop_body
        %v1101 = vld [vmem:[%s1099] sm:%s1092]
        %1102 = vst [vmem:[%s1100] sm:%s1092] %v1101
      $region690: #{embedder_encode.1} parent=684 // loop_footer
        %s1098 = sadd.s32 1, %s1094
      $region691: #{embedder_encode.1} parent=684 // loop_footer_branch
        %1093 = sbr.rel target = $region687
      $region692: #{embedder_encode.1} parent=684 // loop_exit
        _
    $region685: #{embedder_encode.1} parent=1 // pred_fallthru
      _
    // Predicated region
    $region704: #{embedder_encode.1} parent=1 // pred_check
      _
    $region705: #{embedder_encode.1} parent=1 // pred_check_branch
      %1126 = sbr.rel (0) target = $region707
    $region706: #{embedder_encode.1} parent=1 // pred_region
      %1127 = vsyncadd %s1083, 16
    $region707: #{embedder_encode.1} parent=1 // pred_fallthru
      _
    %s1128 = sld [smem:[#allocation5 + $0x17]]
    %s1129 = scalar_lea.vmem %s1, %s1128
    %s1130 = scalar_lea.vmem [#allocation2], 23
    %s1131 = scalar_lea.sflag [#allocation3], 23
    %p1133 = scmp.lt.u32.totalorder 1, 8
    %p1134 = pneg %p1133
    // Predicated region
    $region708: #{embedder_encode.1} parent=1 // pred_check
      _
    $region709: #{embedder_encode.1} parent=1 // pred_check_branch
      %1136 = sbr.rel (%p1133) target = $region711
    $region710: #{embedder_encode.1} parent=1 // pred_region
      %s1151 = sand.u32 1, 7
      %p1152 = scmp.eq.s32.totalorder %s1151, 0
      %p1153 = pneg %p1152
      // Predicated region
      $region723: #{embedder_encode.1} parent=710 // pred_check
        _
      $region724: #{embedder_encode.1} parent=710 // pred_check_branch
        %1155 = sbr.rel (%p1152) target = $region726
      $region725: #{embedder_encode.1} parent=710 // pred_region
        %s1156 = sand.u32 1, 7
        %s1157 = ssub.s32 1, %s1156
        %s1158 = scalar_lea.vmem %s1129, %s1157
        %s1159 = ssub.s32 1, %s1156
        %s1160 = scalar_lea.vmem %s1130, %s1159 [#allocation2]
        %s1161 = sshllo.u32 0, %s1156
        loop: start=0, step=1, limit=1
        $region727: #{embedder_encode.1} parent=725 // loop_pre_header
          _
        $region728: #{embedder_encode.1} parent=725 // loop_header
          %s1163 = sphi 0, %s1167
          %p1164 = scmp.ge.s32.totalorder %s1163, 1
          %s1168 = sphi %s1158, %s1158
          %s1169 = sphi %s1160, %s1160
        $region729: #{embedder_encode.1} parent=725 // loop_header_branch
          %1166 = sbr.rel (%p1164) target = $region733
        $region730: #{embedder_encode.1} parent=725 // loop_body
          %v1170 = vld [vmem:[%s1168] sm:%s1161]
          %1171 = vst [vmem:[%s1169] sm:%s1161] %v1170
        $region731: #{embedder_encode.1} parent=725 // loop_footer
          %s1167 = sadd.s32 1, %s1163
        $region732: #{embedder_encode.1} parent=725 // loop_footer_branch
          %1162 = sbr.rel target = $region728
        $region733: #{embedder_encode.1} parent=725 // loop_exit
          _
      $region726: #{embedder_encode.1} parent=710 // pred_fallthru
        _
    $region711: #{embedder_encode.1} parent=1 // pred_fallthru
      _
    // Predicated region
    $region712: #{embedder_encode.1} parent=1 // pred_check
      %p1137 = pneg %p1133
    $region713: #{embedder_encode.1} parent=1 // pred_check_branch
      %1139 = sbr.rel (%p1137) target = $region715
    $region714: #{embedder_encode.1} parent=1 // pred_region
      %s1140 = sshllo.u32 0, 1
      loop: start=0, step=1, limit=1
      $region716: #{embedder_encode.1} parent=714 // loop_pre_header
        _
      $region717: #{embedder_encode.1} parent=714 // loop_header
        %s1142 = sphi 0, %s1146
        %p1143 = scmp.ge.s32.totalorder %s1142, 1
        %s1147 = sphi %s1129, %s1129
        %s1148 = sphi %s1130, %s1130
      $region718: #{embedder_encode.1} parent=714 // loop_header_branch
        %1145 = sbr.rel (%p1143) target = $region722
      $region719: #{embedder_encode.1} parent=714 // loop_body
        %v1149 = vld [vmem:[%s1147] sm:%s1140]
        %1150 = vst [vmem:[%s1148] sm:%s1140] %v1149
      $region720: #{embedder_encode.1} parent=714 // loop_footer
        %s1146 = sadd.s32 1, %s1142
      $region721: #{embedder_encode.1} parent=714 // loop_footer_branch
        %1141 = sbr.rel target = $region717
      $region722: #{embedder_encode.1} parent=714 // loop_exit
        _
    $region715: #{embedder_encode.1} parent=1 // pred_fallthru
      _
    // Predicated region
    $region734: #{embedder_encode.1} parent=1 // pred_check
      _
    $region735: #{embedder_encode.1} parent=1 // pred_check_branch
      %1174 = sbr.rel (0) target = $region737
    $region736: #{embedder_encode.1} parent=1 // pred_region
      %1175 = vsyncadd %s1131, 16
    $region737: #{embedder_encode.1} parent=1 // pred_fallthru
      _
    %s1176 = sld [smem:[#allocation5 + $0x18]]
    %s1177 = scalar_lea.vmem %s1, %s1176
    %s1178 = scalar_lea.vmem [#allocation2], 24
    %s1179 = scalar_lea.sflag [#allocation3], 24
    %p1181 = scmp.lt.u32.totalorder 1, 8
    %p1182 = pneg %p1181
    // Predicated region
    $region738: #{embedder_encode.1} parent=1 // pred_check
      _
    $region739: #{embedder_encode.1} parent=1 // pred_check_branch
      %1184 = sbr.rel (%p1181) target = $region741
    $region740: #{embedder_encode.1} parent=1 // pred_region
      %s1199 = sand.u32 1, 7
      %p1200 = scmp.eq.s32.totalorder %s1199, 0
      %p1201 = pneg %p1200
      // Predicated region
      $region753: #{embedder_encode.1} parent=740 // pred_check
        _
      $region754: #{embedder_encode.1} parent=740 // pred_check_branch
        %1203 = sbr.rel (%p1200) target = $region756
      $region755: #{embedder_encode.1} parent=740 // pred_region
        %s1204 = sand.u32 1, 7
        %s1205 = ssub.s32 1, %s1204
        %s1206 = scalar_lea.vmem %s1177, %s1205
        %s1207 = ssub.s32 1, %s1204
        %s1208 = scalar_lea.vmem %s1178, %s1207 [#allocation2]
        %s1209 = sshllo.u32 0, %s1204
        loop: start=0, step=1, limit=1
        $region757: #{embedder_encode.1} parent=755 // loop_pre_header
          _
        $region758: #{embedder_encode.1} parent=755 // loop_header
          %s1211 = sphi 0, %s1215
          %p1212 = scmp.ge.s32.totalorder %s1211, 1
          %s1216 = sphi %s1206, %s1206
          %s1217 = sphi %s1208, %s1208
        $region759: #{embedder_encode.1} parent=755 // loop_header_branch
          %1214 = sbr.rel (%p1212) target = $region763
        $region760: #{embedder_encode.1} parent=755 // loop_body
          %v1218 = vld [vmem:[%s1216] sm:%s1209]
          %1219 = vst [vmem:[%s1217] sm:%s1209] %v1218
        $region761: #{embedder_encode.1} parent=755 // loop_footer
          %s1215 = sadd.s32 1, %s1211
        $region762: #{embedder_encode.1} parent=755 // loop_footer_branch
          %1210 = sbr.rel target = $region758
        $region763: #{embedder_encode.1} parent=755 // loop_exit
          _
      $region756: #{embedder_encode.1} parent=740 // pred_fallthru
        _
    $region741: #{embedder_encode.1} parent=1 // pred_fallthru
      _
    // Predicated region
    $region742: #{embedder_encode.1} parent=1 // pred_check
      %p1185 = pneg %p1181
    $region743: #{embedder_encode.1} parent=1 // pred_check_branch
      %1187 = sbr.rel (%p1185) target = $region745
    $region744: #{embedder_encode.1} parent=1 // pred_region
      %s1188 = sshllo.u32 0, 1
      loop: start=0, step=1, limit=1
      $region746: #{embedder_encode.1} parent=744 // loop_pre_header
        _
      $region747: #{embedder_encode.1} parent=744 // loop_header
        %s1190 = sphi 0, %s1194
        %p1191 = scmp.ge.s32.totalorder %s1190, 1
        %s1195 = sphi %s1177, %s1177
        %s1196 = sphi %s1178, %s1178
      $region748: #{embedder_encode.1} parent=744 // loop_header_branch
        %1193 = sbr.rel (%p1191) target = $region752
      $region749: #{embedder_encode.1} parent=744 // loop_body
        %v1197 = vld [vmem:[%s1195] sm:%s1188]
        %1198 = vst [vmem:[%s1196] sm:%s1188] %v1197
      $region750: #{embedder_encode.1} parent=744 // loop_footer
        %s1194 = sadd.s32 1, %s1190
      $region751: #{embedder_encode.1} parent=744 // loop_footer_branch
        %1189 = sbr.rel target = $region747
      $region752: #{embedder_encode.1} parent=744 // loop_exit
        _
    $region745: #{embedder_encode.1} parent=1 // pred_fallthru
      _
    // Predicated region
    $region764: #{embedder_encode.1} parent=1 // pred_check
      _
    $region765: #{embedder_encode.1} parent=1 // pred_check_branch
      %1222 = sbr.rel (0) target = $region767
    $region766: #{embedder_encode.1} parent=1 // pred_region
      %1223 = vsyncadd %s1179, 16
    $region767: #{embedder_encode.1} parent=1 // pred_fallthru
      _
    %s1224 = sld [smem:[#allocation5 + $0x19]]
    %s1225 = scalar_lea.vmem %s1, %s1224
    %s1226 = scalar_lea.vmem [#allocation2], 25
    %s1227 = scalar_lea.sflag [#allocation3], 25
    %p1229 = scmp.lt.u32.totalorder 1, 8
    %p1230 = pneg %p1229
    // Predicated region
    $region768: #{embedder_encode.1} parent=1 // pred_check
      _
    $region769: #{embedder_encode.1} parent=1 // pred_check_branch
      %1232 = sbr.rel (%p1229) target = $region771
    $region770: #{embedder_encode.1} parent=1 // pred_region
      %s1247 = sand.u32 1, 7
      %p1248 = scmp.eq.s32.totalorder %s1247, 0
      %p1249 = pneg %p1248
      // Predicated region
      $region783: #{embedder_encode.1} parent=770 // pred_check
        _
      $region784: #{embedder_encode.1} parent=770 // pred_check_branch
        %1251 = sbr.rel (%p1248) target = $region786
      $region785: #{embedder_encode.1} parent=770 // pred_region
        %s1252 = sand.u32 1, 7
        %s1253 = ssub.s32 1, %s1252
        %s1254 = scalar_lea.vmem %s1225, %s1253
        %s1255 = ssub.s32 1, %s1252
        %s1256 = scalar_lea.vmem %s1226, %s1255 [#allocation2]
        %s1257 = sshllo.u32 0, %s1252
        loop: start=0, step=1, limit=1
        $region787: #{embedder_encode.1} parent=785 // loop_pre_header
          _
        $region788: #{embedder_encode.1} parent=785 // loop_header
          %s1259 = sphi 0, %s1263
          %p1260 = scmp.ge.s32.totalorder %s1259, 1
          %s1264 = sphi %s1254, %s1254
          %s1265 = sphi %s1256, %s1256
        $region789: #{embedder_encode.1} parent=785 // loop_header_branch
          %1262 = sbr.rel (%p1260) target = $region793
        $region790: #{embedder_encode.1} parent=785 // loop_body
          %v1266 = vld [vmem:[%s1264] sm:%s1257]
          %1267 = vst [vmem:[%s1265] sm:%s1257] %v1266
        $region791: #{embedder_encode.1} parent=785 // loop_footer
          %s1263 = sadd.s32 1, %s1259
        $region792: #{embedder_encode.1} parent=785 // loop_footer_branch
          %1258 = sbr.rel target = $region788
        $region793: #{embedder_encode.1} parent=785 // loop_exit
          _
      $region786: #{embedder_encode.1} parent=770 // pred_fallthru
        _
    $region771: #{embedder_encode.1} parent=1 // pred_fallthru
      _
    // Predicated region
    $region772: #{embedder_encode.1} parent=1 // pred_check
      %p1233 = pneg %p1229
    $region773: #{embedder_encode.1} parent=1 // pred_check_branch
      %1235 = sbr.rel (%p1233) target = $region775
    $region774: #{embedder_encode.1} parent=1 // pred_region
      %s1236 = sshllo.u32 0, 1
      loop: start=0, step=1, limit=1
      $region776: #{embedder_encode.1} parent=774 // loop_pre_header
        _
      $region777: #{embedder_encode.1} parent=774 // loop_header
        %s1238 = sphi 0, %s1242
        %p1239 = scmp.ge.s32.totalorder %s1238, 1
        %s1243 = sphi %s1225, %s1225
        %s1244 = sphi %s1226, %s1226
      $region778: #{embedder_encode.1} parent=774 // loop_header_branch
        %1241 = sbr.rel (%p1239) target = $region782
      $region779: #{embedder_encode.1} parent=774 // loop_body
        %v1245 = vld [vmem:[%s1243] sm:%s1236]
        %1246 = vst [vmem:[%s1244] sm:%s1236] %v1245
      $region780: #{embedder_encode.1} parent=774 // loop_footer
        %s1242 = sadd.s32 1, %s1238
      $region781: #{embedder_encode.1} parent=774 // loop_footer_branch
        %1237 = sbr.rel target = $region777
      $region782: #{embedder_encode.1} parent=774 // loop_exit
        _
    $region775: #{embedder_encode.1} parent=1 // pred_fallthru
      _
    // Predicated region
    $region794: #{embedder_encode.1} parent=1 // pred_check
      _
    $region795: #{embedder_encode.1} parent=1 // pred_check_branch
      %1270 = sbr.rel (0) target = $region797
    $region796: #{embedder_encode.1} parent=1 // pred_region
      %1271 = vsyncadd %s1227, 16
    $region797: #{embedder_encode.1} parent=1 // pred_fallthru
      _
    %s1272 = sld [smem:[#allocation5 + $0x1a]]
    %s1273 = scalar_lea.vmem %s1, %s1272
    %s1274 = scalar_lea.vmem [#allocation2], 26
    %s1275 = scalar_lea.sflag [#allocation3], 26
    %p1277 = scmp.lt.u32.totalorder 1, 8
    %p1278 = pneg %p1277
    // Predicated region
    $region798: #{embedder_encode.1} parent=1 // pred_check
      _
    $region799: #{embedder_encode.1} parent=1 // pred_check_branch
      %1280 = sbr.rel (%p1277) target = $region801
    $region800: #{embedder_encode.1} parent=1 // pred_region
      %s1295 = sand.u32 1, 7
      %p1296 = scmp.eq.s32.totalorder %s1295, 0
      %p1297 = pneg %p1296
      // Predicated region
      $region813: #{embedder_encode.1} parent=800 // pred_check
        _
      $region814: #{embedder_encode.1} parent=800 // pred_check_branch
        %1299 = sbr.rel (%p1296) target = $region816
      $region815: #{embedder_encode.1} parent=800 // pred_region
        %s1300 = sand.u32 1, 7
        %s1301 = ssub.s32 1, %s1300
        %s1302 = scalar_lea.vmem %s1273, %s1301
        %s1303 = ssub.s32 1, %s1300
        %s1304 = scalar_lea.vmem %s1274, %s1303 [#allocation2]
        %s1305 = sshllo.u32 0, %s1300
        loop: start=0, step=1, limit=1
        $region817: #{embedder_encode.1} parent=815 // loop_pre_header
          _
        $region818: #{embedder_encode.1} parent=815 // loop_header
          %s1307 = sphi 0, %s1311
          %p1308 = scmp.ge.s32.totalorder %s1307, 1
          %s1312 = sphi %s1302, %s1302
          %s1313 = sphi %s1304, %s1304
        $region819: #{embedder_encode.1} parent=815 // loop_header_branch
          %1310 = sbr.rel (%p1308) target = $region823
        $region820: #{embedder_encode.1} parent=815 // loop_body
          %v1314 = vld [vmem:[%s1312] sm:%s1305]
          %1315 = vst [vmem:[%s1313] sm:%s1305] %v1314
        $region821: #{embedder_encode.1} parent=815 // loop_footer
          %s1311 = sadd.s32 1, %s1307
        $region822: #{embedder_encode.1} parent=815 // loop_footer_branch
          %1306 = sbr.rel target = $region818
        $region823: #{embedder_encode.1} parent=815 // loop_exit
          _
      $region816: #{embedder_encode.1} parent=800 // pred_fallthru
        _
    $region801: #{embedder_encode.1} parent=1 // pred_fallthru
      _
    // Predicated region
    $region802: #{embedder_encode.1} parent=1 // pred_check
      %p1281 = pneg %p1277
    $region803: #{embedder_encode.1} parent=1 // pred_check_branch
      %1283 = sbr.rel (%p1281) target = $region805
    $region804: #{embedder_encode.1} parent=1 // pred_region
      %s1284 = sshllo.u32 0, 1
      loop: start=0, step=1, limit=1
      $region806: #{embedder_encode.1} parent=804 // loop_pre_header
        _
      $region807: #{embedder_encode.1} parent=804 // loop_header
        %s1286 = sphi 0, %s1290
        %p1287 = scmp.ge.s32.totalorder %s1286, 1
        %s1291 = sphi %s1273, %s1273
        %s1292 = sphi %s1274, %s1274
      $region808: #{embedder_encode.1} parent=804 // loop_header_branch
        %1289 = sbr.rel (%p1287) target = $region812
      $region809: #{embedder_encode.1} parent=804 // loop_body
        %v1293 = vld [vmem:[%s1291] sm:%s1284]
        %1294 = vst [vmem:[%s1292] sm:%s1284] %v1293
      $region810: #{embedder_encode.1} parent=804 // loop_footer
        %s1290 = sadd.s32 1, %s1286
      $region811: #{embedder_encode.1} parent=804 // loop_footer_branch
        %1285 = sbr.rel target = $region807
      $region812: #{embedder_encode.1} parent=804 // loop_exit
        _
    $region805: #{embedder_encode.1} parent=1 // pred_fallthru
      _
    // Predicated region
    $region824: #{embedder_encode.1} parent=1 // pred_check
      _
    $region825: #{embedder_encode.1} parent=1 // pred_check_branch
      %1318 = sbr.rel (0) target = $region827
    $region826: #{embedder_encode.1} parent=1 // pred_region
      %1319 = vsyncadd %s1275, 16
    $region827: #{embedder_encode.1} parent=1 // pred_fallthru
      _
    %s1320 = sld [smem:[#allocation5 + $0x1b]]
    %s1321 = scalar_lea.vmem %s1, %s1320
    %s1322 = scalar_lea.vmem [#allocation2], 27
    %s1323 = scalar_lea.sflag [#allocation3], 27
    %p1325 = scmp.lt.u32.totalorder 1, 8
    %p1326 = pneg %p1325
    // Predicated region
    $region828: #{embedder_encode.1} parent=1 // pred_check
      _
    $region829: #{embedder_encode.1} parent=1 // pred_check_branch
      %1328 = sbr.rel (%p1325) target = $region831
    $region830: #{embedder_encode.1} parent=1 // pred_region
      %s1343 = sand.u32 1, 7
      %p1344 = scmp.eq.s32.totalorder %s1343, 0
      %p1345 = pneg %p1344
      // Predicated region
      $region843: #{embedder_encode.1} parent=830 // pred_check
        _
      $region844: #{embedder_encode.1} parent=830 // pred_check_branch
        %1347 = sbr.rel (%p1344) target = $region846
      $region845: #{embedder_encode.1} parent=830 // pred_region
        %s1348 = sand.u32 1, 7
        %s1349 = ssub.s32 1, %s1348
        %s1350 = scalar_lea.vmem %s1321, %s1349
        %s1351 = ssub.s32 1, %s1348
        %s1352 = scalar_lea.vmem %s1322, %s1351 [#allocation2]
        %s1353 = sshllo.u32 0, %s1348
        loop: start=0, step=1, limit=1
        $region847: #{embedder_encode.1} parent=845 // loop_pre_header
          _
        $region848: #{embedder_encode.1} parent=845 // loop_header
          %s1355 = sphi 0, %s1359
          %p1356 = scmp.ge.s32.totalorder %s1355, 1
          %s1360 = sphi %s1350, %s1350
          %s1361 = sphi %s1352, %s1352
        $region849: #{embedder_encode.1} parent=845 // loop_header_branch
          %1358 = sbr.rel (%p1356) target = $region853
        $region850: #{embedder_encode.1} parent=845 // loop_body
          %v1362 = vld [vmem:[%s1360] sm:%s1353]
          %1363 = vst [vmem:[%s1361] sm:%s1353] %v1362
        $region851: #{embedder_encode.1} parent=845 // loop_footer
          %s1359 = sadd.s32 1, %s1355
        $region852: #{embedder_encode.1} parent=845 // loop_footer_branch
          %1354 = sbr.rel target = $region848
        $region853: #{embedder_encode.1} parent=845 // loop_exit
          _
      $region846: #{embedder_encode.1} parent=830 // pred_fallthru
        _
    $region831: #{embedder_encode.1} parent=1 // pred_fallthru
      _
    // Predicated region
    $region832: #{embedder_encode.1} parent=1 // pred_check
      %p1329 = pneg %p1325
    $region833: #{embedder_encode.1} parent=1 // pred_check_branch
      %1331 = sbr.rel (%p1329) target = $region835
    $region834: #{embedder_encode.1} parent=1 // pred_region
      %s1332 = sshllo.u32 0, 1
      loop: start=0, step=1, limit=1
      $region836: #{embedder_encode.1} parent=834 // loop_pre_header
        _
      $region837: #{embedder_encode.1} parent=834 // loop_header
        %s1334 = sphi 0, %s1338
        %p1335 = scmp.ge.s32.totalorder %s1334, 1
        %s1339 = sphi %s1321, %s1321
        %s1340 = sphi %s1322, %s1322
      $region838: #{embedder_encode.1} parent=834 // loop_header_branch
        %1337 = sbr.rel (%p1335) target = $region842
      $region839: #{embedder_encode.1} parent=834 // loop_body
        %v1341 = vld [vmem:[%s1339] sm:%s1332]
        %1342 = vst [vmem:[%s1340] sm:%s1332] %v1341
      $region840: #{embedder_encode.1} parent=834 // loop_footer
        %s1338 = sadd.s32 1, %s1334
      $region841: #{embedder_encode.1} parent=834 // loop_footer_branch
        %1333 = sbr.rel target = $region837
      $region842: #{embedder_encode.1} parent=834 // loop_exit
        _
    $region835: #{embedder_encode.1} parent=1 // pred_fallthru
      _
    // Predicated region
    $region854: #{embedder_encode.1} parent=1 // pred_check
      _
    $region855: #{embedder_encode.1} parent=1 // pred_check_branch
      %1366 = sbr.rel (0) target = $region857
    $region856: #{embedder_encode.1} parent=1 // pred_region
      %1367 = vsyncadd %s1323, 16
    $region857: #{embedder_encode.1} parent=1 // pred_fallthru
      _
    %s1368 = sld [smem:[#allocation5 + $0x1c]]
    %s1369 = scalar_lea.vmem %s1, %s1368
    %s1370 = scalar_lea.vmem [#allocation2], 28
    %s1371 = scalar_lea.sflag [#allocation3], 28
    %p1373 = scmp.lt.u32.totalorder 1, 8
    %p1374 = pneg %p1373
    // Predicated region
    $region858: #{embedder_encode.1} parent=1 // pred_check
      _
    $region859: #{embedder_encode.1} parent=1 // pred_check_branch
      %1376 = sbr.rel (%p1373) target = $region861
    $region860: #{embedder_encode.1} parent=1 // pred_region
      %s1391 = sand.u32 1, 7
      %p1392 = scmp.eq.s32.totalorder %s1391, 0
      %p1393 = pneg %p1392
      // Predicated region
      $region873: #{embedder_encode.1} parent=860 // pred_check
        _
      $region874: #{embedder_encode.1} parent=860 // pred_check_branch
        %1395 = sbr.rel (%p1392) target = $region876
      $region875: #{embedder_encode.1} parent=860 // pred_region
        %s1396 = sand.u32 1, 7
        %s1397 = ssub.s32 1, %s1396
        %s1398 = scalar_lea.vmem %s1369, %s1397
        %s1399 = ssub.s32 1, %s1396
        %s1400 = scalar_lea.vmem %s1370, %s1399 [#allocation2]
        %s1401 = sshllo.u32 0, %s1396
        loop: start=0, step=1, limit=1
        $region877: #{embedder_encode.1} parent=875 // loop_pre_header
          _
        $region878: #{embedder_encode.1} parent=875 // loop_header
          %s1403 = sphi 0, %s1407
          %p1404 = scmp.ge.s32.totalorder %s1403, 1
          %s1408 = sphi %s1398, %s1398
          %s1409 = sphi %s1400, %s1400
        $region879: #{embedder_encode.1} parent=875 // loop_header_branch
          %1406 = sbr.rel (%p1404) target = $region883
        $region880: #{embedder_encode.1} parent=875 // loop_body
          %v1410 = vld [vmem:[%s1408] sm:%s1401]
          %1411 = vst [vmem:[%s1409] sm:%s1401] %v1410
        $region881: #{embedder_encode.1} parent=875 // loop_footer
          %s1407 = sadd.s32 1, %s1403
        $region882: #{embedder_encode.1} parent=875 // loop_footer_branch
          %1402 = sbr.rel target = $region878
        $region883: #{embedder_encode.1} parent=875 // loop_exit
          _
      $region876: #{embedder_encode.1} parent=860 // pred_fallthru
        _
    $region861: #{embedder_encode.1} parent=1 // pred_fallthru
      _
    // Predicated region
    $region862: #{embedder_encode.1} parent=1 // pred_check
      %p1377 = pneg %p1373
    $region863: #{embedder_encode.1} parent=1 // pred_check_branch
      %1379 = sbr.rel (%p1377) target = $region865
    $region864: #{embedder_encode.1} parent=1 // pred_region
      %s1380 = sshllo.u32 0, 1
      loop: start=0, step=1, limit=1
      $region866: #{embedder_encode.1} parent=864 // loop_pre_header
        _
      $region867: #{embedder_encode.1} parent=864 // loop_header
        %s1382 = sphi 0, %s1386
        %p1383 = scmp.ge.s32.totalorder %s1382, 1
        %s1387 = sphi %s1369, %s1369
        %s1388 = sphi %s1370, %s1370
      $region868: #{embedder_encode.1} parent=864 // loop_header_branch
        %1385 = sbr.rel (%p1383) target = $region872
      $region869: #{embedder_encode.1} parent=864 // loop_body
        %v1389 = vld [vmem:[%s1387] sm:%s1380]
        %1390 = vst [vmem:[%s1388] sm:%s1380] %v1389
      $region870: #{embedder_encode.1} parent=864 // loop_footer
        %s1386 = sadd.s32 1, %s1382
      $region871: #{embedder_encode.1} parent=864 // loop_footer_branch
        %1381 = sbr.rel target = $region867
      $region872: #{embedder_encode.1} parent=864 // loop_exit
        _
    $region865: #{embedder_encode.1} parent=1 // pred_fallthru
      _
    // Predicated region
    $region884: #{embedder_encode.1} parent=1 // pred_check
      _
    $region885: #{embedder_encode.1} parent=1 // pred_check_branch
      %1414 = sbr.rel (0) target = $region887
    $region886: #{embedder_encode.1} parent=1 // pred_region
      %1415 = vsyncadd %s1371, 16
    $region887: #{embedder_encode.1} parent=1 // pred_fallthru
      _
    %s1416 = sld [smem:[#allocation5 + $0x1d]]
    %s1417 = scalar_lea.vmem %s1, %s1416
    %s1418 = scalar_lea.vmem [#allocation2], 29
    %s1419 = scalar_lea.sflag [#allocation3], 29
    %p1421 = scmp.lt.u32.totalorder 1, 8
    %p1422 = pneg %p1421
    // Predicated region
    $region888: #{embedder_encode.1} parent=1 // pred_check
      _
    $region889: #{embedder_encode.1} parent=1 // pred_check_branch
      %1424 = sbr.rel (%p1421) target = $region891
    $region890: #{embedder_encode.1} parent=1 // pred_region
      %s1439 = sand.u32 1, 7
      %p1440 = scmp.eq.s32.totalorder %s1439, 0
      %p1441 = pneg %p1440
      // Predicated region
      $region903: #{embedder_encode.1} parent=890 // pred_check
        _
      $region904: #{embedder_encode.1} parent=890 // pred_check_branch
        %1443 = sbr.rel (%p1440) target = $region906
      $region905: #{embedder_encode.1} parent=890 // pred_region
        %s1444 = sand.u32 1, 7
        %s1445 = ssub.s32 1, %s1444
        %s1446 = scalar_lea.vmem %s1417, %s1445
        %s1447 = ssub.s32 1, %s1444
        %s1448 = scalar_lea.vmem %s1418, %s1447 [#allocation2]
        %s1449 = sshllo.u32 0, %s1444
        loop: start=0, step=1, limit=1
        $region907: #{embedder_encode.1} parent=905 // loop_pre_header
          _
        $region908: #{embedder_encode.1} parent=905 // loop_header
          %s1451 = sphi 0, %s1455
          %p1452 = scmp.ge.s32.totalorder %s1451, 1
          %s1456 = sphi %s1446, %s1446
          %s1457 = sphi %s1448, %s1448
        $region909: #{embedder_encode.1} parent=905 // loop_header_branch
          %1454 = sbr.rel (%p1452) target = $region913
        $region910: #{embedder_encode.1} parent=905 // loop_body
          %v1458 = vld [vmem:[%s1456] sm:%s1449]
          %1459 = vst [vmem:[%s1457] sm:%s1449] %v1458
        $region911: #{embedder_encode.1} parent=905 // loop_footer
          %s1455 = sadd.s32 1, %s1451
        $region912: #{embedder_encode.1} parent=905 // loop_footer_branch
          %1450 = sbr.rel target = $region908
        $region913: #{embedder_encode.1} parent=905 // loop_exit
          _
      $region906: #{embedder_encode.1} parent=890 // pred_fallthru
        _
    $region891: #{embedder_encode.1} parent=1 // pred_fallthru
      _
    // Predicated region
    $region892: #{embedder_encode.1} parent=1 // pred_check
      %p1425 = pneg %p1421
    $region893: #{embedder_encode.1} parent=1 // pred_check_branch
      %1427 = sbr.rel (%p1425) target = $region895
    $region894: #{embedder_encode.1} parent=1 // pred_region
      %s1428 = sshllo.u32 0, 1
      loop: start=0, step=1, limit=1
      $region896: #{embedder_encode.1} parent=894 // loop_pre_header
        _
      $region897: #{embedder_encode.1} parent=894 // loop_header
        %s1430 = sphi 0, %s1434
        %p1431 = scmp.ge.s32.totalorder %s1430, 1
        %s1435 = sphi %s1417, %s1417
        %s1436 = sphi %s1418, %s1418
      $region898: #{embedder_encode.1} parent=894 // loop_header_branch
        %1433 = sbr.rel (%p1431) target = $region902
      $region899: #{embedder_encode.1} parent=894 // loop_body
        %v1437 = vld [vmem:[%s1435] sm:%s1428]
        %1438 = vst [vmem:[%s1436] sm:%s1428] %v1437
      $region900: #{embedder_encode.1} parent=894 // loop_footer
        %s1434 = sadd.s32 1, %s1430
      $region901: #{embedder_encode.1} parent=894 // loop_footer_branch
        %1429 = sbr.rel target = $region897
      $region902: #{embedder_encode.1} parent=894 // loop_exit
        _
    $region895: #{embedder_encode.1} parent=1 // pred_fallthru
      _
    // Predicated region
    $region914: #{embedder_encode.1} parent=1 // pred_check
      _
    $region915: #{embedder_encode.1} parent=1 // pred_check_branch
      %1462 = sbr.rel (0) target = $region917
    $region916: #{embedder_encode.1} parent=1 // pred_region
      %1463 = vsyncadd %s1419, 16
    $region917: #{embedder_encode.1} parent=1 // pred_fallthru
      _
    %s1464 = sld [smem:[#allocation5 + $0x1e]]
    %s1465 = scalar_lea.vmem %s1, %s1464
    %s1466 = scalar_lea.vmem [#allocation2], 30
    %s1467 = scalar_lea.sflag [#allocation3], 30
    %p1469 = scmp.lt.u32.totalorder 1, 8
    %p1470 = pneg %p1469
    // Predicated region
    $region918: #{embedder_encode.1} parent=1 // pred_check
      _
    $region919: #{embedder_encode.1} parent=1 // pred_check_branch
      %1472 = sbr.rel (%p1469) target = $region921
    $region920: #{embedder_encode.1} parent=1 // pred_region
      %s1487 = sand.u32 1, 7
      %p1488 = scmp.eq.s32.totalorder %s1487, 0
      %p1489 = pneg %p1488
      // Predicated region
      $region933: #{embedder_encode.1} parent=920 // pred_check
        _
      $region934: #{embedder_encode.1} parent=920 // pred_check_branch
        %1491 = sbr.rel (%p1488) target = $region936
      $region935: #{embedder_encode.1} parent=920 // pred_region
        %s1492 = sand.u32 1, 7
        %s1493 = ssub.s32 1, %s1492
        %s1494 = scalar_lea.vmem %s1465, %s1493
        %s1495 = ssub.s32 1, %s1492
        %s1496 = scalar_lea.vmem %s1466, %s1495 [#allocation2]
        %s1497 = sshllo.u32 0, %s1492
        loop: start=0, step=1, limit=1
        $region937: #{embedder_encode.1} parent=935 // loop_pre_header
          _
        $region938: #{embedder_encode.1} parent=935 // loop_header
          %s1499 = sphi 0, %s1503
          %p1500 = scmp.ge.s32.totalorder %s1499, 1
          %s1504 = sphi %s1494, %s1494
          %s1505 = sphi %s1496, %s1496
        $region939: #{embedder_encode.1} parent=935 // loop_header_branch
          %1502 = sbr.rel (%p1500) target = $region943
        $region940: #{embedder_encode.1} parent=935 // loop_body
          %v1506 = vld [vmem:[%s1504] sm:%s1497]
          %1507 = vst [vmem:[%s1505] sm:%s1497] %v1506
        $region941: #{embedder_encode.1} parent=935 // loop_footer
          %s1503 = sadd.s32 1, %s1499
        $region942: #{embedder_encode.1} parent=935 // loop_footer_branch
          %1498 = sbr.rel target = $region938
        $region943: #{embedder_encode.1} parent=935 // loop_exit
          _
      $region936: #{embedder_encode.1} parent=920 // pred_fallthru
        _
    $region921: #{embedder_encode.1} parent=1 // pred_fallthru
      _
    // Predicated region
    $region922: #{embedder_encode.1} parent=1 // pred_check
      %p1473 = pneg %p1469
    $region923: #{embedder_encode.1} parent=1 // pred_check_branch
      %1475 = sbr.rel (%p1473) target = $region925
    $region924: #{embedder_encode.1} parent=1 // pred_region
      %s1476 = sshllo.u32 0, 1
      loop: start=0, step=1, limit=1
      $region926: #{embedder_encode.1} parent=924 // loop_pre_header
        _
      $region927: #{embedder_encode.1} parent=924 // loop_header
        %s1478 = sphi 0, %s1482
        %p1479 = scmp.ge.s32.totalorder %s1478, 1
        %s1483 = sphi %s1465, %s1465
        %s1484 = sphi %s1466, %s1466
      $region928: #{embedder_encode.1} parent=924 // loop_header_branch
        %1481 = sbr.rel (%p1479) target = $region932
      $region929: #{embedder_encode.1} parent=924 // loop_body
        %v1485 = vld [vmem:[%s1483] sm:%s1476]
        %1486 = vst [vmem:[%s1484] sm:%s1476] %v1485
      $region930: #{embedder_encode.1} parent=924 // loop_footer
        %s1482 = sadd.s32 1, %s1478
      $region931: #{embedder_encode.1} parent=924 // loop_footer_branch
        %1477 = sbr.rel target = $region927
      $region932: #{embedder_encode.1} parent=924 // loop_exit
        _
    $region925: #{embedder_encode.1} parent=1 // pred_fallthru
      _
    // Predicated region
    $region944: #{embedder_encode.1} parent=1 // pred_check
      _
    $region945: #{embedder_encode.1} parent=1 // pred_check_branch
      %1510 = sbr.rel (0) target = $region947
    $region946: #{embedder_encode.1} parent=1 // pred_region
      %1511 = vsyncadd %s1467, 16
    $region947: #{embedder_encode.1} parent=1 // pred_fallthru
      _
    %s1512 = sld [smem:[#allocation5 + $0x1f]]
    %s1513 = scalar_lea.vmem %s1, %s1512
    %s1514 = scalar_lea.vmem [#allocation2], 31
    %s1515 = scalar_lea.sflag [#allocation3], 31
    %p1517 = scmp.lt.u32.totalorder 1, 8
    %p1518 = pneg %p1517
    // Predicated region
    $region948: #{embedder_encode.1} parent=1 // pred_check
      _
    $region949: #{embedder_encode.1} parent=1 // pred_check_branch
      %1520 = sbr.rel (%p1517) target = $region951
    $region950: #{embedder_encode.1} parent=1 // pred_region
      %s1535 = sand.u32 1, 7
      %p1536 = scmp.eq.s32.totalorder %s1535, 0
      %p1537 = pneg %p1536
      // Predicated region
      $region963: #{embedder_encode.1} parent=950 // pred_check
        _
      $region964: #{embedder_encode.1} parent=950 // pred_check_branch
        %1539 = sbr.rel (%p1536) target = $region966
      $region965: #{embedder_encode.1} parent=950 // pred_region
        %s1540 = sand.u32 1, 7
        %s1541 = ssub.s32 1, %s1540
        %s1542 = scalar_lea.vmem %s1513, %s1541
        %s1543 = ssub.s32 1, %s1540
        %s1544 = scalar_lea.vmem %s1514, %s1543 [#allocation2]
        %s1545 = sshllo.u32 0, %s1540
        loop: start=0, step=1, limit=1
        $region967: #{embedder_encode.1} parent=965 // loop_pre_header
          _
        $region968: #{embedder_encode.1} parent=965 // loop_header
          %s1547 = sphi 0, %s1551
          %p1548 = scmp.ge.s32.totalorder %s1547, 1
          %s1552 = sphi %s1542, %s1542
          %s1553 = sphi %s1544, %s1544
        $region969: #{embedder_encode.1} parent=965 // loop_header_branch
          %1550 = sbr.rel (%p1548) target = $region973
        $region970: #{embedder_encode.1} parent=965 // loop_body
          %v1554 = vld [vmem:[%s1552] sm:%s1545]
          %1555 = vst [vmem:[%s1553] sm:%s1545] %v1554
        $region971: #{embedder_encode.1} parent=965 // loop_footer
          %s1551 = sadd.s32 1, %s1547
        $region972: #{embedder_encode.1} parent=965 // loop_footer_branch
          %1546 = sbr.rel target = $region968
        $region973: #{embedder_encode.1} parent=965 // loop_exit
          _
      $region966: #{embedder_encode.1} parent=950 // pred_fallthru
        _
    $region951: #{embedder_encode.1} parent=1 // pred_fallthru
      _
    // Predicated region
    $region952: #{embedder_encode.1} parent=1 // pred_check
      %p1521 = pneg %p1517
    $region953: #{embedder_encode.1} parent=1 // pred_check_branch
      %1523 = sbr.rel (%p1521) target = $region955
    $region954: #{embedder_encode.1} parent=1 // pred_region
      %s1524 = sshllo.u32 0, 1
      loop: start=0, step=1, limit=1
      $region956: #{embedder_encode.1} parent=954 // loop_pre_header
        _
      $region957: #{embedder_encode.1} parent=954 // loop_header
        %s1526 = sphi 0, %s1530
        %p1527 = scmp.ge.s32.totalorder %s1526, 1
        %s1531 = sphi %s1513, %s1513
        %s1532 = sphi %s1514, %s1514
      $region958: #{embedder_encode.1} parent=954 // loop_header_branch
        %1529 = sbr.rel (%p1527) target = $region962
      $region959: #{embedder_encode.1} parent=954 // loop_body
        %v1533 = vld [vmem:[%s1531] sm:%s1524]
        %1534 = vst [vmem:[%s1532] sm:%s1524] %v1533
      $region960: #{embedder_encode.1} parent=954 // loop_footer
        %s1530 = sadd.s32 1, %s1526
      $region961: #{embedder_encode.1} parent=954 // loop_footer_branch
        %1525 = sbr.rel target = $region957
      $region962: #{embedder_encode.1} parent=954 // loop_exit
        _
    $region955: #{embedder_encode.1} parent=1 // pred_fallthru
      _
    // Predicated region
    $region974: #{embedder_encode.1} parent=1 // pred_check
      _
    $region975: #{embedder_encode.1} parent=1 // pred_check_branch
      %1558 = sbr.rel (0) target = $region977
    $region976: #{embedder_encode.1} parent=1 // pred_region
      %1559 = vsyncadd %s1515, 16
    $region977: #{embedder_encode.1} parent=1 // pred_fallthru
      _
    %v1560 = vld [vmem:[%s2] sm:$0x1]
    %v1561 = vld [vmem:[%s4] sm:$0x3f]
    %v1562 = vlaneseq
    %v1563 = vshrl.u32 %v1562, 7
    %v1564 = vlaneseq
    %v1565 = vshrl.u32 %v1564, 7
    %v1566 = vsub.s32 0, %v1565
    %v1567 = vrot.slane %v1560, %v1566
    %vm1568 = vcmp.eq.s32.totalorder %v1563, %v1567
    %v1569 = vsel %vm1568, 1, 0
    %v1570 = vcvt.s32.f32 %v1569
    %v1571 = vld [vmem:[%s3] sm:$0x1]
    %v1572 = vld [vmem:[%s5] sm:$0xff]
    %v1573 = vld [vmem:[%s5 + $0x8] sm:$0xff]
    %v1574 = vld [vmem:[%s5 + $0x10] sm:$0xff]
    %v1575 = vld [vmem:[%s5 + $0x18] sm:$0xff]
    %v1576 = vld [vmem:[%s5 + $0x20] sm:$0x1]
    %v1577 = vadd.s32 %v1563, 8
    %v1578 = vadd.s32 %v1563, 16
    %v1579 = vadd.s32 %v1563, 24
    %v1580 = vadd.s32 %v1563, 32
    %v1581 = vlaneseq
    %v1582 = vshrl.u32 %v1581, 7
    %v1583 = vsub.s32 0, %v1582
    %v1584 = vrot.slane %v1571, %v1583
    %vm1585 = vcmp.eq.s32.totalorder %v1563, %v1584
    %vm1586 = vcmp.eq.s32.totalorder %v1577, %v1584
    %vm1587 = vcmp.eq.s32.totalorder %v1578, %v1584
    %vm1588 = vcmp.eq.s32.totalorder %v1579, %v1584
    %vm1589 = vcmp.eq.s32.totalorder %v1580, %v1584
    %v1590 = vsel %vm1585, 1, 0
    %v1591 = vsel %vm1586, 1, 0
    %v1592 = vsel %vm1587, 1, 0
    %v1593 = vsel %vm1588, 1, 0
    %v1594 = vsel %vm1589, 1, 0
    %v1595 = vcvt.s32.f32 %v1590
    %v1596 = vcvt.s32.f32 %v1591
    %v1597 = vcvt.s32.f32 %v1592
    %v1598 = vcvt.s32.f32 %v1593
    %v1599 = vcvt.s32.f32 %v1594
    %1600 = vxpose.xlu0.b32.start [1/16] %v1595, 128
    %1601 = vxpose.xlu0.b32.cont [2/16] %v1596, 128
    %1602 = vxpose.xlu0.b32.cont [3/16] %v1597, 128
    %1603 = vxpose.xlu0.b32.cont [4/16] %v1598, 128
    %1604 = vxpose.xlu0.b32.cont [5/16] %v1599, 128
    %1605 = vxpose.xlu0.b32.cont [6/16] 0.0, 128
    %1606 = vxpose.xlu0.b32.cont [7/16] 0.0, 128
    %1607 = vxpose.xlu0.b32.cont [8/16] 0.0, 128
    %1608 = vxpose.xlu0.b32.cont [9/16] 0.0, 128
    %1609 = vxpose.xlu0.b32.cont [10/16] 0.0, 128
    %1610 = vxpose.xlu0.b32.cont [11/16] 0.0, 128
    %1611 = vxpose.xlu0.b32.cont [12/16] 0.0, 128
    %1612 = vxpose.xlu0.b32.cont [13/16] 0.0, 128
    %1613 = vxpose.xlu0.b32.cont [14/16] 0.0, 128
    %1614 = vxpose.xlu0.b32.cont [15/16] 0.0, 128
    %1615 = vxpose.xlu0.b32.end [16/16] 0.0, 128
    %v1616 = vpop.trf.xlu0
    %v1617 = vpop.trf.xlu0
    %v1618 = vpop.trf.xlu0
    %v1619 = vpop.trf.xlu0
    %v1620 = vpop.trf.xlu0
    %v1621 = vpop.trf.xlu0
    %v1622 = vpop.trf.xlu0
    %v1623 = vpop.trf.xlu0
    %v1624 = vpop.trf.xlu0
    %v1625 = vpop.trf.xlu0
    %v1626 = vpop.trf.xlu0
    %v1627 = vpop.trf.xlu0
    %v1628 = vpop.trf.xlu0
    %v1629 = vpop.trf.xlu0
    %v1630 = vpop.trf.xlu0
    %v1631 = vpop.trf.xlu0
    %vm1632 = vcmask 269312
    %v1634 = vsel %vm1632, %v1616, 0
    %v1637 = vsel %vm1632, %v1617, 0
    %v1640 = vsel %vm1632, %v1618, 0
    %v1643 = vsel %vm1632, %v1619, 0
    %vm1645 = vcmask 1040384
    %v1647 = vsel %vm1645, %v1576, 0
    %1649 = vmatprep.subr.mxu0 0.0
    %1650 = vmatpush1.msra.mxu0 %v1572
    %1651 = vmatprep.subr.mxu0 0.0
    %1652 = vmatpush1.msra.mxu0 %v1573
    %1653 = vmatprep.subr.mxu0 0.0
    %1654 = vmatpush1.msra.mxu0 %v1574
    %1655 = vmatprep.subr.mxu0 0.0
    %1656 = vmatpush1.msra.mxu0 %v1575
    %1657 = vmatprep.subr.mxu0 0.0
    %1658 = vmatpush1.msra.mxu0 %v1647
    %1659 = vmatprep.subr.mxu0 0.0
    %1660 = vmatpush1.msra.mxu0 0.0
    %1661 = vmatprep.subr.mxu0 0.0
    %1662 = vmatpush1.msra.mxu0 0.0
    %1663 = vmatprep.subr.mxu0 0.0
    %1664 = vmatpush1.msra.mxu0 0.0
    %1665 = vmatprep.subr.mxu0 0.0
    %1666 = vmatpush1.msra.mxu0 0.0
    %1667 = vmatprep.subr.mxu0 0.0
    %1668 = vmatpush1.msra.mxu0 0.0
    %1669 = vmatprep.subr.mxu0 0.0
    %1670 = vmatpush1.msra.mxu0 0.0
    %1671 = vmatprep.subr.mxu0 0.0
    %1672 = vmatpush1.msra.mxu0 0.0
    %1673 = vmatprep.subr.mxu0 0.0
    %1674 = vmatpush1.msra.mxu0 0.0
    %1675 = vmatprep.subr.mxu0 0.0
    %1676 = vmatpush1.msra.mxu0 0.0
    %1677 = vmatprep.subr.mxu0 0.0
    %1678 = vmatpush1.msra.mxu0 0.0
    %1679 = vmatprep.subr.mxu0 0.0
    %1680 = vmatpush1.msra.mxu0 0.0
    %1681 = vmatprep.subr.mxu0 0.0
    %1682 = vmatpush1.msra.mxu0 0.0
    %1683 = vmatprep.subr.mxu0 0.0
    %1684 = vmatpush1.msra.mxu0 0.0
    %1685 = vmatprep.subr.mxu0 0.0
    %1686 = vmatpush1.msra.mxu0 0.0
    %1687 = vmatprep.subr.mxu0 0.0
    %1688 = vmatpush1.msra.mxu0 0.0
    %1689 = vmatprep.subr.mxu0 0.0
    %1690 = vmatpush1.msra.mxu0 0.0
    %1691 = vmatprep.subr.mxu0 0.0
    %1692 = vmatpush1.msra.mxu0 0.0
    %1693 = vmatprep.subr.mxu0 0.0
    %1694 = vmatpush1.msra.mxu0 0.0
    %1695 = vmatprep.subr.mxu0 0.0
    %1696 = vmatpush1.msra.mxu0 0.0
    %1697 = vmatprep.subr.mxu0 0.0
    %1698 = vmatpush1.msra.mxu0 0.0
    %1699 = vmatprep.subr.mxu0 0.0
    %1700 = vmatpush1.msra.mxu0 0.0
    %1701 = vmatprep.subr.mxu0 0.0
    %1702 = vmatpush1.msra.mxu0 0.0
    %1703 = vmatprep.subr.mxu0 0.0
    %1704 = vmatpush1.msra.mxu0 0.0
    %1705 = vmatprep.subr.mxu0 0.0
    %1706 = vmatpush1.msra.mxu0 0.0
    %1707 = vmatprep.subr.mxu0 0.0
    %1708 = vmatpush1.msra.mxu0 0.0
    %1709 = vmatprep.subr.mxu0 0.0
    %1710 = vmatpush1.msra.mxu0 0.0
    %1711 = vmatprep.subr.mxu0 0.0
    %1712 = vmatpush1.msra.mxu0 0.0
    %1713 = vmatprep.mubr.f32.mxu0 0.0
    %1714 = vmatmul.mubr.f32.gmra.mrb[0].mxu0 %v1634
    %v1715 = vpop.f32.mrb[0].mxu0
    %v1716 = vadd.f32 0.0, %v1715
    %v1717 = vpop.f32.mrb[0].mxu0
    %1718 = vmatprep.mubr.f32.mxu0 0.0
    %1719 = vmatmul.mubr.f32.gmra.mrb[0].mxu0 %v1637
    %v1720 = vpop.f32.mrb[0].mxu0
    %v1721 = vadd.f32 0.0, %v1720
    %v1722 = vpop.f32.mrb[0].mxu0
    %1723 = vmatprep.mubr.f32.mxu0 0.0
    %1724 = vmatmul.mubr.f32.gmra.mrb[0].mxu0 %v1640
    %v1725 = vpop.f32.mrb[0].mxu0
    %v1726 = vadd.f32 0.0, %v1725
    %v1727 = vpop.f32.mrb[0].mxu0
    %1728 = vmatprep.mubr.f32.mxu0 0.0
    %1729 = vmatmul.mubr.f32.gmra.mrb[0].mxu0 %v1643
    %v1730 = vpop.f32.mrb[0].mxu0
    %v1731 = vadd.f32 0.0, %v1730
    %v1732 = vpop.f32.mrb[0].mxu0
    %1733 = vdwg.mxu0
    %1734 = vxpose.xlu0.b32.start [1/16] %v1570, 128
    %1735 = vxpose.xlu0.b32.cont [2/16] 0.0, 128
    %1736 = vxpose.xlu0.b32.cont [3/16] 0.0, 128
    %1737 = vxpose.xlu0.b32.cont [4/16] 0.0, 128
    %1738 = vxpose.xlu0.b32.cont [5/16] 0.0, 128
    %1739 = vxpose.xlu0.b32.cont [6/16] 0.0, 128
    %1740 = vxpose.xlu0.b32.cont [7/16] 0.0, 128
    %1741 = vxpose.xlu0.b32.cont [8/16] 0.0, 128
    %1742 = vxpose.xlu0.b32.cont [9/16] 0.0, 128
    %1743 = vxpose.xlu0.b32.cont [10/16] 0.0, 128
    %1744 = vxpose.xlu0.b32.cont [11/16] 0.0, 128
    %1745 = vxpose.xlu0.b32.cont [12/16] 0.0, 128
    %1746 = vxpose.xlu0.b32.cont [13/16] 0.0, 128
    %1747 = vxpose.xlu0.b32.cont [14/16] 0.0, 128
    %1748 = vxpose.xlu0.b32.cont [15/16] 0.0, 128
    %1749 = vxpose.xlu0.b32.end [16/16] 0.0, 128
    %v1750 = vpop.trf.xlu0
    %v1751 = vpop.trf.xlu0
    %v1752 = vpop.trf.xlu0
    %v1753 = vpop.trf.xlu0
    %v1754 = vpop.trf.xlu0
    %v1755 = vpop.trf.xlu0
    %v1756 = vpop.trf.xlu0
    %v1757 = vpop.trf.xlu0
    %v1758 = vpop.trf.xlu0
    %v1759 = vpop.trf.xlu0
    %v1760 = vpop.trf.xlu0
    %v1761 = vpop.trf.xlu0
    %v1762 = vpop.trf.xlu0
    %v1763 = vpop.trf.xlu0
    %v1764 = vpop.trf.xlu0
    %v1765 = vpop.trf.xlu0
    %vm1766 = vcmask 48128
    %v1768 = vsel %vm1766, %v1750, 0
    %v1771 = vsel %vm1766, %v1751, 0
    %v1774 = vsel %vm1766, %v1752, 0
    %v1777 = vsel %vm1766, %v1753, 0
    %vm1779 = vcmask 1045504
    %v1781 = vsel %vm1779, %v1561, 0
    %1783 = vmatprep.subr.mxu0 0.0
    %1784 = vmatpush1.msra.mxu0 %v1781
    %1785 = vmatprep.subr.mxu0 0.0
    %1786 = vmatpush1.msra.mxu0 0.0
    %1787 = vmatprep.subr.mxu0 0.0
    %1788 = vmatpush1.msra.mxu0 0.0
    %1789 = vmatprep.subr.mxu0 0.0
    %1790 = vmatpush1.msra.mxu0 0.0
    %1791 = vmatprep.subr.mxu0 0.0
    %1792 = vmatpush1.msra.mxu0 0.0
    %1793 = vmatprep.subr.mxu0 0.0
    %1794 = vmatpush1.msra.mxu0 0.0
    %1795 = vmatprep.subr.mxu0 0.0
    %1796 = vmatpush1.msra.mxu0 0.0
    %1797 = vmatprep.subr.mxu0 0.0
    %1798 = vmatpush1.msra.mxu0 0.0
    %1799 = vmatprep.subr.mxu0 0.0
    %1800 = vmatpush1.msra.mxu0 0.0
    %1801 = vmatprep.subr.mxu0 0.0
    %1802 = vmatpush1.msra.mxu0 0.0
    %1803 = vmatprep.subr.mxu0 0.0
    %1804 = vmatpush1.msra.mxu0 0.0
    %1805 = vmatprep.subr.mxu0 0.0
    %1806 = vmatpush1.msra.mxu0 0.0
    %1807 = vmatprep.subr.mxu0 0.0
    %1808 = vmatpush1.msra.mxu0 0.0
    %1809 = vmatprep.subr.mxu0 0.0
    %1810 = vmatpush1.msra.mxu0 0.0
    %1811 = vmatprep.subr.mxu0 0.0
    %1812 = vmatpush1.msra.mxu0 0.0
    %1813 = vmatprep.subr.mxu0 0.0
    %1814 = vmatpush1.msra.mxu0 0.0
    %1815 = vmatprep.subr.mxu0 0.0
    %1816 = vmatpush1.msra.mxu0 0.0
    %1817 = vmatprep.subr.mxu0 0.0
    %1818 = vmatpush1.msra.mxu0 0.0
    %1819 = vmatprep.subr.mxu0 0.0
    %1820 = vmatpush1.msra.mxu0 0.0
    %1821 = vmatprep.subr.mxu0 0.0
    %1822 = vmatpush1.msra.mxu0 0.0
    %1823 = vmatprep.subr.mxu0 0.0
    %1824 = vmatpush1.msra.mxu0 0.0
    %1825 = vmatprep.subr.mxu0 0.0
    %1826 = vmatpush1.msra.mxu0 0.0
    %1827 = vmatprep.subr.mxu0 0.0
    %1828 = vmatpush1.msra.mxu0 0.0
    %1829 = vmatprep.subr.mxu0 0.0
    %1830 = vmatpush1.msra.mxu0 0.0
    %1831 = vmatprep.subr.mxu0 0.0
    %1832 = vmatpush1.msra.mxu0 0.0
    %1833 = vmatprep.subr.mxu0 0.0
    %1834 = vmatpush1.msra.mxu0 0.0
    %1835 = vmatprep.subr.mxu0 0.0
    %1836 = vmatpush1.msra.mxu0 0.0
    %1837 = vmatprep.subr.mxu0 0.0
    %1838 = vmatpush1.msra.mxu0 0.0
    %1839 = vmatprep.subr.mxu0 0.0
    %1840 = vmatpush1.msra.mxu0 0.0
    %1841 = vmatprep.subr.mxu0 0.0
    %1842 = vmatpush1.msra.mxu0 0.0
    %1843 = vmatprep.subr.mxu0 0.0
    %1844 = vmatpush1.msra.mxu0 0.0
    %1845 = vmatprep.subr.mxu0 0.0
    %1846 = vmatpush1.msra.mxu0 0.0
    %1847 = vmatprep.mubr.f32.mxu0 0.0
    %1848 = vmatmul.mubr.f32.gmra.mrb[0].mxu0 %v1768
    %v1849 = vpop.f32.mrb[0].mxu0
    %v1850 = vadd.f32 %v1716, %v1849
    %v1851 = vpop.f32.mrb[0].mxu0
    %1852 = vmatprep.mubr.f32.mxu0 0.0
    %1853 = vmatmul.mubr.f32.gmra.mrb[0].mxu0 %v1771
    %v1854 = vpop.f32.mrb[0].mxu0
    %v1855 = vadd.f32 %v1721, %v1854
    %v1856 = vpop.f32.mrb[0].mxu0
    %1857 = vmatprep.mubr.f32.mxu0 0.0
    %1858 = vmatmul.mubr.f32.gmra.mrb[0].mxu0 %v1774
    %v1859 = vpop.f32.mrb[0].mxu0
    %v1860 = vadd.f32 %v1726, %v1859
    %v1861 = vpop.f32.mrb[0].mxu0
    %1862 = vmatprep.mubr.f32.mxu0 0.0
    %1863 = vmatmul.mubr.f32.gmra.mrb[0].mxu0 %v1777
    %v1864 = vpop.f32.mrb[0].mxu0
    %v1865 = vadd.f32 %v1731, %v1864
    %v1866 = vpop.f32.mrb[0].mxu0
    %1867 = vdwg.mxu0
    %1869 = dma.done [#allocation3], 16
    %1871 = dma.done %s75, 16
    %1873 = dma.done %s123, 16
    %1875 = dma.done %s171, 16
    %1877 = dma.done %s219, 16
    %1879 = dma.done %s267, 16
    %1881 = dma.done %s315, 16
    %1883 = dma.done %s363, 16
    %1885 = dma.done %s411, 16
    %1887 = dma.done %s459, 16
    %1889 = dma.done %s507, 16
    %1891 = dma.done %s555, 16
    %1893 = dma.done %s603, 16
    %1895 = dma.done %s651, 16
    %1897 = dma.done %s699, 16
    %1899 = dma.done %s747, 16
    %1901 = dma.done %s795, 16
    %1903 = dma.done %s843, 16
    %1905 = dma.done %s891, 16
    %1907 = dma.done %s939, 16
    %1909 = dma.done %s987, 16
    %1911 = dma.done %s1035, 16
    %1913 = dma.done %s1083, 16
    %1915 = dma.done %s1131, 16
    %1917 = dma.done %s1179, 16
    %1919 = dma.done %s1227, 16
    %1921 = dma.done %s1275, 16
    %1923 = dma.done %s1323, 16
    %1925 = dma.done %s1371, 16
    %1927 = dma.done %s1419, 16
    %1929 = dma.done %s1467, 16
    %1931 = dma.done %s1515, 16
    %v1932 = vld [vmem:[#allocation2] sm:$0xff]
    %v1933 = vld [vmem:[#allocation2 + $0x8] sm:$0xff]
    %v1934 = vld [vmem:[#allocation2 + $0x10] sm:$0xff]
    %v1935 = vld [vmem:[#allocation2 + $0x18] sm:$0xff]
    %v1936 = vadd.f32 %v1932, %v1850
    %v1937 = vadd.f32 %v1933, %v1855
    %v1938 = vadd.f32 %v1934, %v1860
    %v1939 = vadd.f32 %v1935, %v1865
    %vm1940 = vcmask 261120
    %1941 = vst.msk [vmem:[#allocation6] sm:$0xff] %vm1940, %v1936
    %1942 = vst.msk [vmem:[#allocation6 + $0x8] sm:$0xff] %vm1940, %v1937
    %1943 = vst.msk [vmem:[#allocation6 + $0x10] sm:$0xff] %vm1940, %v1938
    %1944 = vst.msk [vmem:[#allocation6 + $0x18] sm:$0xff] %vm1940, %v1939
    // Predicated region
    $region978: #{embedder_encode.1} parent=1 // pred_check
      _
    $region979: #{embedder_encode.1} parent=1 // pred_check_branch
      %1946 = sbr.rel (0) target = $region981
    $region980: #{embedder_encode.1} parent=1 // pred_region
      %s1948 = ssub.s32 512, 512
      %1949 = vsyncadd [#allocation7], %s1948
      %s1950 = sshll.u32 [#allocation6], 4
      %s1951 = int_to_ptr.vmem [resolvable:$true] %s1950
      %1956 = dma.vmem_to_hbm [thread:$0]  %s1951, 512, %s6, [#allocation7], 128, 128, 8
    $region981: #{embedder_encode.1} parent=1 // pred_fallthru
      _
    // Predicated region
    $region982: #{embedder_encode.1} parent=1 // pred_check
      _
    $region983: #{embedder_encode.1} parent=1 // pred_check_branch
      %1958 = sbr.rel (0) target = $region985
    $region984: #{embedder_encode.1} parent=1 // pred_region
      %1959 = dma.done [#allocation7], 512
    $region985: #{embedder_encode.1} parent=1 // pred_fallthru
      _
    %1960 = vsyncpa [#allocation7], 1
  %1961 = vsyncmov [#allocation3]
  %s1962 = vpop.sfrf %1961
  %p1963 = scmp.eq.s32.totalorder %s1962, 0
  %p1964 = pneg %p1963
  %1966 = shalt.err (%p1964)
  %s1967 = scalar_lea.sflag [#allocation3], 1
  %1968 = vsyncmov %s1967
  %s1969 = vpop.sfrf %1968
  %p1970 = scmp.eq.s32.totalorder %s1969, 0
  %p1971 = pneg %p1970
  %1973 = shalt.err (%p1971)
  %s1974 = scalar_lea.sflag [#allocation3], 2
  %1975 = vsyncmov %s1974
  %s1976 = vpop.sfrf %1975
  %p1977 = scmp.eq.s32.totalorder %s1976, 0
  %p1978 = pneg %p1977
  %1980 = shalt.err (%p1978)
  %s1981 = scalar_lea.sflag [#allocation3], 3
  %1982 = vsyncmov %s1981
  %s1983 = vpop.sfrf %1982
  %p1984 = scmp.eq.s32.totalorder %s1983, 0
  %p1985 = pneg %p1984
  %1987 = shalt.err (%p1985)
  %s1988 = scalar_lea.sflag [#allocation3], 4
  %1989 = vsyncmov %s1988
  %s1990 = vpop.sfrf %1989
  %p1991 = scmp.eq.s32.totalorder %s1990, 0
  %p1992 = pneg %p1991
  %1994 = shalt.err (%p1992)
  %s1995 = scalar_lea.sflag [#allocation3], 5
  %1996 = vsyncmov %s1995
  %s1997 = vpop.sfrf %1996
  %p1998 = scmp.eq.s32.totalorder %s1997, 0
  %p1999 = pneg %p1998
  %2001 = shalt.err (%p1999)
  %s2002 = scalar_lea.sflag [#allocation3], 6
  %2003 = vsyncmov %s2002
  %s2004 = vpop.sfrf %2003
  %p2005 = scmp.eq.s32.totalorder %s2004, 0
  %p2006 = pneg %p2005
  %2008 = shalt.err (%p2006)
  %s2009 = scalar_lea.sflag [#allocation3], 7
  %2010 = vsyncmov %s2009
  %s2011 = vpop.sfrf %2010
  %p2012 = scmp.eq.s32.totalorder %s2011, 0
  %p2013 = pneg %p2012
  %2015 = shalt.err (%p2013)
  %s2016 = scalar_lea.sflag [#allocation3], 8
  %2017 = vsyncmov %s2016
  %s2018 = vpop.sfrf %2017
  %p2019 = scmp.eq.s32.totalorder %s2018, 0
  %p2020 = pneg %p2019
  %2022 = shalt.err (%p2020)
  %s2023 = scalar_lea.sflag [#allocation3], 9
  %2024 = vsyncmov %s2023
  %s2025 = vpop.sfrf %2024
  %p2026 = scmp.eq.s32.totalorder %s2025, 0
  %p2027 = pneg %p2026
  %2029 = shalt.err (%p2027)
  %s2030 = scalar_lea.sflag [#allocation3], 10
  %2031 = vsyncmov %s2030
  %s2032 = vpop.sfrf %2031
  %p2033 = scmp.eq.s32.totalorder %s2032, 0
  %p2034 = pneg %p2033
  %2036 = shalt.err (%p2034)
  %s2037 = scalar_lea.sflag [#allocation3], 11
  %2038 = vsyncmov %s2037
  %s2039 = vpop.sfrf %2038
  %p2040 = scmp.eq.s32.totalorder %s2039, 0
  %p2041 = pneg %p2040
  %2043 = shalt.err (%p2041)
  %s2044 = scalar_lea.sflag [#allocation3], 12
  %2045 = vsyncmov %s2044
  %s2046 = vpop.sfrf %2045
  %p2047 = scmp.eq.s32.totalorder %s2046, 0
  %p2048 = pneg %p2047
  %2050 = shalt.err (%p2048)
  %s2051 = scalar_lea.sflag [#allocation3], 13
  %2052 = vsyncmov %s2051
  %s2053 = vpop.sfrf %2052
  %p2054 = scmp.eq.s32.totalorder %s2053, 0
  %p2055 = pneg %p2054
  %2057 = shalt.err (%p2055)
  %s2058 = scalar_lea.sflag [#allocation3], 14
  %2059 = vsyncmov %s2058
  %s2060 = vpop.sfrf %2059
  %p2061 = scmp.eq.s32.totalorder %s2060, 0
  %p2062 = pneg %p2061
  %2064 = shalt.err (%p2062)
  %s2065 = scalar_lea.sflag [#allocation3], 15
  %2066 = vsyncmov %s2065
  %s2067 = vpop.sfrf %2066
  %p2068 = scmp.eq.s32.totalorder %s2067, 0
  %p2069 = pneg %p2068
  %2071 = shalt.err (%p2069)
  %s2072 = scalar_lea.sflag [#allocation3], 16
  %2073 = vsyncmov %s2072
  %s2074 = vpop.sfrf %2073
  %p2075 = scmp.eq.s32.totalorder %s2074, 0
  %p2076 = pneg %p2075
  %2078 = shalt.err (%p2076)
  %s2079 = scalar_lea.sflag [#allocation3], 17
  %2080 = vsyncmov %s2079
  %s2081 = vpop.sfrf %2080
  %p2082 = scmp.eq.s32.totalorder %s2081, 0
  %p2083 = pneg %p2082
  %2085 = shalt.err (%p2083)
  %s2086 = scalar_lea.sflag [#allocation3], 18
  %2087 = vsyncmov %s2086
  %s2088 = vpop.sfrf %2087
  %p2089 = scmp.eq.s32.totalorder %s2088, 0
  %p2090 = pneg %p2089
  %2092 = shalt.err (%p2090)
  %s2093 = scalar_lea.sflag [#allocation3], 19
  %2094 = vsyncmov %s2093
  %s2095 = vpop.sfrf %2094
  %p2096 = scmp.eq.s32.totalorder %s2095, 0
  %p2097 = pneg %p2096
  %2099 = shalt.err (%p2097)
  %s2100 = scalar_lea.sflag [#allocation3], 20
  %2101 = vsyncmov %s2100
  %s2102 = vpop.sfrf %2101
  %p2103 = scmp.eq.s32.totalorder %s2102, 0
  %p2104 = pneg %p2103
  %2106 = shalt.err (%p2104)
  %s2107 = scalar_lea.sflag [#allocation3], 21
  %2108 = vsyncmov %s2107
  %s2109 = vpop.sfrf %2108
  %p2110 = scmp.eq.s32.totalorder %s2109, 0
  %p2111 = pneg %p2110
  %2113 = shalt.err (%p2111)
  %s2114 = scalar_lea.sflag [#allocation3], 22
  %2115 = vsyncmov %s2114
  %s2116 = vpop.sfrf %2115
  %p2117 = scmp.eq.s32.totalorder %s2116, 0
  %p2118 = pneg %p2117
  %2120 = shalt.err (%p2118)
  %s2121 = scalar_lea.sflag [#allocation3], 23
  %2122 = vsyncmov %s2121
  %s2123 = vpop.sfrf %2122
  %p2124 = scmp.eq.s32.totalorder %s2123, 0
  %p2125 = pneg %p2124
  %2127 = shalt.err (%p2125)
  %s2128 = scalar_lea.sflag [#allocation3], 24
  %2129 = vsyncmov %s2128
  %s2130 = vpop.sfrf %2129
  %p2131 = scmp.eq.s32.totalorder %s2130, 0
  %p2132 = pneg %p2131
  %2134 = shalt.err (%p2132)
  %s2135 = scalar_lea.sflag [#allocation3], 25
  %2136 = vsyncmov %s2135
  %s2137 = vpop.sfrf %2136
  %p2138 = scmp.eq.s32.totalorder %s2137, 0
  %p2139 = pneg %p2138
  %2141 = shalt.err (%p2139)
  %s2142 = scalar_lea.sflag [#allocation3], 26
  %2143 = vsyncmov %s2142
  %s2144 = vpop.sfrf %2143
  %p2145 = scmp.eq.s32.totalorder %s2144, 0
  %p2146 = pneg %p2145
  %2148 = shalt.err (%p2146)
  %s2149 = scalar_lea.sflag [#allocation3], 27
  %2150 = vsyncmov %s2149
  %s2151 = vpop.sfrf %2150
  %p2152 = scmp.eq.s32.totalorder %s2151, 0
  %p2153 = pneg %p2152
  %2155 = shalt.err (%p2153)
  %s2156 = scalar_lea.sflag [#allocation3], 28
  %2157 = vsyncmov %s2156
  %s2158 = vpop.sfrf %2157
  %p2159 = scmp.eq.s32.totalorder %s2158, 0
  %p2160 = pneg %p2159
  %2162 = shalt.err (%p2160)
  %s2163 = scalar_lea.sflag [#allocation3], 29
  %2164 = vsyncmov %s2163
  %s2165 = vpop.sfrf %2164
  %p2166 = scmp.eq.s32.totalorder %s2165, 0
  %p2167 = pneg %p2166
  %2169 = shalt.err (%p2167)
  %s2170 = scalar_lea.sflag [#allocation3], 30
  %2171 = vsyncmov %s2170
  %s2172 = vpop.sfrf %2171
  %p2173 = scmp.eq.s32.totalorder %s2172, 0
  %p2174 = pneg %p2173
  %2176 = shalt.err (%p2174)
  %s2177 = scalar_lea.sflag [#allocation3], 31
  %2178 = vsyncmov %s2177
  %s2179 = vpop.sfrf %2178
  %p2180 = scmp.eq.s32.totalorder %s2179, 0
  %p2181 = pneg %p2180
  %2183 = shalt.err (%p2181)

</llo_original>
